<compile_context>
chip_gen: v6e
topology: v6e:2x2x1
jax: 0.10.0
libtpu: 0.0.40
codegen_flags: <defaults>
</compile_context>

<pallas_src>
import functools

import jax
import jax.numpy as jnp
from jax.experimental import pallas as pl
from jax.experimental.pallas import tpu as pltpu


def _round_up(x, m):
    return ((x + m - 1) // m) * m


def lstm_fused_kernel(x_ref, wih_ref, whh_ref, bl_ref,
                      w3_ref, b3_ref, w4_ref, b4_ref, y_ref,
                      *, seq_len, batch_blk, hidden_dim):
    """Fused LSTM (1 layer) + fc3 -> ReLU -> fc4 for one batch tile.

    x_ref   : (batch_blk*seq_len, Fp) bf16, batch-major rows (row = b*S + t)
    wih_ref : (Fp, 4H) bf16 (gate cols permuted i,f,o,g; K zero-padded)
    whh_ref : (H, 4H)  bf16 (gate cols permuted i,f,o,g)
    bl_ref  : (1, 4H)  f32  (b_ih + b_hh, gate-permuted)
    w3_ref  : (H, 512) bf16            b3_ref : (1, 512) f32
    w4_ref  : (512, NCp) bf16 (zero-padded cols)   b4_ref : (1, NCp) f32
    y_ref   : (batch_blk, NCp) f32 lane-dense output (sliced in the wrapper)
    """
    H = hidden_dim
    Bb = batch_blk

    # ---- Phase 1: input projection for ALL timesteps, one MXU matmul -------
    # (Bb*S, Fp) @ (Fp, 4H) -> (Bb*S, 4H), f32 accumulation.
    gx = jnp.dot(x_ref[...], wih_ref[...],
                 preferred_element_type=jnp.float32) + bl_ref[...]
    # Rows are batch-major (row = b*S + t); view as (Bb, S, 4H) so each step's
    # (Bb, 4H) slice is a static sublane gather (XLU), independent of h/c and
    # therefore schedulable ahead of the serial chain.
    gxs = gx.reshape(Bb, seq_len, 4 * H)

    whh = whh_ref[...]                      # (H, 4H) bf16, stays resident

    h = jnp.zeros((Bb, H), jnp.float32)
    c = jnp.zeros((Bb, H), jnp.float32)

    # ---- Phase 2: recurrence, fully unrolled (static trip count) -----------
    # Static Python loop keeps every gx slice statically indexed (no dynamic
    # sublane slicing to lower); at S=8 / small H vreg pressure is negligible.
    # TODO(synk): for long seq_len / large hidden_dim switch to
    # lax.fori_loop(unroll=True) reading gx from a VMEM scratch via pl.ds to
    # bound live ranges.
    for t in range(seq_len):
        gates = gxs[:, t, :] + jnp.dot(h.astype(whh.dtype), whh,
                                       preferred_element_type=jnp.float32)
        sig = jax.nn.sigmoid(gates[:, :3 * H])      # (Bb, 3H): i, f, o
        g_g = jnp.tanh(gates[:, 3 * H:])            # (Bb, H):  g
        i_g = sig[:, 0 * H:1 * H]
        f_g = sig[:, 1 * H:2 * H]
        o_g = sig[:, 2 * H:3 * H]
        c = f_g * c + i_g * g_g
        h = o_g * jnp.tanh(c)

    # ---- Phase 3: fc3 -> ReLU -> fc4 on the last hidden state --------------
    hid = jnp.dot(h.astype(w3_ref.dtype), w3_ref[...],
                  preferred_element_type=jnp.float32) + b3_ref[...]
    hid = jnp.maximum(hid, 0.0)             # ReLU
    logits = jnp.dot(hid.astype(w4_ref.dtype), w4_ref[...],
                     preferred_element_type=jnp.float32) + b4_ref[...]
    y_ref[...] = logits.astype(y_ref.dtype)


def prepare_params(params, *, hidden_dim, num_classes):
    """One-time parameter conversion (hoisted out of the per-call hot path).

    Transposes weights to MXU-friendly (K, N) layout, casts matmul operands to
    bf16, fuses the two LSTM biases, permutes gate columns (i,f,g,o)->(i,f,o,g),
    zero-pads input_size to a multiple of 128 and the fc4 output to a
    lane-dense multiple of 128.
    """
    H = hidden_dim
    F = params["w_ih"].shape[1]
    Fp = _round_up(F, 128)                        # 1736 -> 1792
    NCp = max(128, _round_up(num_classes, 128))

    perm = jnp.concatenate([jnp.arange(0, 2 * H),        # i, f
                            jnp.arange(3 * H, 4 * H),    # o
                            jnp.arange(2 * H, 3 * H)])   # g
    w_ih = params["w_ih"][perm, :]                # (4H, F)
    w_hh = params["w_hh"][perm, :]                # (4H, H)
    b_lstm = (params["b_ih"] + params["b_hh"])[perm]

    return {
        "wih_t": jnp.pad(w_ih.T, ((0, Fp - F), (0, 0))).astype(jnp.bfloat16),
        "whh_t": w_hh.T.astype(jnp.bfloat16),
        "b_lstm": b_lstm[None, :].astype(jnp.float32),
        "w3_t": params["w_fc3"].T.astype(jnp.bfloat16),
        "b3": params["b_fc3"][None, :].astype(jnp.float32),
        "w4_t": jnp.pad(params["w_fc4"].T,
                        ((0, 0), (0, NCp - num_classes))).astype(jnp.bfloat16),
        "b4": jnp.pad(params["b_fc4"],
                      (0, NCp - num_classes))[None, :].astype(jnp.float32),
    }


@functools.partial(jax.jit,
                   static_argnames=("seq_len", "num_classes", "batch_tile"))
def _forward_impl(x, prep, *, seq_len, num_classes, batch_tile):
    N, F = x.shape
    B = N // seq_len
    Fp, fourH = prep["wih_t"].shape
    H = prep["whh_t"].shape[0]
    NCp = prep["w4_t"].shape[1]

    assert batch_tile % 8 == 0
    tile_b = min(batch_tile, _round_up(B, 8))     # >= 8 sublanes, multiple of 8
    Bp = _round_up(B, tile_b)
    n_tiles = Bp // tile_b

    # x prep fuses under this jit: reshape -> pad batch & feature -> bf16.
    # No (B,S,F)->(S,B,F) HBM transpose: rows stay batch-major (row = b*S + t).
    x3 = x.reshape(B, seq_len, F)
    x3 = jnp.pad(x3, ((0, Bp - B), (0, 0), (0, Fp - F))).astype(jnp.bfloat16)
    x2 = x3.reshape(Bp * seq_len, Fp)

    kernel = functools.partial(lstm_fused_kernel, seq_len=seq_len,
                               batch_blk=tile_b, hidden_dim=H)

    flops = int(2 * seq_len * Bp * (Fp + H) * fourH
                + 2 * Bp * H * 512 + 2 * Bp * 512 * NCp)
    transcendentals = int(seq_len * Bp * 5 * H)
    bytes_accessed = int(x2.size * x2.dtype.itemsize
                         + sum(v.size * v.dtype.itemsize for v in prep.values())
                         + Bp * NCp * 4)

    # Batch-tile grid axis ("parallel") so v7x's two TensorCores each take a
    # share of the batch; weights use a constant index_map -> stay resident.
    # TODO(synk): for very large batches on v5e, additionally split Phase 1
    # along K (Fp) with an "arbitrary" axis + f32 accumulator to overlap the
    # W_ih/x DMA with MXU work.
    y_padded = pl.pallas_call(
        kernel,
        out_shape=jax.ShapeDtypeStruct((Bp, NCp), jnp.float32),
        grid=(n_tiles,),
        in_specs=[
            pl.BlockSpec((tile_b * seq_len, Fp), lambda i: (i, 0)),
            pl.BlockSpec((Fp, fourH), lambda i: (0, 0)),
            pl.BlockSpec((H, fourH), lambda i: (0, 0)),
            pl.BlockSpec((1, fourH), lambda i: (0, 0)),
            pl.BlockSpec((H, 512), lambda i: (0, 0)),
            pl.BlockSpec((1, 512), lambda i: (0, 0)),
            pl.BlockSpec((512, NCp), lambda i: (0, 0)),
            pl.BlockSpec((1, NCp), lambda i: (0, 0)),
        ],
        out_specs=pl.BlockSpec((tile_b, NCp), lambda i: (i, 0)),
        compiler_params=pltpu.CompilerParams(
            dimension_semantics=("parallel",)),
        cost_estimate=pl.CostEstimate(flops=flops,
                                      transcendentals=transcendentals,
                                      bytes_accessed=bytes_accessed),
    )(x2, prep["wih_t"], prep["whh_t"], prep["b_lstm"],
      prep["w3_t"], prep["b3"], prep["w4_t"], prep["b4"])

    return y_padded[:B, :num_classes]


def lstm_nn_vision_audio_forward(x, prep, *, seq_len, num_classes,
                                 batch_tile=64):
    """Mirrors LSTM_NN_Vision_Audio.forward.

    x: (N, 1736) with N = current_batch * seq_len (batch-major, then time).
    Returns (y_pred (current_batch, num_classes), current_batch).
    Note: matmul operands run in bf16 (f32 accumulation), so expect ~1e-2
    relative error vs. an f32 PyTorch reference.
    """
    current_batch = x.shape[0] // seq_len
    y_pred = _forward_impl(x, prep, seq_len=seq_len, num_classes=num_classes,
                           batch_tile=batch_tile)
    return y_pred, current_batch


def init_params(key, *, input_size, hidden_dim, num_classes):
    """Deterministic synthetic parameters matching nn.LSTM / nn.Linear shapes."""
    ks = jax.random.split(key, 8)
    s_lstm = 1.0 / jnp.sqrt(hidden_dim)
    s_fc3 = 1.0 / jnp.sqrt(hidden_dim)
    s_fc4 = 1.0 / jnp.sqrt(512.0)
    u = lambda k, shape, s: jax.random.uniform(k, shape, jnp.float32, -s, s)
    return {
        "w_ih": u(ks[0], (4 * hidden_dim, input_size), s_lstm),
        "w_hh": u(ks[1], (4 * hidden_dim, hidden_dim), s_lstm),
        "b_ih": u(ks[2], (4 * hidden_dim,), s_lstm),
        "b_hh": u(ks[3], (4 * hidden_dim,), s_lstm),
        "w_fc3": u(ks[4], (512, hidden_dim), s_fc3),
        "b_fc3": u(ks[5], (512,), s_fc3),
        "w_fc4": u(ks[6], (num_classes, 512), s_fc4),
        "b_fc4": u(ks[7], (num_classes,), s_fc4),
    }


if __name__ == "__main__":
    INPUT_SIZE = 1736       # fixed by the module (input_size=1736)
    HIDDEN_DIM = 32
    SEQ_LEN = 8
    NUM_CLASSES = 8
    BATCH = 2

    key = jax.random.PRNGKey(0)
    k_x, k_p = jax.random.split(key)

    # The module receives x of shape (batch * seq_len, 1736)
    x = jax.random.normal(k_x, (BATCH * SEQ_LEN, INPUT_SIZE), jnp.float32)
    params = init_params(k_p, input_size=INPUT_SIZE,
                         hidden_dim=HIDDEN_DIM, num_classes=NUM_CLASSES)

    # One-time param conversion, done OUTSIDE the per-call hot path.
    prep = jax.tree_util.tree_map(
        jax.block_until_ready,
        prepare_params(params, hidden_dim=HIDDEN_DIM, num_classes=NUM_CLASSES))

    y_pred, current_batch = lstm_nn_vision_audio_forward(
        x, prep, seq_len=SEQ_LEN, num_classes=NUM_CLASSES)
    jax.block_until_ready(y_pred)
    assert y_pred.shape == (BATCH, NUM_CLASSES)
    assert current_batch == BATCH
    print("KERNEL_OK")
</pallas_src>

<mosaic_0001>
module attributes {stable_mosaic.version = 11 : i64} {
  func.func @lstm_fused_kernel(%arg0: i32, %arg1: memref<64x1792xbf16, #tpu.memory_space<vmem>>, %arg2: memref<1792x128xbf16, #tpu.memory_space<vmem>>, %arg3: memref<32x128xbf16, #tpu.memory_space<vmem>>, %arg4: memref<1x128xf32, #tpu.memory_space<vmem>>, %arg5: memref<32x512xbf16, #tpu.memory_space<vmem>>, %arg6: memref<1x512xf32, #tpu.memory_space<vmem>>, %arg7: memref<512x128xbf16, #tpu.memory_space<vmem>>, %arg8: memref<1x128xf32, #tpu.memory_space<vmem>>, %arg9: memref<8x128xf32, #tpu.memory_space<vmem>>) attributes {dimension_semantics = [#tpu.dimension_semantics<parallel>], iteration_bounds = array<i64: 1>, scalar_prefetch = 0 : i64, scratch_operands = 0 : i64, tpu.core_type = #tpu.core_type<tc>, window_params = [{transform_indices = @transform_0, window_bounds = array<i64: 64, 1792>}, {pipeline_mode = #tpu.pipeline_mode<synchronous>, transform_indices = @transform_1, window_bounds = array<i64: 1792, 128>}, {pipeline_mode = #tpu.pipeline_mode<synchronous>, transform_indices = @transform_2, window_bounds = array<i64: 32, 128>}, {pipeline_mode = #tpu.pipeline_mode<synchronous>, transform_indices = @transform_3, window_bounds = array<i64: 1, 128>}, {pipeline_mode = #tpu.pipeline_mode<synchronous>, transform_indices = @transform_4, window_bounds = array<i64: 32, 512>}, {pipeline_mode = #tpu.pipeline_mode<synchronous>, transform_indices = @transform_5, window_bounds = array<i64: 1, 512>}, {pipeline_mode = #tpu.pipeline_mode<synchronous>, transform_indices = @transform_6, window_bounds = array<i64: 512, 128>}, {pipeline_mode = #tpu.pipeline_mode<synchronous>, transform_indices = @transform_7, window_bounds = array<i64: 1, 128>}, {transform_indices = @transform_8, window_bounds = array<i64: 8, 128>}]} {
    %c0 = arith.constant 0 : index
    %c0_0 = arith.constant 0 : index
    %0 = vector.load %arg1[%c0, %c0_0] : memref<64x1792xbf16, #tpu.memory_space<vmem>>, vector<64x1792xbf16>
    %c0_1 = arith.constant 0 : index
    %c0_2 = arith.constant 0 : index
    %1 = vector.load %arg2[%c0_1, %c0_2] : memref<1792x128xbf16, #tpu.memory_space<vmem>>, vector<1792x128xbf16>
    %cst = arith.constant dense<0.000000e+00> : vector<64x128xf32>
    %2 = tpu.matmul %0, %1, %cst {dimension_numbers = #tpu.dot_dimension_numbers<[1], [0], [0], [1], [0, 0, 1, 1], [], []>} : vector<64x1792xbf16>, vector<1792x128xbf16>, vector<64x128xf32> -> vector<64x128xf32>
    %c0_3 = arith.constant 0 : index
    %c0_4 = arith.constant 0 : index
    %3 = vector.load %arg4[%c0_3, %c0_4] : memref<1x128xf32, #tpu.memory_space<vmem>>, vector<1x128xf32>
    %4 = vector.broadcast %3 : vector<1x128xf32> to vector<64x128xf32>
    %5 = arith.addf %2, %4 : vector<64x128xf32>
    %6 = vector.shape_cast %5 : vector<64x128xf32> to vector<8x8x128xf32>
    %c0_5 = arith.constant 0 : index
    %c0_6 = arith.constant 0 : index
    %7 = vector.load %arg3[%c0_5, %c0_6] : memref<32x128xbf16, #tpu.memory_space<vmem>>, vector<32x128xbf16>
    %cst_7 = arith.constant 0.000000e+00 : f32
    %8 = vector.broadcast %cst_7 : f32 to vector<8x32xf32>
    %cst_8 = arith.constant 0.000000e+00 : f32
    %9 = vector.broadcast %cst_8 : f32 to vector<8x32xf32>
    %10 = vector.extract_strided_slice %6 {offsets = [0, 0, 0], sizes = [8, 1, 128], strides = [1, 1, 1]} : vector<8x8x128xf32> to vector<8x1x128xf32>
    %11 = vector.shape_cast %10 : vector<8x1x128xf32> to vector<8x128xf32>
    %12 = arith.truncf %8 : vector<8x32xf32> to vector<8x32xbf16>
    %cst_9 = arith.constant dense<0.000000e+00> : vector<8x128xf32>
    %13 = tpu.matmul %12, %7, %cst_9 {dimension_numbers = #tpu.dot_dimension_numbers<[1], [0], [0], [1], [0, 0, 1, 1], [], []>} : vector<8x32xbf16>, vector<32x128xbf16>, vector<8x128xf32> -> vector<8x128xf32>
    %14 = arith.addf %11, %13 : vector<8x128xf32>
    %15 = vector.extract_strided_slice %14 {offsets = [0, 0], sizes = [8, 96], strides = [1, 1]} : vector<8x128xf32> to vector<8x96xf32>
    %16 = arith.negf %15 : vector<8x96xf32>
    %17 = math.exp %16 : vector<8x96xf32>
    %cst_10 = arith.constant 1.000000e+00 : f32
    %18 = vector.broadcast %cst_10 : f32 to vector<8x96xf32>
    %19 = arith.addf %18, %17 : vector<8x96xf32>
    %20 = arith.divf %18, %19 : vector<8x96xf32>
    %21 = vector.extract_strided_slice %14 {offsets = [0, 96], sizes = [8, 32], strides = [1, 1]} : vector<8x128xf32> to vector<8x32xf32>
    %22 = math.tanh %21 : vector<8x32xf32>
    %23 = vector.extract_strided_slice %20 {offsets = [0, 0], sizes = [8, 32], strides = [1, 1]} : vector<8x96xf32> to vector<8x32xf32>
    %24 = vector.extract_strided_slice %20 {offsets = [0, 32], sizes = [8, 32], strides = [1, 1]} : vector<8x96xf32> to vector<8x32xf32>
    %25 = vector.extract_strided_slice %20 {offsets = [0, 64], sizes = [8, 32], strides = [1, 1]} : vector<8x96xf32> to vector<8x32xf32>
    %26 = arith.mulf %24, %9 : vector<8x32xf32>
    %27 = arith.mulf %23, %22 : vector<8x32xf32>
    %28 = arith.addf %26, %27 : vector<8x32xf32>
    %29 = math.tanh %28 : vector<8x32xf32>
    %30 = arith.mulf %25, %29 : vector<8x32xf32>
    %31 = vector.extract_strided_slice %6 {offsets = [0, 1, 0], sizes = [8, 1, 128], strides = [1, 1, 1]} : vector<8x8x128xf32> to vector<8x1x128xf32>
    %32 = vector.shape_cast %31 : vector<8x1x128xf32> to vector<8x128xf32>
    %33 = arith.truncf %30 : vector<8x32xf32> to vector<8x32xbf16>
    %cst_11 = arith.constant dense<0.000000e+00> : vector<8x128xf32>
    %34 = tpu.matmul %33, %7, %cst_11 {dimension_numbers = #tpu.dot_dimension_numbers<[1], [0], [0], [1], [0, 0, 1, 1], [], []>} : vector<8x32xbf16>, vector<32x128xbf16>, vector<8x128xf32> -> vector<8x128xf32>
    %35 = arith.addf %32, %34 : vector<8x128xf32>
    %36 = vector.extract_strided_slice %35 {offsets = [0, 0], sizes = [8, 96], strides = [1, 1]} : vector<8x128xf32> to vector<8x96xf32>
    %37 = arith.negf %36 : vector<8x96xf32>
    %38 = math.exp %37 : vector<8x96xf32>
    %cst_12 = arith.constant 1.000000e+00 : f32
    %39 = vector.broadcast %cst_12 : f32 to vector<8x96xf32>
    %40 = arith.addf %39, %38 : vector<8x96xf32>
    %41 = arith.divf %39, %40 : vector<8x96xf32>
    %42 = vector.extract_strided_slice %35 {offsets = [0, 96], sizes = [8, 32], strides = [1, 1]} : vector<8x128xf32> to vector<8x32xf32>
    %43 = math.tanh %42 : vector<8x32xf32>
    %44 = vector.extract_strided_slice %41 {offsets = [0, 0], sizes = [8, 32], strides = [1, 1]} : vector<8x96xf32> to vector<8x32xf32>
    %45 = vector.extract_strided_slice %41 {offsets = [0, 32], sizes = [8, 32], strides = [1, 1]} : vector<8x96xf32> to vector<8x32xf32>
    %46 = vector.extract_strided_slice %41 {offsets = [0, 64], sizes = [8, 32], strides = [1, 1]} : vector<8x96xf32> to vector<8x32xf32>
    %47 = arith.mulf %45, %28 : vector<8x32xf32>
    %48 = arith.mulf %44, %43 : vector<8x32xf32>
    %49 = arith.addf %47, %48 : vector<8x32xf32>
    %50 = math.tanh %49 : vector<8x32xf32>
    %51 = arith.mulf %46, %50 : vector<8x32xf32>
    %52 = vector.extract_strided_slice %6 {offsets = [0, 2, 0], sizes = [8, 1, 128], strides = [1, 1, 1]} : vector<8x8x128xf32> to vector<8x1x128xf32>
    %53 = vector.shape_cast %52 : vector<8x1x128xf32> to vector<8x128xf32>
    %54 = arith.truncf %51 : vector<8x32xf32> to vector<8x32xbf16>
    %cst_13 = arith.constant dense<0.000000e+00> : vector<8x128xf32>
    %55 = tpu.matmul %54, %7, %cst_13 {dimension_numbers = #tpu.dot_dimension_numbers<[1], [0], [0], [1], [0, 0, 1, 1], [], []>} : vector<8x32xbf16>, vector<32x128xbf16>, vector<8x128xf32> -> vector<8x128xf32>
    %56 = arith.addf %53, %55 : vector<8x128xf32>
    %57 = vector.extract_strided_slice %56 {offsets = [0, 0], sizes = [8, 96], strides = [1, 1]} : vector<8x128xf32> to vector<8x96xf32>
    %58 = arith.negf %57 : vector<8x96xf32>
    %59 = math.exp %58 : vector<8x96xf32>
    %cst_14 = arith.constant 1.000000e+00 : f32
    %60 = vector.broadcast %cst_14 : f32 to vector<8x96xf32>
    %61 = arith.addf %60, %59 : vector<8x96xf32>
    %62 = arith.divf %60, %61 : vector<8x96xf32>
    %63 = vector.extract_strided_slice %56 {offsets = [0, 96], sizes = [8, 32], strides = [1, 1]} : vector<8x128xf32> to vector<8x32xf32>
    %64 = math.tanh %63 : vector<8x32xf32>
    %65 = vector.extract_strided_slice %62 {offsets = [0, 0], sizes = [8, 32], strides = [1, 1]} : vector<8x96xf32> to vector<8x32xf32>
    %66 = vector.extract_strided_slice %62 {offsets = [0, 32], sizes = [8, 32], strides = [1, 1]} : vector<8x96xf32> to vector<8x32xf32>
    %67 = vector.extract_strided_slice %62 {offsets = [0, 64], sizes = [8, 32], strides = [1, 1]} : vector<8x96xf32> to vector<8x32xf32>
    %68 = arith.mulf %66, %49 : vector<8x32xf32>
    %69 = arith.mulf %65, %64 : vector<8x32xf32>
    %70 = arith.addf %68, %69 : vector<8x32xf32>
    %71 = math.tanh %70 : vector<8x32xf32>
    %72 = arith.mulf %67, %71 : vector<8x32xf32>
    %73 = vector.extract_strided_slice %6 {offsets = [0, 3, 0], sizes = [8, 1, 128], strides = [1, 1, 1]} : vector<8x8x128xf32> to vector<8x1x128xf32>
    %74 = vector.shape_cast %73 : vector<8x1x128xf32> to vector<8x128xf32>
    %75 = arith.truncf %72 : vector<8x32xf32> to vector<8x32xbf16>
    %cst_15 = arith.constant dense<0.000000e+00> : vector<8x128xf32>
    %76 = tpu.matmul %75, %7, %cst_15 {dimension_numbers = #tpu.dot_dimension_numbers<[1], [0], [0], [1], [0, 0, 1, 1], [], []>} : vector<8x32xbf16>, vector<32x128xbf16>, vector<8x128xf32> -> vector<8x128xf32>
    %77 = arith.addf %74, %76 : vector<8x128xf32>
    %78 = vector.extract_strided_slice %77 {offsets = [0, 0], sizes = [8, 96], strides = [1, 1]} : vector<8x128xf32> to vector<8x96xf32>
    %79 = arith.negf %78 : vector<8x96xf32>
    %80 = math.exp %79 : vector<8x96xf32>
    %cst_16 = arith.constant 1.000000e+00 : f32
    %81 = vector.broadcast %cst_16 : f32 to vector<8x96xf32>
    %82 = arith.addf %81, %80 : vector<8x96xf32>
    %83 = arith.divf %81, %82 : vector<8x96xf32>
    %84 = vector.extract_strided_slice %77 {offsets = [0, 96], sizes = [8, 32], strides = [1, 1]} : vector<8x128xf32> to vector<8x32xf32>
    %85 = math.tanh %84 : vector<8x32xf32>
    %86 = vector.extract_strided_slice %83 {offsets = [0, 0], sizes = [8, 32], strides = [1, 1]} : vector<8x96xf32> to vector<8x32xf32>
    %87 = vector.extract_strided_slice %83 {offsets = [0, 32], sizes = [8, 32], strides = [1, 1]} : vector<8x96xf32> to vector<8x32xf32>
    %88 = vector.extract_strided_slice %83 {offsets = [0, 64], sizes = [8, 32], strides = [1, 1]} : vector<8x96xf32> to vector<8x32xf32>
    %89 = arith.mulf %87, %70 : vector<8x32xf32>
    %90 = arith.mulf %86, %85 : vector<8x32xf32>
    %91 = arith.addf %89, %90 : vector<8x32xf32>
    %92 = math.tanh %91 : vector<8x32xf32>
    %93 = arith.mulf %88, %92 : vector<8x32xf32>
    %94 = vector.extract_strided_slice %6 {offsets = [0, 4, 0], sizes = [8, 1, 128], strides = [1, 1, 1]} : vector<8x8x128xf32> to vector<8x1x128xf32>
    %95 = vector.shape_cast %94 : vector<8x1x128xf32> to vector<8x128xf32>
    %96 = arith.truncf %93 : vector<8x32xf32> to vector<8x32xbf16>
    %cst_17 = arith.constant dense<0.000000e+00> : vector<8x128xf32>
    %97 = tpu.matmul %96, %7, %cst_17 {dimension_numbers = #tpu.dot_dimension_numbers<[1], [0], [0], [1], [0, 0, 1, 1], [], []>} : vector<8x32xbf16>, vector<32x128xbf16>, vector<8x128xf32> -> vector<8x128xf32>
    %98 = arith.addf %95, %97 : vector<8x128xf32>
    %99 = vector.extract_strided_slice %98 {offsets = [0, 0], sizes = [8, 96], strides = [1, 1]} : vector<8x128xf32> to vector<8x96xf32>
    %100 = arith.negf %99 : vector<8x96xf32>
    %101 = math.exp %100 : vector<8x96xf32>
    %cst_18 = arith.constant 1.000000e+00 : f32
    %102 = vector.broadcast %cst_18 : f32 to vector<8x96xf32>
    %103 = arith.addf %102, %101 : vector<8x96xf32>
    %104 = arith.divf %102, %103 : vector<8x96xf32>
    %105 = vector.extract_strided_slice %98 {offsets = [0, 96], sizes = [8, 32], strides = [1, 1]} : vector<8x128xf32> to vector<8x32xf32>
    %106 = math.tanh %105 : vector<8x32xf32>
    %107 = vector.extract_strided_slice %104 {offsets = [0, 0], sizes = [8, 32], strides = [1, 1]} : vector<8x96xf32> to vector<8x32xf32>
    %108 = vector.extract_strided_slice %104 {offsets = [0, 32], sizes = [8, 32], strides = [1, 1]} : vector<8x96xf32> to vector<8x32xf32>
    %109 = vector.extract_strided_slice %104 {offsets = [0, 64], sizes = [8, 32], strides = [1, 1]} : vector<8x96xf32> to vector<8x32xf32>
    %110 = arith.mulf %108, %91 : vector<8x32xf32>
    %111 = arith.mulf %107, %106 : vector<8x32xf32>
    %112 = arith.addf %110, %111 : vector<8x32xf32>
    %113 = math.tanh %112 : vector<8x32xf32>
    %114 = arith.mulf %109, %113 : vector<8x32xf32>
    %115 = vector.extract_strided_slice %6 {offsets = [0, 5, 0], sizes = [8, 1, 128], strides = [1, 1, 1]} : vector<8x8x128xf32> to vector<8x1x128xf32>
    %116 = vector.shape_cast %115 : vector<8x1x128xf32> to vector<8x128xf32>
    %117 = arith.truncf %114 : vector<8x32xf32> to vector<8x32xbf16>
    %cst_19 = arith.constant dense<0.000000e+00> : vector<8x128xf32>
    %118 = tpu.matmul %117, %7, %cst_19 {dimension_numbers = #tpu.dot_dimension_numbers<[1], [0], [0], [1], [0, 0, 1, 1], [], []>} : vector<8x32xbf16>, vector<32x128xbf16>, vector<8x128xf32> -> vector<8x128xf32>
    %119 = arith.addf %116, %118 : vector<8x128xf32>
    %120 = vector.extract_strided_slice %119 {offsets = [0, 0], sizes = [8, 96], strides = [1, 1]} : vector<8x128xf32> to vector<8x96xf32>
    %121 = arith.negf %120 : vector<8x96xf32>
    %122 = math.exp %121 : vector<8x96xf32>
    %cst_20 = arith.constant 1.000000e+00 : f32
    %123 = vector.broadcast %cst_20 : f32 to vector<8x96xf32>
    %124 = arith.addf %123, %122 : vector<8x96xf32>
    %125 = arith.divf %123, %124 : vector<8x96xf32>
    %126 = vector.extract_strided_slice %119 {offsets = [0, 96], sizes = [8, 32], strides = [1, 1]} : vector<8x128xf32> to vector<8x32xf32>
    %127 = math.tanh %126 : vector<8x32xf32>
    %128 = vector.extract_strided_slice %125 {offsets = [0, 0], sizes = [8, 32], strides = [1, 1]} : vector<8x96xf32> to vector<8x32xf32>
    %129 = vector.extract_strided_slice %125 {offsets = [0, 32], sizes = [8, 32], strides = [1, 1]} : vector<8x96xf32> to vector<8x32xf32>
    %130 = vector.extract_strided_slice %125 {offsets = [0, 64], sizes = [8, 32], strides = [1, 1]} : vector<8x96xf32> to vector<8x32xf32>
    %131 = arith.mulf %129, %112 : vector<8x32xf32>
    %132 = arith.mulf %128, %127 : vector<8x32xf32>
    %133 = arith.addf %131, %132 : vector<8x32xf32>
    %134 = math.tanh %133 : vector<8x32xf32>
    %135 = arith.mulf %130, %134 : vector<8x32xf32>
    %136 = vector.extract_strided_slice %6 {offsets = [0, 6, 0], sizes = [8, 1, 128], strides = [1, 1, 1]} : vector<8x8x128xf32> to vector<8x1x128xf32>
    %137 = vector.shape_cast %136 : vector<8x1x128xf32> to vector<8x128xf32>
    %138 = arith.truncf %135 : vector<8x32xf32> to vector<8x32xbf16>
    %cst_21 = arith.constant dense<0.000000e+00> : vector<8x128xf32>
    %139 = tpu.matmul %138, %7, %cst_21 {dimension_numbers = #tpu.dot_dimension_numbers<[1], [0], [0], [1], [0, 0, 1, 1], [], []>} : vector<8x32xbf16>, vector<32x128xbf16>, vector<8x128xf32> -> vector<8x128xf32>
    %140 = arith.addf %137, %139 : vector<8x128xf32>
    %141 = vector.extract_strided_slice %140 {offsets = [0, 0], sizes = [8, 96], strides = [1, 1]} : vector<8x128xf32> to vector<8x96xf32>
    %142 = arith.negf %141 : vector<8x96xf32>
    %143 = math.exp %142 : vector<8x96xf32>
    %cst_22 = arith.constant 1.000000e+00 : f32
    %144 = vector.broadcast %cst_22 : f32 to vector<8x96xf32>
    %145 = arith.addf %144, %143 : vector<8x96xf32>
    %146 = arith.divf %144, %145 : vector<8x96xf32>
    %147 = vector.extract_strided_slice %140 {offsets = [0, 96], sizes = [8, 32], strides = [1, 1]} : vector<8x128xf32> to vector<8x32xf32>
    %148 = math.tanh %147 : vector<8x32xf32>
    %149 = vector.extract_strided_slice %146 {offsets = [0, 0], sizes = [8, 32], strides = [1, 1]} : vector<8x96xf32> to vector<8x32xf32>
    %150 = vector.extract_strided_slice %146 {offsets = [0, 32], sizes = [8, 32], strides = [1, 1]} : vector<8x96xf32> to vector<8x32xf32>
    %151 = vector.extract_strided_slice %146 {offsets = [0, 64], sizes = [8, 32], strides = [1, 1]} : vector<8x96xf32> to vector<8x32xf32>
    %152 = arith.mulf %150, %133 : vector<8x32xf32>
    %153 = arith.mulf %149, %148 : vector<8x32xf32>
    %154 = arith.addf %152, %153 : vector<8x32xf32>
    %155 = math.tanh %154 : vector<8x32xf32>
    %156 = arith.mulf %151, %155 : vector<8x32xf32>
    %157 = vector.extract_strided_slice %6 {offsets = [0, 7, 0], sizes = [8, 1, 128], strides = [1, 1, 1]} : vector<8x8x128xf32> to vector<8x1x128xf32>
    %158 = vector.shape_cast %157 : vector<8x1x128xf32> to vector<8x128xf32>
    %159 = arith.truncf %156 : vector<8x32xf32> to vector<8x32xbf16>
    %cst_23 = arith.constant dense<0.000000e+00> : vector<8x128xf32>
    %160 = tpu.matmul %159, %7, %cst_23 {dimension_numbers = #tpu.dot_dimension_numbers<[1], [0], [0], [1], [0, 0, 1, 1], [], []>} : vector<8x32xbf16>, vector<32x128xbf16>, vector<8x128xf32> -> vector<8x128xf32>
    %161 = arith.addf %158, %160 : vector<8x128xf32>
    %162 = vector.extract_strided_slice %161 {offsets = [0, 0], sizes = [8, 96], strides = [1, 1]} : vector<8x128xf32> to vector<8x96xf32>
    %163 = arith.negf %162 : vector<8x96xf32>
    %164 = math.exp %163 : vector<8x96xf32>
    %cst_24 = arith.constant 1.000000e+00 : f32
    %165 = vector.broadcast %cst_24 : f32 to vector<8x96xf32>
    %166 = arith.addf %165, %164 : vector<8x96xf32>
    %167 = arith.divf %165, %166 : vector<8x96xf32>
    %168 = vector.extract_strided_slice %161 {offsets = [0, 96], sizes = [8, 32], strides = [1, 1]} : vector<8x128xf32> to vector<8x32xf32>
    %169 = math.tanh %168 : vector<8x32xf32>
    %170 = vector.extract_strided_slice %167 {offsets = [0, 0], sizes = [8, 32], strides = [1, 1]} : vector<8x96xf32> to vector<8x32xf32>
    %171 = vector.extract_strided_slice %167 {offsets = [0, 32], sizes = [8, 32], strides = [1, 1]} : vector<8x96xf32> to vector<8x32xf32>
    %172 = vector.extract_strided_slice %167 {offsets = [0, 64], sizes = [8, 32], strides = [1, 1]} : vector<8x96xf32> to vector<8x32xf32>
    %173 = arith.mulf %171, %154 : vector<8x32xf32>
    %174 = arith.mulf %170, %169 : vector<8x32xf32>
    %175 = arith.addf %173, %174 : vector<8x32xf32>
    %176 = math.tanh %175 : vector<8x32xf32>
    %177 = arith.mulf %172, %176 : vector<8x32xf32>
    %178 = arith.truncf %177 : vector<8x32xf32> to vector<8x32xbf16>
    %c0_25 = arith.constant 0 : index
    %c0_26 = arith.constant 0 : index
    %179 = vector.load %arg5[%c0_25, %c0_26] : memref<32x512xbf16, #tpu.memory_space<vmem>>, vector<32x512xbf16>
    %cst_27 = arith.constant dense<0.000000e+00> : vector<8x512xf32>
    %180 = tpu.matmul %178, %179, %cst_27 {dimension_numbers = #tpu.dot_dimension_numbers<[1], [0], [0], [1], [0, 0, 1, 1], [], []>} : vector<8x32xbf16>, vector<32x512xbf16>, vector<8x512xf32> -> vector<8x512xf32>
    %c0_28 = arith.constant 0 : index
    %c0_29 = arith.constant 0 : index
    %181 = vector.load %arg6[%c0_28, %c0_29] : memref<1x512xf32, #tpu.memory_space<vmem>>, vector<1x512xf32>
    %182 = vector.broadcast %181 : vector<1x512xf32> to vector<8x512xf32>
    %183 = arith.addf %180, %182 : vector<8x512xf32>
    %cst_30 = arith.constant 0.000000e+00 : f32
    %184 = vector.broadcast %cst_30 : f32 to vector<8x512xf32>
    %185 = arith.maximumf %183, %184 : vector<8x512xf32>
    %186 = arith.truncf %185 : vector<8x512xf32> to vector<8x512xbf16>
    %c0_31 = arith.constant 0 : index
    %c0_32 = arith.constant 0 : index
    %187 = vector.load %arg7[%c0_31, %c0_32] : memref<512x128xbf16, #tpu.memory_space<vmem>>, vector<512x128xbf16>
    %cst_33 = arith.constant dense<0.000000e+00> : vector<8x128xf32>
    %188 = tpu.matmul %186, %187, %cst_33 {dimension_numbers = #tpu.dot_dimension_numbers<[1], [0], [0], [1], [0, 0, 1, 1], [], []>} : vector<8x512xbf16>, vector<512x128xbf16>, vector<8x128xf32> -> vector<8x128xf32>
    %c0_34 = arith.constant 0 : index
    %c0_35 = arith.constant 0 : index
    %189 = vector.load %arg8[%c0_34, %c0_35] : memref<1x128xf32, #tpu.memory_space<vmem>>, vector<1x128xf32>
    %190 = vector.broadcast %189 : vector<1x128xf32> to vector<8x128xf32>
    %191 = arith.addf %188, %190 : vector<8x128xf32>
    %c0_36 = arith.constant 0 : index
    %c0_37 = arith.constant 0 : index
    %192 = vector.load %arg9[%c0_36, %c0_37] : memref<8x128xf32, #tpu.memory_space<vmem>>, vector<8x128xf32>
    tpu.vector_store %arg9[%c0_36, %c0_37], %191 {strides = array<i32>} : memref<8x128xf32, #tpu.memory_space<vmem>>, vector<8x128xf32>,
    return
  }
  func.func @transform_0(%arg0: i32) -> (i32, i32) {
    %c0_i32 = arith.constant 0 : i32
    %c0_i32_0 = arith.constant 0 : i32
    return %arg0, %c0_i32 : i32, i32
  }
  func.func @transform_1(%arg0: i32) -> (i32, i32) {
    %c0_i32 = arith.constant 0 : i32
    %c0_i32_0 = arith.constant 0 : i32
    %c0_i32_1 = arith.constant 0 : i32
    return %c0_i32, %c0_i32_0 : i32, i32
  }
  func.func @transform_2(%arg0: i32) -> (i32, i32) {
    %c0_i32 = arith.constant 0 : i32
    %c0_i32_0 = arith.constant 0 : i32
    %c0_i32_1 = arith.constant 0 : i32
    return %c0_i32, %c0_i32_0 : i32, i32
  }
  func.func @transform_3(%arg0: i32) -> (i32, i32) {
    %c0_i32 = arith.constant 0 : i32
    %c0_i32_0 = arith.constant 0 : i32
    %c0_i32_1 = arith.constant 0 : i32
    return %c0_i32, %c0_i32_0 : i32, i32
  }
  func.func @transform_4(%arg0: i32) -> (i32, i32) {
    %c0_i32 = arith.constant 0 : i32
    %c0_i32_0 = arith.constant 0 : i32
    %c0_i32_1 = arith.constant 0 : i32
    return %c0_i32, %c0_i32_0 : i32, i32
  }
  func.func @transform_5(%arg0: i32) -> (i32, i32) {
    %c0_i32 = arith.constant 0 : i32
    %c0_i32_0 = arith.constant 0 : i32
    %c0_i32_1 = arith.constant 0 : i32
    return %c0_i32, %c0_i32_0 : i32, i32
  }
  func.func @transform_6(%arg0: i32) -> (i32, i32) {
    %c0_i32 = arith.constant 0 : i32
    %c0_i32_0 = arith.constant 0 : i32
    %c0_i32_1 = arith.constant 0 : i32
    return %c0_i32, %c0_i32_0 : i32, i32
  }
  func.func @transform_7(%arg0: i32) -> (i32, i32) {
    %c0_i32 = arith.constant 0 : i32
    %c0_i32_0 = arith.constant 0 : i32
    %c0_i32_1 = arith.constant 0 : i32
    return %c0_i32, %c0_i32_0 : i32, i32
  }
  func.func @transform_8(%arg0: i32) -> (i32, i32) {
    %c0_i32 = arith.constant 0 : i32
    %c0_i32_0 = arith.constant 0 : i32
    return %arg0, %c0_i32 : i32, i32
  }
}

</mosaic_0001>

<llo_original>
// kernel: _forward_impl.1
$region0: #{_forward_impl.1}
  #allocation0 [shape = 'u32[]', space=smem, size = 0x4, offset = 0x4, fixed_abs, tag = 'smem constant byte address 0x4 - core index']
  #allocation1 [shape = 'u32[144,128]{1,0:T(1,128)}', space=vmem, size = 0x12000, scoped, tag = 'internal scratch']
  %s0 = inlined_call_operand.vmem [shape: bf16[64,1792], index: 0, kind: input, shape index: {}]
  %s1 = inlined_call_operand.vmem [shape: bf16[1792,128], index: 1, kind: input, shape index: {}]
  %s2 = inlined_call_operand.hbm [shape: bf16[32,128], index: 2, kind: input, shape index: {}]
  %s3 = inlined_call_operand.vmem [shape: f32[1,128], index: 3, kind: input, shape index: {}]
  %s4 = inlined_call_operand.hbm [shape: bf16[32,512], index: 4, kind: input, shape index: {}]
  %s5 = inlined_call_operand.vmem [shape: f32[1,512], index: 5, kind: input, shape index: {}]
  %s6 = inlined_call_operand.hbm [shape: bf16[512,128], index: 6, kind: input, shape index: {}]
  %s7 = inlined_call_operand.vmem [shape: f32[1,128], index: 7, kind: input, shape index: {}]
  %s8 = inlined_call_operand.vmem [shape: f32[8,128], index: 8, kind: output, shape index: {}]
  %s9 = sld [smem:[#allocation0]]
  $region54: #{_forward_impl.1} parent=0
    _
  %s11 = ssub.s32 1, %s9
  %s12 = scalar_select 0, %s11, %s9
  $region1: #{_forward_impl.1} parent=0
    #allocation2 [shape = 'u8[8192]{0}', space=vmem, size = 0x2000, scoped, tag = 'input window, operand 2, single buffered']
    #allocation3 [shape = 's32[1]{0}', space=sflag, size = 0x4, scoped, tag = 'scoped memory for _forward_impl.1']
    #allocation4 [shape = 'u8[32768]{0}', space=vmem, size = 0x8000, scoped, tag = 'input window, operand 4, single buffered']
    #allocation5 [shape = 's32[1]{0}', space=sflag, size = 0x4, scoped, tag = 'scoped memory for _forward_impl.1']
    #allocation6 [shape = 'u8[131072]{0}', space=vmem, size = 0x20000, scoped, tag = 'input window, operand 6, single buffered']
    %13 = vsyncpa [#allocation3], 0
    %14 = vsyncpa [#allocation5], 0
    // Predicated region
    $region2: #{_forward_impl.1} parent=1 // pred_check
      _
    $region3: #{_forward_impl.1} parent=1 // pred_check_branch
      %16 = sbr.rel (0) target = $region5
    $region4: #{_forward_impl.1} parent=1 // pred_region
      _
    $region5: #{_forward_impl.1} parent=1 // pred_fallthru
      _
    // Predicated region
    $region6: #{_forward_impl.1} parent=1 // pred_check
      _
    $region7: #{_forward_impl.1} parent=1 // pred_check_branch
      %18 = sbr.rel (0) target = $region9
    $region8: #{_forward_impl.1} parent=1 // pred_region
      _
    $region9: #{_forward_impl.1} parent=1 // pred_fallthru
      _
    // Predicated region
    $region10: #{_forward_impl.1} parent=1 // pred_check
      _
    $region11: #{_forward_impl.1} parent=1 // pred_check_branch
      %20 = sbr.rel (0) target = $region13
    $region12: #{_forward_impl.1} parent=1 // pred_region
      %s22 = ssub.s32 256, 256
      %23 = vsyncadd [#allocation3], %s22
      %s24 = sshll.u32 [#allocation2], 4
      %s25 = int_to_ptr.vmem [resolvable:$true] %s24
      %30 = dma.hbm_to_vmem [thread:$0]  %s2, 256, %s25, [#allocation3], 64, 64, 4
    $region13: #{_forward_impl.1} parent=1 // pred_fallthru
      _
    // Predicated region
    $region14: #{_forward_impl.1} parent=1 // pred_check
      _
    $region15: #{_forward_impl.1} parent=1 // pred_check_branch
      %32 = sbr.rel (0) target = $region17
    $region16: #{_forward_impl.1} parent=1 // pred_region
      _
    $region17: #{_forward_impl.1} parent=1 // pred_fallthru
      _
    // Predicated region
    $region18: #{_forward_impl.1} parent=1 // pred_check
      _
    $region19: #{_forward_impl.1} parent=1 // pred_check_branch
      %34 = sbr.rel (0) target = $region21
    $region20: #{_forward_impl.1} parent=1 // pred_region
      %s36 = ssub.s32 1024, 1024
      %37 = vsyncadd [#allocation5], %s36
      %s38 = sshll.u32 [#allocation4], 4
      %s39 = int_to_ptr.vmem [resolvable:$true] %s38
      %44 = dma.hbm_to_vmem [thread:$0]  %s4, 1024, %s39, [#allocation5], 256, 256, 16
    $region21: #{_forward_impl.1} parent=1 // pred_fallthru
      _
    // Predicated region
    $region22: #{_forward_impl.1} parent=1 // pred_check
      _
    $region23: #{_forward_impl.1} parent=1 // pred_check_branch
      %46 = sbr.rel (0) target = $region25
    $region24: #{_forward_impl.1} parent=1 // pred_region
      _
    $region25: #{_forward_impl.1} parent=1 // pred_fallthru
      _
    // Predicated region
    $region26: #{_forward_impl.1} parent=1 // pred_check
      _
    $region27: #{_forward_impl.1} parent=1 // pred_check_branch
      %48 = sbr.rel (0) target = $region29
    $region28: #{_forward_impl.1} parent=1 // pred_region
      %s50 = ssub.s32 4096, 4096
      %51 = vsyncadd [#allocation5], %s50
      %s52 = sshll.u32 [#allocation6], 4
      %s53 = int_to_ptr.vmem [resolvable:$true] %s52
      %58 = dma.hbm_to_vmem [thread:$0]  %s6, 4096, %s53, [#allocation5], 64, 64, 4
    $region29: #{_forward_impl.1} parent=1 // pred_fallthru
      _
    // Predicated region
    $region30: #{_forward_impl.1} parent=1 // pred_check
      _
    $region31: #{_forward_impl.1} parent=1 // pred_check_branch
      %60 = sbr.rel (0) target = $region33
    $region32: #{_forward_impl.1} parent=1 // pred_region
      _
    $region33: #{_forward_impl.1} parent=1 // pred_fallthru
      _
    // Predicated region
    $region34: #{_forward_impl.1} parent=1 // pred_check
      _
    $region35: #{_forward_impl.1} parent=1 // pred_check_branch
      %62 = sbr.rel (0) target = $region37
    $region36: #{_forward_impl.1} parent=1 // pred_region
      %63 = dma.done [#allocation3], 256
    $region37: #{_forward_impl.1} parent=1 // pred_fallthru
      _
    // Predicated region
    $region38: #{_forward_impl.1} parent=1 // pred_check
      _
    $region39: #{_forward_impl.1} parent=1 // pred_check_branch
      %65 = sbr.rel (0) target = $region41
    $region40: #{_forward_impl.1} parent=1 // pred_region
      %66 = dma.done [#allocation5], 1024
    $region41: #{_forward_impl.1} parent=1 // pred_fallthru
      _
    // Predicated region
    $region42: #{_forward_impl.1} parent=1 // pred_check
      _
    $region43: #{_forward_impl.1} parent=1 // pred_check_branch
      %68 = sbr.rel (0) target = $region45
    $region44: #{_forward_impl.1} parent=1 // pred_region
      %69 = dma.done [#allocation5], 4096
    $region45: #{_forward_impl.1} parent=1 // pred_fallthru
      _
    %v71 = vld [vmem:[%s0] sm:$0xff]
    %v72 = vld [vmem:[%s0 + $0x8] sm:$0xff]
    %v73 = vld [vmem:[%s0 + $0x10] sm:$0xff]
    %v74 = vld [vmem:[%s0 + $0x18] sm:$0xff]
    %v75 = vld [vmem:[%s0 + $0x20] sm:$0xff]
    %v76 = vld [vmem:[%s0 + $0x28] sm:$0xff]
    %v77 = vld [vmem:[%s0 + $0x30] sm:$0xff]
    %v78 = vld [vmem:[%s0 + $0x38] sm:$0xff]
    %v79 = vld [vmem:[%s0 + $0x40] sm:$0xff]
    %v80 = vld [vmem:[%s0 + $0x48] sm:$0xff]
    %v81 = vld [vmem:[%s0 + $0x50] sm:$0xff]
    %v82 = vld [vmem:[%s0 + $0x58] sm:$0xff]
    %v83 = vld [vmem:[%s0 + $0x60] sm:$0xff]
    %v84 = vld [vmem:[%s0 + $0x68] sm:$0xff]
    %v85 = vld [vmem:[%s0 + $0x70] sm:$0xff]
    %v86 = vld [vmem:[%s0 + $0x78] sm:$0xff]
    %v87 = vld [vmem:[%s0 + $0x80] sm:$0xff]
    %v88 = vld [vmem:[%s0 + $0x88] sm:$0xff]
    %v89 = vld [vmem:[%s0 + $0x90] sm:$0xff]
    %v90 = vld [vmem:[%s0 + $0x98] sm:$0xff]
    %v91 = vld [vmem:[%s0 + $0xa0] sm:$0xff]
    %v92 = vld [vmem:[%s0 + $0xa8] sm:$0xff]
    %v93 = vld [vmem:[%s0 + $0xb0] sm:$0xff]
    %v94 = vld [vmem:[%s0 + $0xb8] sm:$0xff]
    %v95 = vld [vmem:[%s0 + $0xc0] sm:$0xff]
    %v96 = vld [vmem:[%s0 + $0xc8] sm:$0xff]
    %v97 = vld [vmem:[%s0 + $0xd0] sm:$0xff]
    %v98 = vld [vmem:[%s0 + $0xd8] sm:$0xff]
    %v99 = vld [vmem:[%s0 + $0xe0] sm:$0xff]
    %v100 = vld [vmem:[%s0 + $0xe8] sm:$0xff]
    %v101 = vld [vmem:[%s0 + $0xf0] sm:$0xff]
    %v102 = vld [vmem:[%s0 + $0xf8] sm:$0xff]
    %v103 = vld [vmem:[%s0 + $0x100] sm:$0xff]
    %v104 = vld [vmem:[%s0 + $0x108] sm:$0xff]
    %v105 = vld [vmem:[%s0 + $0x110] sm:$0xff]
    %v106 = vld [vmem:[%s0 + $0x118] sm:$0xff]
    %v107 = vld [vmem:[%s0 + $0x120] sm:$0xff]
    %v108 = vld [vmem:[%s0 + $0x128] sm:$0xff]
    %v109 = vld [vmem:[%s0 + $0x130] sm:$0xff]
    %v110 = vld [vmem:[%s0 + $0x138] sm:$0xff]
    %v111 = vld [vmem:[%s0 + $0x140] sm:$0xff]
    %v112 = vld [vmem:[%s0 + $0x148] sm:$0xff]
    %v113 = vld [vmem:[%s0 + $0x150] sm:$0xff]
    %v114 = vld [vmem:[%s0 + $0x158] sm:$0xff]
    %v115 = vld [vmem:[%s0 + $0x160] sm:$0xff]
    %v116 = vld [vmem:[%s0 + $0x168] sm:$0xff]
    %v117 = vld [vmem:[%s0 + $0x170] sm:$0xff]
    %v118 = vld [vmem:[%s0 + $0x178] sm:$0xff]
    %v119 = vld [vmem:[%s0 + $0x180] sm:$0xff]
    %v120 = vld [vmem:[%s0 + $0x188] sm:$0xff]
    %v121 = vld [vmem:[%s0 + $0x190] sm:$0xff]
    %v122 = vld [vmem:[%s0 + $0x198] sm:$0xff]
    %v123 = vld [vmem:[%s0 + $0x1a0] sm:$0xff]
    %v124 = vld [vmem:[%s0 + $0x1a8] sm:$0xff]
    %v125 = vld [vmem:[%s0 + $0x1b0] sm:$0xff]
    %v126 = vld [vmem:[%s0 + $0x1b8] sm:$0xff]
    %v127 = vld [vmem:[%s1] sm:$0xf]
    %v128 = vld [vmem:[%s1 + $0x4] sm:$0xf]
    %v129 = vld [vmem:[%s1 + $0x8] sm:$0xf]
    %v130 = vld [vmem:[%s1 + $0xc] sm:$0xf]
    %v131 = vld [vmem:[%s1 + $0x10] sm:$0xf]
    %v132 = vld [vmem:[%s1 + $0x14] sm:$0xf]
    %v133 = vld [vmem:[%s1 + $0x18] sm:$0xf]
    %v134 = vld [vmem:[%s1 + $0x1c] sm:$0xf]
    %v135 = vld [vmem:[%s1 + $0x20] sm:$0xf]
    %v136 = vld [vmem:[%s1 + $0x24] sm:$0xf]
    %v137 = vld [vmem:[%s1 + $0x28] sm:$0xf]
    %v138 = vld [vmem:[%s1 + $0x2c] sm:$0xf]
    %v139 = vld [vmem:[%s1 + $0x30] sm:$0xf]
    %v140 = vld [vmem:[%s1 + $0x34] sm:$0xf]
    %v141 = vld [vmem:[%s1 + $0x38] sm:$0xf]
    %v142 = vld [vmem:[%s1 + $0x3c] sm:$0xf]
    %v143 = vld [vmem:[%s1 + $0x40] sm:$0xf]
    %v144 = vld [vmem:[%s1 + $0x44] sm:$0xf]
    %v145 = vld [vmem:[%s1 + $0x48] sm:$0xf]
    %v146 = vld [vmem:[%s1 + $0x4c] sm:$0xf]
    %v147 = vld [vmem:[%s1 + $0x50] sm:$0xf]
    %v148 = vld [vmem:[%s1 + $0x54] sm:$0xf]
    %v149 = vld [vmem:[%s1 + $0x58] sm:$0xf]
    %v150 = vld [vmem:[%s1 + $0x5c] sm:$0xf]
    %v151 = vld [vmem:[%s1 + $0x60] sm:$0xf]
    %v152 = vld [vmem:[%s1 + $0x64] sm:$0xf]
    %v153 = vld [vmem:[%s1 + $0x68] sm:$0xf]
    %v154 = vld [vmem:[%s1 + $0x6c] sm:$0xf]
    %v155 = vld [vmem:[%s1 + $0x70] sm:$0xf]
    %v156 = vld [vmem:[%s1 + $0x74] sm:$0xf]
    %v157 = vld [vmem:[%s1 + $0x78] sm:$0xf]
    %v158 = vld [vmem:[%s1 + $0x7c] sm:$0xf]
    %v159 = vld [vmem:[%s1 + $0x80] sm:$0xf]
    %v160 = vld [vmem:[%s1 + $0x84] sm:$0xf]
    %v161 = vld [vmem:[%s1 + $0x88] sm:$0xf]
    %v162 = vld [vmem:[%s1 + $0x8c] sm:$0xf]
    %v163 = vld [vmem:[%s1 + $0x90] sm:$0xf]
    %v164 = vld [vmem:[%s1 + $0x94] sm:$0xf]
    %v165 = vld [vmem:[%s1 + $0x98] sm:$0xf]
    %v166 = vld [vmem:[%s1 + $0x9c] sm:$0xf]
    %v167 = vld [vmem:[%s1 + $0xa0] sm:$0xf]
    %v168 = vld [vmem:[%s1 + $0xa4] sm:$0xf]
    %v169 = vld [vmem:[%s1 + $0xa8] sm:$0xf]
    %v170 = vld [vmem:[%s1 + $0xac] sm:$0xf]
    %v171 = vld [vmem:[%s1 + $0xb0] sm:$0xf]
    %v172 = vld [vmem:[%s1 + $0xb4] sm:$0xf]
    %v173 = vld [vmem:[%s1 + $0xb8] sm:$0xf]
    %v174 = vld [vmem:[%s1 + $0xbc] sm:$0xf]
    %v175 = vld [vmem:[%s1 + $0xc0] sm:$0xf]
    %v176 = vld [vmem:[%s1 + $0xc4] sm:$0xf]
    %v177 = vld [vmem:[%s1 + $0xc8] sm:$0xf]
    %v178 = vld [vmem:[%s1 + $0xcc] sm:$0xf]
    %v179 = vld [vmem:[%s1 + $0xd0] sm:$0xf]
    %v180 = vld [vmem:[%s1 + $0xd4] sm:$0xf]
    %v181 = vld [vmem:[%s1 + $0xd8] sm:$0xf]
    %v182 = vld [vmem:[%s1 + $0xdc] sm:$0xf]
    %v183 = vld [vmem:[%s1 + $0xe0] sm:$0xf]
    %v184 = vld [vmem:[%s1 + $0xe4] sm:$0xf]
    %v185 = vld [vmem:[%s1 + $0xe8] sm:$0xf]
    %v186 = vld [vmem:[%s1 + $0xec] sm:$0xf]
    %v187 = vld [vmem:[%s1 + $0xf0] sm:$0xf]
    %v188 = vld [vmem:[%s1 + $0xf4] sm:$0xf]
    %v189 = vld [vmem:[%s1 + $0xf8] sm:$0xf]
    %v190 = vld [vmem:[%s1 + $0xfc] sm:$0xf]
    %v191 = vld [vmem:[%s1 + $0x100] sm:$0xf]
    %v192 = vld [vmem:[%s1 + $0x104] sm:$0xf]
    %v193 = vld [vmem:[%s1 + $0x108] sm:$0xf]
    %v194 = vld [vmem:[%s1 + $0x10c] sm:$0xf]
    %v195 = vld [vmem:[%s1 + $0x110] sm:$0xf]
    %v196 = vld [vmem:[%s1 + $0x114] sm:$0xf]
    %v197 = vld [vmem:[%s1 + $0x118] sm:$0xf]
    %v198 = vld [vmem:[%s1 + $0x11c] sm:$0xf]
    %v199 = vld [vmem:[%s1 + $0x120] sm:$0xf]
    %v200 = vld [vmem:[%s1 + $0x124] sm:$0xf]
    %v201 = vld [vmem:[%s1 + $0x128] sm:$0xf]
    %v202 = vld [vmem:[%s1 + $0x12c] sm:$0xf]
    %v203 = vld [vmem:[%s1 + $0x130] sm:$0xf]
    %v204 = vld [vmem:[%s1 + $0x134] sm:$0xf]
    %v205 = vld [vmem:[%s1 + $0x138] sm:$0xf]
    %v206 = vld [vmem:[%s1 + $0x13c] sm:$0xf]
    %v207 = vld [vmem:[%s1 + $0x140] sm:$0xf]
    %v208 = vld [vmem:[%s1 + $0x144] sm:$0xf]
    %v209 = vld [vmem:[%s1 + $0x148] sm:$0xf]
    %v210 = vld [vmem:[%s1 + $0x14c] sm:$0xf]
    %v211 = vld [vmem:[%s1 + $0x150] sm:$0xf]
    %v212 = vld [vmem:[%s1 + $0x154] sm:$0xf]
    %v213 = vld [vmem:[%s1 + $0x158] sm:$0xf]
    %v214 = vld [vmem:[%s1 + $0x15c] sm:$0xf]
    %v215 = vld [vmem:[%s1 + $0x160] sm:$0xf]
    %v216 = vld [vmem:[%s1 + $0x164] sm:$0xf]
    %v217 = vld [vmem:[%s1 + $0x168] sm:$0xf]
    %v218 = vld [vmem:[%s1 + $0x16c] sm:$0xf]
    %v219 = vld [vmem:[%s1 + $0x170] sm:$0xf]
    %v220 = vld [vmem:[%s1 + $0x174] sm:$0xf]
    %v221 = vld [vmem:[%s1 + $0x178] sm:$0xf]
    %v222 = vld [vmem:[%s1 + $0x17c] sm:$0xf]
    %v223 = vld [vmem:[%s1 + $0x180] sm:$0xf]
    %v224 = vld [vmem:[%s1 + $0x184] sm:$0xf]
    %v225 = vld [vmem:[%s1 + $0x188] sm:$0xf]
    %v226 = vld [vmem:[%s1 + $0x18c] sm:$0xf]
    %v227 = vld [vmem:[%s1 + $0x190] sm:$0xf]
    %v228 = vld [vmem:[%s1 + $0x194] sm:$0xf]
    %v229 = vld [vmem:[%s1 + $0x198] sm:$0xf]
    %v230 = vld [vmem:[%s1 + $0x19c] sm:$0xf]
    %v231 = vld [vmem:[%s1 + $0x1a0] sm:$0xf]
    %v232 = vld [vmem:[%s1 + $0x1a4] sm:$0xf]
    %v233 = vld [vmem:[%s1 + $0x1a8] sm:$0xf]
    %v234 = vld [vmem:[%s1 + $0x1ac] sm:$0xf]
    %v235 = vld [vmem:[%s1 + $0x1b0] sm:$0xf]
    %v236 = vld [vmem:[%s1 + $0x1b4] sm:$0xf]
    %v237 = vld [vmem:[%s1 + $0x1b8] sm:$0xf]
    %v238 = vld [vmem:[%s1 + $0x1bc] sm:$0xf]
    %v239 = vld [vmem:[%s1 + $0x1c0] sm:$0xf]
    %v240 = vld [vmem:[%s1 + $0x1c4] sm:$0xf]
    %v241 = vld [vmem:[%s1 + $0x1c8] sm:$0xf]
    %v242 = vld [vmem:[%s1 + $0x1cc] sm:$0xf]
    %v243 = vld [vmem:[%s1 + $0x1d0] sm:$0xf]
    %v244 = vld [vmem:[%s1 + $0x1d4] sm:$0xf]
    %v245 = vld [vmem:[%s1 + $0x1d8] sm:$0xf]
    %v246 = vld [vmem:[%s1 + $0x1dc] sm:$0xf]
    %v247 = vld [vmem:[%s1 + $0x1e0] sm:$0xf]
    %v248 = vld [vmem:[%s1 + $0x1e4] sm:$0xf]
    %v249 = vld [vmem:[%s1 + $0x1e8] sm:$0xf]
    %v250 = vld [vmem:[%s1 + $0x1ec] sm:$0xf]
    %v251 = vld [vmem:[%s1 + $0x1f0] sm:$0xf]
    %v252 = vld [vmem:[%s1 + $0x1f4] sm:$0xf]
    %v253 = vld [vmem:[%s1 + $0x1f8] sm:$0xf]
    %v254 = vld [vmem:[%s1 + $0x1fc] sm:$0xf]
    %v255 = vld [vmem:[%s1 + $0x200] sm:$0xf]
    %v256 = vld [vmem:[%s1 + $0x204] sm:$0xf]
    %v257 = vld [vmem:[%s1 + $0x208] sm:$0xf]
    %v258 = vld [vmem:[%s1 + $0x20c] sm:$0xf]
    %v259 = vld [vmem:[%s1 + $0x210] sm:$0xf]
    %v260 = vld [vmem:[%s1 + $0x214] sm:$0xf]
    %v261 = vld [vmem:[%s1 + $0x218] sm:$0xf]
    %v262 = vld [vmem:[%s1 + $0x21c] sm:$0xf]
    %v263 = vld [vmem:[%s1 + $0x220] sm:$0xf]
    %v264 = vld [vmem:[%s1 + $0x224] sm:$0xf]
    %v265 = vld [vmem:[%s1 + $0x228] sm:$0xf]
    %v266 = vld [vmem:[%s1 + $0x22c] sm:$0xf]
    %v267 = vld [vmem:[%s1 + $0x230] sm:$0xf]
    %v268 = vld [vmem:[%s1 + $0x234] sm:$0xf]
    %v269 = vld [vmem:[%s1 + $0x238] sm:$0xf]
    %v270 = vld [vmem:[%s1 + $0x23c] sm:$0xf]
    %v271 = vld [vmem:[%s1 + $0x240] sm:$0xf]
    %v272 = vld [vmem:[%s1 + $0x244] sm:$0xf]
    %v273 = vld [vmem:[%s1 + $0x248] sm:$0xf]
    %v274 = vld [vmem:[%s1 + $0x24c] sm:$0xf]
    %v275 = vld [vmem:[%s1 + $0x250] sm:$0xf]
    %v276 = vld [vmem:[%s1 + $0x254] sm:$0xf]
    %v277 = vld [vmem:[%s1 + $0x258] sm:$0xf]
    %v278 = vld [vmem:[%s1 + $0x25c] sm:$0xf]
    %v279 = vld [vmem:[%s1 + $0x260] sm:$0xf]
    %v280 = vld [vmem:[%s1 + $0x264] sm:$0xf]
    %v281 = vld [vmem:[%s1 + $0x268] sm:$0xf]
    %v282 = vld [vmem:[%s1 + $0x26c] sm:$0xf]
    %v283 = vld [vmem:[%s1 + $0x270] sm:$0xf]
    %v284 = vld [vmem:[%s1 + $0x274] sm:$0xf]
    %v285 = vld [vmem:[%s1 + $0x278] sm:$0xf]
    %v286 = vld [vmem:[%s1 + $0x27c] sm:$0xf]
    %v287 = vld [vmem:[%s1 + $0x280] sm:$0xf]
    %v288 = vld [vmem:[%s1 + $0x284] sm:$0xf]
    %v289 = vld [vmem:[%s1 + $0x288] sm:$0xf]
    %v290 = vld [vmem:[%s1 + $0x28c] sm:$0xf]
    %v291 = vld [vmem:[%s1 + $0x290] sm:$0xf]
    %v292 = vld [vmem:[%s1 + $0x294] sm:$0xf]
    %v293 = vld [vmem:[%s1 + $0x298] sm:$0xf]
    %v294 = vld [vmem:[%s1 + $0x29c] sm:$0xf]
    %v295 = vld [vmem:[%s1 + $0x2a0] sm:$0xf]
    %v296 = vld [vmem:[%s1 + $0x2a4] sm:$0xf]
    %v297 = vld [vmem:[%s1 + $0x2a8] sm:$0xf]
    %v298 = vld [vmem:[%s1 + $0x2ac] sm:$0xf]
    %v299 = vld [vmem:[%s1 + $0x2b0] sm:$0xf]
    %v300 = vld [vmem:[%s1 + $0x2b4] sm:$0xf]
    %v301 = vld [vmem:[%s1 + $0x2b8] sm:$0xf]
    %v302 = vld [vmem:[%s1 + $0x2bc] sm:$0xf]
    %v303 = vld [vmem:[%s1 + $0x2c0] sm:$0xf]
    %v304 = vld [vmem:[%s1 + $0x2c4] sm:$0xf]
    %v305 = vld [vmem:[%s1 + $0x2c8] sm:$0xf]
    %v306 = vld [vmem:[%s1 + $0x2cc] sm:$0xf]
    %v307 = vld [vmem:[%s1 + $0x2d0] sm:$0xf]
    %v308 = vld [vmem:[%s1 + $0x2d4] sm:$0xf]
    %v309 = vld [vmem:[%s1 + $0x2d8] sm:$0xf]
    %v310 = vld [vmem:[%s1 + $0x2dc] sm:$0xf]
    %v311 = vld [vmem:[%s1 + $0x2e0] sm:$0xf]
    %v312 = vld [vmem:[%s1 + $0x2e4] sm:$0xf]
    %v313 = vld [vmem:[%s1 + $0x2e8] sm:$0xf]
    %v314 = vld [vmem:[%s1 + $0x2ec] sm:$0xf]
    %v315 = vld [vmem:[%s1 + $0x2f0] sm:$0xf]
    %v316 = vld [vmem:[%s1 + $0x2f4] sm:$0xf]
    %v317 = vld [vmem:[%s1 + $0x2f8] sm:$0xf]
    %v318 = vld [vmem:[%s1 + $0x2fc] sm:$0xf]
    %v319 = vld [vmem:[%s1 + $0x300] sm:$0xf]
    %v320 = vld [vmem:[%s1 + $0x304] sm:$0xf]
    %v321 = vld [vmem:[%s1 + $0x308] sm:$0xf]
    %v322 = vld [vmem:[%s1 + $0x30c] sm:$0xf]
    %v323 = vld [vmem:[%s1 + $0x310] sm:$0xf]
    %v324 = vld [vmem:[%s1 + $0x314] sm:$0xf]
    %v325 = vld [vmem:[%s1 + $0x318] sm:$0xf]
    %v326 = vld [vmem:[%s1 + $0x31c] sm:$0xf]
    %v327 = vld [vmem:[%s1 + $0x320] sm:$0xf]
    %v328 = vld [vmem:[%s1 + $0x324] sm:$0xf]
    %v329 = vld [vmem:[%s1 + $0x328] sm:$0xf]
    %v330 = vld [vmem:[%s1 + $0x32c] sm:$0xf]
    %v331 = vld [vmem:[%s1 + $0x330] sm:$0xf]
    %v332 = vld [vmem:[%s1 + $0x334] sm:$0xf]
    %v333 = vld [vmem:[%s1 + $0x338] sm:$0xf]
    %v334 = vld [vmem:[%s1 + $0x33c] sm:$0xf]
    %v335 = vld [vmem:[%s1 + $0x340] sm:$0xf]
    %v336 = vld [vmem:[%s1 + $0x344] sm:$0xf]
    %v337 = vld [vmem:[%s1 + $0x348] sm:$0xf]
    %v338 = vld [vmem:[%s1 + $0x34c] sm:$0xf]
    %v339 = vld [vmem:[%s1 + $0x350] sm:$0xf]
    %v340 = vld [vmem:[%s1 + $0x354] sm:$0xf]
    %v341 = vld [vmem:[%s1 + $0x358] sm:$0xf]
    %v342 = vld [vmem:[%s1 + $0x35c] sm:$0xf]
    %v343 = vld [vmem:[%s1 + $0x360] sm:$0xf]
    %v344 = vld [vmem:[%s1 + $0x364] sm:$0xf]
    %v345 = vld [vmem:[%s1 + $0x368] sm:$0xf]
    %v346 = vld [vmem:[%s1 + $0x36c] sm:$0xf]
    %v347 = vld [vmem:[%s1 + $0x370] sm:$0xf]
    %v348 = vld [vmem:[%s1 + $0x374] sm:$0xf]
    %v349 = vld [vmem:[%s1 + $0x378] sm:$0xf]
    %v350 = vld [vmem:[%s1 + $0x37c] sm:$0xf]
    %v351 = vld [vmem:[%s3] sm:$0x1]
    %v353 = vlaneseq
    %v354 = vshrl.u32 %v353, 7
    %v355 = vsub.s32 0, %v354
    %v356 = vrot.slane %v351, %v355
    %v414 = vunpack.c.l.b16 %v71
    %v415 = vunpack.c.h.b16 %v71
    %v416 = vunpack.c.l.b16 %v72
    %v417 = vunpack.c.h.b16 %v72
    %v418 = vunpack.c.l.b16 %v73
    %v419 = vunpack.c.h.b16 %v73
    %v420 = vunpack.c.l.b16 %v74
    %v421 = vunpack.c.h.b16 %v74
    %v422 = vunpack.c.l.b16 %v75
    %v423 = vunpack.c.h.b16 %v75
    %v424 = vunpack.c.l.b16 %v76
    %v425 = vunpack.c.h.b16 %v76
    %v426 = vunpack.c.l.b16 %v77
    %v427 = vunpack.c.h.b16 %v77
    %v428 = vunpack.c.l.b16 %v78
    %v429 = vunpack.c.h.b16 %v78
    %v430 = vunpack.c.l.b16 %v79
    %v431 = vunpack.c.h.b16 %v79
    %v432 = vunpack.c.l.b16 %v80
    %v433 = vunpack.c.h.b16 %v80
    %v434 = vunpack.c.l.b16 %v81
    %v435 = vunpack.c.h.b16 %v81
    %v436 = vunpack.c.l.b16 %v82
    %v437 = vunpack.c.h.b16 %v82
    %v438 = vunpack.c.l.b16 %v83
    %v439 = vunpack.c.h.b16 %v83
    %v440 = vunpack.c.l.b16 %v84
    %v441 = vunpack.c.h.b16 %v84
    %v442 = vunpack.c.l.b16 %v85
    %v443 = vunpack.c.h.b16 %v85
    %v444 = vunpack.c.l.b16 %v86
    %v445 = vunpack.c.h.b16 %v86
    %v446 = vunpack.c.l.b16 %v87
    %v447 = vunpack.c.h.b16 %v87
    %v448 = vunpack.c.l.b16 %v88
    %v449 = vunpack.c.h.b16 %v88
    %v450 = vunpack.c.l.b16 %v89
    %v451 = vunpack.c.h.b16 %v89
    %v452 = vunpack.c.l.b16 %v90
    %v453 = vunpack.c.h.b16 %v90
    %v454 = vunpack.c.l.b16 %v91
    %v455 = vunpack.c.h.b16 %v91
    %v456 = vunpack.c.l.b16 %v92
    %v457 = vunpack.c.h.b16 %v92
    %v458 = vunpack.c.l.b16 %v93
    %v459 = vunpack.c.h.b16 %v93
    %v460 = vunpack.c.l.b16 %v94
    %v461 = vunpack.c.h.b16 %v94
    %v462 = vunpack.c.l.b16 %v95
    %v463 = vunpack.c.h.b16 %v95
    %v464 = vunpack.c.l.b16 %v96
    %v465 = vunpack.c.h.b16 %v96
    %v466 = vunpack.c.l.b16 %v97
    %v467 = vunpack.c.h.b16 %v97
    %v468 = vunpack.c.l.b16 %v98
    %v469 = vunpack.c.h.b16 %v98
    %v470 = vunpack.c.l.b16 %v99
    %v471 = vunpack.c.h.b16 %v99
    %v472 = vunpack.c.l.b16 %v100
    %v473 = vunpack.c.h.b16 %v100
    %v474 = vunpack.c.l.b16 %v101
    %v475 = vunpack.c.h.b16 %v101
    %v476 = vunpack.c.l.b16 %v102
    %v477 = vunpack.c.h.b16 %v102
    %v478 = vunpack.c.l.b16 %v103
    %v479 = vunpack.c.h.b16 %v103
    %v480 = vunpack.c.l.b16 %v104
    %v481 = vunpack.c.h.b16 %v104
    %v482 = vunpack.c.l.b16 %v105
    %v483 = vunpack.c.h.b16 %v105
    %v484 = vunpack.c.l.b16 %v106
    %v485 = vunpack.c.h.b16 %v106
    %v486 = vunpack.c.l.b16 %v107
    %v487 = vunpack.c.h.b16 %v107
    %v488 = vunpack.c.l.b16 %v108
    %v489 = vunpack.c.h.b16 %v108
    %v490 = vunpack.c.l.b16 %v109
    %v491 = vunpack.c.h.b16 %v109
    %v492 = vunpack.c.l.b16 %v110
    %v493 = vunpack.c.h.b16 %v110
    %v494 = vunpack.c.l.b16 %v111
    %v495 = vunpack.c.h.b16 %v111
    %v496 = vunpack.c.l.b16 %v112
    %v497 = vunpack.c.h.b16 %v112
    %v498 = vunpack.c.l.b16 %v113
    %v499 = vunpack.c.h.b16 %v113
    %v500 = vunpack.c.l.b16 %v114
    %v501 = vunpack.c.h.b16 %v114
    %v502 = vunpack.c.l.b16 %v115
    %v503 = vunpack.c.h.b16 %v115
    %v504 = vunpack.c.l.b16 %v116
    %v505 = vunpack.c.h.b16 %v116
    %v506 = vunpack.c.l.b16 %v117
    %v507 = vunpack.c.h.b16 %v117
    %v508 = vunpack.c.l.b16 %v118
    %v509 = vunpack.c.h.b16 %v118
    %v510 = vunpack.c.l.b16 %v119
    %v511 = vunpack.c.h.b16 %v119
    %v512 = vunpack.c.l.b16 %v120
    %v513 = vunpack.c.h.b16 %v120
    %v514 = vunpack.c.l.b16 %v121
    %v515 = vunpack.c.h.b16 %v121
    %v516 = vunpack.c.l.b16 %v122
    %v517 = vunpack.c.h.b16 %v122
    %v518 = vunpack.c.l.b16 %v123
    %v519 = vunpack.c.h.b16 %v123
    %v520 = vunpack.c.l.b16 %v124
    %v521 = vunpack.c.h.b16 %v124
    %v522 = vunpack.c.l.b16 %v125
    %v523 = vunpack.c.h.b16 %v125
    %v524 = vunpack.c.l.b16 %v126
    %v525 = vunpack.c.h.b16 %v126
    %v526 = vpack.c.b16 %v428, %v414
    %v527 = vpack.c.b16 %v429, %v415
    %v528 = vpack.c.b16 %v430, %v416
    %v529 = vpack.c.b16 %v431, %v417
    %v530 = vpack.c.b16 %v432, %v418
    %v531 = vpack.c.b16 %v433, %v419
    %v532 = vpack.c.b16 %v434, %v420
    %v533 = vpack.c.b16 %v435, %v421
    %v534 = vpack.c.b16 %v436, %v422
    %v535 = vpack.c.b16 %v437, %v423
    %v536 = vpack.c.b16 %v438, %v424
    %v537 = vpack.c.b16 %v439, %v425
    %v538 = vpack.c.b16 %v440, %v426
    %v539 = vpack.c.b16 %v441, %v427
    %v540 = vpack.c.b16 %v456, %v442
    %v541 = vpack.c.b16 %v457, %v443
    %v542 = vpack.c.b16 %v458, %v444
    %v543 = vpack.c.b16 %v459, %v445
    %v544 = vpack.c.b16 %v460, %v446
    %v545 = vpack.c.b16 %v461, %v447
    %v546 = vpack.c.b16 %v462, %v448
    %v547 = vpack.c.b16 %v463, %v449
    %v548 = vpack.c.b16 %v464, %v450
    %v549 = vpack.c.b16 %v465, %v451
    %v550 = vpack.c.b16 %v466, %v452
    %v551 = vpack.c.b16 %v467, %v453
    %v552 = vpack.c.b16 %v468, %v454
    %v553 = vpack.c.b16 %v469, %v455
    %v554 = vpack.c.b16 %v484, %v470
    %v555 = vpack.c.b16 %v485, %v471
    %v556 = vpack.c.b16 %v486, %v472
    %v557 = vpack.c.b16 %v487, %v473
    %v558 = vpack.c.b16 %v488, %v474
    %v559 = vpack.c.b16 %v489, %v475
    %v560 = vpack.c.b16 %v490, %v476
    %v561 = vpack.c.b16 %v491, %v477
    %v562 = vpack.c.b16 %v492, %v478
    %v563 = vpack.c.b16 %v493, %v479
    %v564 = vpack.c.b16 %v494, %v480
    %v565 = vpack.c.b16 %v495, %v481
    %v566 = vpack.c.b16 %v496, %v482
    %v567 = vpack.c.b16 %v497, %v483
    %v568 = vpack.c.b16 %v512, %v498
    %v569 = vpack.c.b16 %v513, %v499
    %v570 = vpack.c.b16 %v514, %v500
    %v571 = vpack.c.b16 %v515, %v501
    %v572 = vpack.c.b16 %v516, %v502
    %v573 = vpack.c.b16 %v517, %v503
    %v574 = vpack.c.b16 %v518, %v504
    %v575 = vpack.c.b16 %v519, %v505
    %v576 = vpack.c.b16 %v520, %v506
    %v577 = vpack.c.b16 %v521, %v507
    %v578 = vpack.c.b16 %v522, %v508
    %v579 = vpack.c.b16 %v523, %v509
    %v580 = vpack.c.b16 %v524, %v510
    %v581 = vpack.c.b16 %v525, %v511
    %v862 = vunpack.c.l.b16 %v127
    %v863 = vunpack.c.l.b16 %v128
    %v864 = vunpack.c.l.b16 %v129
    %v865 = vunpack.c.l.b16 %v130
    %v866 = vunpack.c.l.b16 %v131
    %v867 = vunpack.c.l.b16 %v132
    %v868 = vunpack.c.l.b16 %v133
    %v869 = vunpack.c.l.b16 %v134
    %v870 = vunpack.c.l.b16 %v135
    %v871 = vunpack.c.l.b16 %v136
    %v872 = vunpack.c.l.b16 %v137
    %v873 = vunpack.c.l.b16 %v138
    %v874 = vunpack.c.l.b16 %v139
    %v875 = vunpack.c.l.b16 %v140
    %v876 = vunpack.c.l.b16 %v141
    %v877 = vunpack.c.l.b16 %v142
    %v878 = vunpack.c.l.b16 %v143
    %v879 = vunpack.c.l.b16 %v144
    %v880 = vunpack.c.l.b16 %v145
    %v881 = vunpack.c.l.b16 %v146
    %v882 = vunpack.c.l.b16 %v147
    %v883 = vunpack.c.l.b16 %v148
    %v884 = vunpack.c.l.b16 %v149
    %v885 = vunpack.c.l.b16 %v150
    %v886 = vunpack.c.l.b16 %v151
    %v887 = vunpack.c.l.b16 %v152
    %v888 = vunpack.c.l.b16 %v153
    %v889 = vunpack.c.l.b16 %v154
    %v890 = vunpack.c.l.b16 %v155
    %v891 = vunpack.c.l.b16 %v156
    %v892 = vunpack.c.l.b16 %v157
    %v893 = vunpack.c.l.b16 %v158
    %v894 = vunpack.c.l.b16 %v159
    %v895 = vunpack.c.l.b16 %v160
    %v896 = vunpack.c.l.b16 %v161
    %v897 = vunpack.c.l.b16 %v162
    %v898 = vunpack.c.l.b16 %v163
    %v899 = vunpack.c.l.b16 %v164
    %v900 = vunpack.c.l.b16 %v165
    %v901 = vunpack.c.l.b16 %v166
    %v902 = vunpack.c.l.b16 %v167
    %v903 = vunpack.c.l.b16 %v168
    %v904 = vunpack.c.l.b16 %v169
    %v905 = vunpack.c.l.b16 %v170
    %v906 = vunpack.c.l.b16 %v171
    %v907 = vunpack.c.l.b16 %v172
    %v908 = vunpack.c.l.b16 %v173
    %v909 = vunpack.c.l.b16 %v174
    %v910 = vunpack.c.l.b16 %v175
    %v911 = vunpack.c.l.b16 %v176
    %v912 = vunpack.c.l.b16 %v177
    %v913 = vunpack.c.l.b16 %v178
    %v914 = vunpack.c.l.b16 %v179
    %v915 = vunpack.c.l.b16 %v180
    %v916 = vunpack.c.l.b16 %v181
    %v917 = vunpack.c.l.b16 %v182
    %v918 = vunpack.c.l.b16 %v183
    %v919 = vunpack.c.l.b16 %v184
    %v920 = vunpack.c.l.b16 %v185
    %v921 = vunpack.c.l.b16 %v186
    %v922 = vunpack.c.l.b16 %v187
    %v923 = vunpack.c.l.b16 %v188
    %v924 = vunpack.c.l.b16 %v189
    %v925 = vunpack.c.l.b16 %v190
    %v926 = vunpack.c.l.b16 %v191
    %v927 = vunpack.c.l.b16 %v192
    %v928 = vunpack.c.l.b16 %v193
    %v929 = vunpack.c.l.b16 %v194
    %v930 = vunpack.c.l.b16 %v195
    %v931 = vunpack.c.l.b16 %v196
    %v932 = vunpack.c.l.b16 %v197
    %v933 = vunpack.c.l.b16 %v198
    %v934 = vunpack.c.l.b16 %v199
    %v935 = vunpack.c.l.b16 %v200
    %v936 = vunpack.c.l.b16 %v201
    %v937 = vunpack.c.l.b16 %v202
    %v938 = vunpack.c.l.b16 %v203
    %v939 = vunpack.c.l.b16 %v204
    %v940 = vunpack.c.l.b16 %v205
    %v941 = vunpack.c.l.b16 %v206
    %v942 = vunpack.c.l.b16 %v207
    %v943 = vunpack.c.l.b16 %v208
    %v944 = vunpack.c.l.b16 %v209
    %v945 = vunpack.c.l.b16 %v210
    %v946 = vunpack.c.l.b16 %v211
    %v947 = vunpack.c.l.b16 %v212
    %v948 = vunpack.c.l.b16 %v213
    %v949 = vunpack.c.l.b16 %v214
    %v950 = vunpack.c.l.b16 %v215
    %v951 = vunpack.c.l.b16 %v216
    %v952 = vunpack.c.l.b16 %v217
    %v953 = vunpack.c.l.b16 %v218
    %v954 = vunpack.c.l.b16 %v219
    %v955 = vunpack.c.l.b16 %v220
    %v956 = vunpack.c.l.b16 %v221
    %v957 = vunpack.c.l.b16 %v222
    %v958 = vunpack.c.l.b16 %v223
    %v959 = vunpack.c.l.b16 %v224
    %v960 = vunpack.c.l.b16 %v225
    %v961 = vunpack.c.l.b16 %v226
    %v962 = vunpack.c.l.b16 %v227
    %v963 = vunpack.c.l.b16 %v228
    %v964 = vunpack.c.l.b16 %v229
    %v965 = vunpack.c.l.b16 %v230
    %v966 = vunpack.c.l.b16 %v231
    %v967 = vunpack.c.l.b16 %v232
    %v968 = vunpack.c.l.b16 %v233
    %v969 = vunpack.c.l.b16 %v234
    %v970 = vunpack.c.l.b16 %v235
    %v971 = vunpack.c.l.b16 %v236
    %v972 = vunpack.c.l.b16 %v237
    %v973 = vunpack.c.l.b16 %v238
    %v974 = vunpack.c.l.b16 %v239
    %v975 = vunpack.c.l.b16 %v240
    %v976 = vunpack.c.l.b16 %v241
    %v977 = vunpack.c.l.b16 %v242
    %v978 = vunpack.c.l.b16 %v243
    %v979 = vunpack.c.l.b16 %v244
    %v980 = vunpack.c.l.b16 %v245
    %v981 = vunpack.c.l.b16 %v246
    %v982 = vunpack.c.l.b16 %v247
    %v983 = vunpack.c.l.b16 %v248
    %v984 = vunpack.c.l.b16 %v249
    %v985 = vunpack.c.l.b16 %v250
    %v986 = vunpack.c.l.b16 %v251
    %v987 = vunpack.c.l.b16 %v252
    %v988 = vunpack.c.l.b16 %v253
    %v989 = vunpack.c.l.b16 %v254
    %v990 = vunpack.c.l.b16 %v255
    %v991 = vunpack.c.l.b16 %v256
    %v992 = vunpack.c.l.b16 %v257
    %v993 = vunpack.c.l.b16 %v258
    %v994 = vunpack.c.l.b16 %v259
    %v995 = vunpack.c.l.b16 %v260
    %v996 = vunpack.c.l.b16 %v261
    %v997 = vunpack.c.l.b16 %v262
    %v998 = vunpack.c.l.b16 %v263
    %v999 = vunpack.c.l.b16 %v264
    %v1000 = vunpack.c.l.b16 %v265
    %v1001 = vunpack.c.l.b16 %v266
    %v1002 = vunpack.c.l.b16 %v267
    %v1003 = vunpack.c.l.b16 %v268
    %v1004 = vunpack.c.l.b16 %v269
    %v1005 = vunpack.c.l.b16 %v270
    %v1006 = vunpack.c.l.b16 %v271
    %v1007 = vunpack.c.l.b16 %v272
    %v1008 = vunpack.c.l.b16 %v273
    %v1009 = vunpack.c.l.b16 %v274
    %v1010 = vunpack.c.l.b16 %v275
    %v1011 = vunpack.c.l.b16 %v276
    %v1012 = vunpack.c.l.b16 %v277
    %v1013 = vunpack.c.l.b16 %v278
    %v1014 = vunpack.c.l.b16 %v279
    %v1015 = vunpack.c.l.b16 %v280
    %v1016 = vunpack.c.l.b16 %v281
    %v1017 = vunpack.c.l.b16 %v282
    %v1018 = vunpack.c.l.b16 %v283
    %v1019 = vunpack.c.l.b16 %v284
    %v1020 = vunpack.c.l.b16 %v285
    %v1021 = vunpack.c.l.b16 %v286
    %v1022 = vunpack.c.l.b16 %v287
    %v1023 = vunpack.c.l.b16 %v288
    %v1024 = vunpack.c.l.b16 %v289
    %v1025 = vunpack.c.l.b16 %v290
    %v1026 = vunpack.c.l.b16 %v291
    %v1027 = vunpack.c.l.b16 %v292
    %v1028 = vunpack.c.l.b16 %v293
    %v1029 = vunpack.c.l.b16 %v294
    %v1030 = vunpack.c.l.b16 %v295
    %v1031 = vunpack.c.l.b16 %v296
    %v1032 = vunpack.c.l.b16 %v297
    %v1033 = vunpack.c.l.b16 %v298
    %v1034 = vunpack.c.l.b16 %v299
    %v1035 = vunpack.c.l.b16 %v300
    %v1036 = vunpack.c.l.b16 %v301
    %v1037 = vunpack.c.l.b16 %v302
    %v1038 = vunpack.c.l.b16 %v303
    %v1039 = vunpack.c.l.b16 %v304
    %v1040 = vunpack.c.l.b16 %v305
    %v1041 = vunpack.c.l.b16 %v306
    %v1042 = vunpack.c.l.b16 %v307
    %v1043 = vunpack.c.l.b16 %v308
    %v1044 = vunpack.c.l.b16 %v309
    %v1045 = vunpack.c.l.b16 %v310
    %v1046 = vunpack.c.l.b16 %v311
    %v1047 = vunpack.c.l.b16 %v312
    %v1048 = vunpack.c.l.b16 %v313
    %v1049 = vunpack.c.l.b16 %v314
    %v1050 = vunpack.c.l.b16 %v315
    %v1051 = vunpack.c.l.b16 %v316
    %v1052 = vunpack.c.l.b16 %v317
    %v1053 = vunpack.c.l.b16 %v318
    %v1054 = vunpack.c.l.b16 %v319
    %v1055 = vunpack.c.l.b16 %v320
    %v1056 = vunpack.c.l.b16 %v321
    %v1057 = vunpack.c.l.b16 %v322
    %v1058 = vunpack.c.l.b16 %v323
    %v1059 = vunpack.c.l.b16 %v324
    %v1060 = vunpack.c.l.b16 %v325
    %v1061 = vunpack.c.l.b16 %v326
    %v1062 = vunpack.c.l.b16 %v327
    %v1063 = vunpack.c.l.b16 %v328
    %v1064 = vunpack.c.l.b16 %v329
    %v1065 = vunpack.c.l.b16 %v330
    %v1066 = vunpack.c.l.b16 %v331
    %v1067 = vunpack.c.l.b16 %v332
    %v1068 = vunpack.c.l.b16 %v333
    %v1069 = vunpack.c.l.b16 %v334
    %v1070 = vunpack.c.l.b16 %v335
    %v1071 = vunpack.c.l.b16 %v336
    %v1072 = vunpack.c.l.b16 %v337
    %v1073 = vunpack.c.l.b16 %v338
    %v1074 = vunpack.c.l.b16 %v339
    %v1075 = vunpack.c.l.b16 %v340
    %v1076 = vunpack.c.l.b16 %v341
    %v1077 = vunpack.c.l.b16 %v342
    %v1078 = vunpack.c.l.b16 %v343
    %v1079 = vunpack.c.l.b16 %v344
    %v1080 = vunpack.c.l.b16 %v345
    %v1081 = vunpack.c.l.b16 %v346
    %v1082 = vunpack.c.l.b16 %v347
    %v1083 = vunpack.c.l.b16 %v348
    %v1084 = vunpack.c.l.b16 %v349
    %v1085 = vunpack.c.l.b16 %v350
    %v1086 = vpack.c.b16 %v863, %v862
    %v1087 = vpack.c.b16 %v865, %v864
    %v1088 = vpack.c.b16 %v867, %v866
    %v1089 = vpack.c.b16 %v869, %v868
    %v1090 = vpack.c.b16 %v871, %v870
    %v1091 = vpack.c.b16 %v873, %v872
    %v1092 = vpack.c.b16 %v875, %v874
    %v1093 = vpack.c.b16 %v877, %v876
    %v1094 = vpack.c.b16 %v879, %v878
    %v1095 = vpack.c.b16 %v881, %v880
    %v1096 = vpack.c.b16 %v883, %v882
    %v1097 = vpack.c.b16 %v885, %v884
    %v1098 = vpack.c.b16 %v887, %v886
    %v1099 = vpack.c.b16 %v889, %v888
    %v1100 = vpack.c.b16 %v891, %v890
    %v1101 = vpack.c.b16 %v893, %v892
    %v1102 = vpack.c.b16 %v895, %v894
    %v1103 = vpack.c.b16 %v897, %v896
    %v1104 = vpack.c.b16 %v899, %v898
    %v1105 = vpack.c.b16 %v901, %v900
    %v1106 = vpack.c.b16 %v903, %v902
    %v1107 = vpack.c.b16 %v905, %v904
    %v1108 = vpack.c.b16 %v907, %v906
    %v1109 = vpack.c.b16 %v909, %v908
    %v1110 = vpack.c.b16 %v911, %v910
    %v1111 = vpack.c.b16 %v913, %v912
    %v1112 = vpack.c.b16 %v915, %v914
    %v1113 = vpack.c.b16 %v917, %v916
    %v1114 = vpack.c.b16 %v919, %v918
    %v1115 = vpack.c.b16 %v921, %v920
    %v1116 = vpack.c.b16 %v923, %v922
    %v1117 = vpack.c.b16 %v925, %v924
    %v1118 = vpack.c.b16 %v927, %v926
    %v1119 = vpack.c.b16 %v929, %v928
    %v1120 = vpack.c.b16 %v931, %v930
    %v1121 = vpack.c.b16 %v933, %v932
    %v1122 = vpack.c.b16 %v935, %v934
    %v1123 = vpack.c.b16 %v937, %v936
    %v1124 = vpack.c.b16 %v939, %v938
    %v1125 = vpack.c.b16 %v941, %v940
    %v1126 = vpack.c.b16 %v943, %v942
    %v1127 = vpack.c.b16 %v945, %v944
    %v1128 = vpack.c.b16 %v947, %v946
    %v1129 = vpack.c.b16 %v949, %v948
    %v1130 = vpack.c.b16 %v951, %v950
    %v1131 = vpack.c.b16 %v953, %v952
    %v1132 = vpack.c.b16 %v955, %v954
    %v1133 = vpack.c.b16 %v957, %v956
    %v1134 = vpack.c.b16 %v959, %v958
    %v1135 = vpack.c.b16 %v961, %v960
    %v1136 = vpack.c.b16 %v963, %v962
    %v1137 = vpack.c.b16 %v965, %v964
    %v1138 = vpack.c.b16 %v967, %v966
    %v1139 = vpack.c.b16 %v969, %v968
    %v1140 = vpack.c.b16 %v971, %v970
    %v1141 = vpack.c.b16 %v973, %v972
    %v1142 = vpack.c.b16 %v975, %v974
    %v1143 = vpack.c.b16 %v977, %v976
    %v1144 = vpack.c.b16 %v979, %v978
    %v1145 = vpack.c.b16 %v981, %v980
    %v1146 = vpack.c.b16 %v983, %v982
    %v1147 = vpack.c.b16 %v985, %v984
    %v1148 = vpack.c.b16 %v987, %v986
    %v1149 = vpack.c.b16 %v989, %v988
    %v1150 = vpack.c.b16 %v991, %v990
    %v1151 = vpack.c.b16 %v993, %v992
    %v1152 = vpack.c.b16 %v995, %v994
    %v1153 = vpack.c.b16 %v997, %v996
    %v1154 = vpack.c.b16 %v999, %v998
    %v1155 = vpack.c.b16 %v1001, %v1000
    %v1156 = vpack.c.b16 %v1003, %v1002
    %v1157 = vpack.c.b16 %v1005, %v1004
    %v1158 = vpack.c.b16 %v1007, %v1006
    %v1159 = vpack.c.b16 %v1009, %v1008
    %v1160 = vpack.c.b16 %v1011, %v1010
    %v1161 = vpack.c.b16 %v1013, %v1012
    %v1162 = vpack.c.b16 %v1015, %v1014
    %v1163 = vpack.c.b16 %v1017, %v1016
    %v1164 = vpack.c.b16 %v1019, %v1018
    %v1165 = vpack.c.b16 %v1021, %v1020
    %v1166 = vpack.c.b16 %v1023, %v1022
    %v1167 = vpack.c.b16 %v1025, %v1024
    %v1168 = vpack.c.b16 %v1027, %v1026
    %v1169 = vpack.c.b16 %v1029, %v1028
    %v1170 = vpack.c.b16 %v1031, %v1030
    %v1171 = vpack.c.b16 %v1033, %v1032
    %v1172 = vpack.c.b16 %v1035, %v1034
    %v1173 = vpack.c.b16 %v1037, %v1036
    %v1174 = vpack.c.b16 %v1039, %v1038
    %v1175 = vpack.c.b16 %v1041, %v1040
    %v1176 = vpack.c.b16 %v1043, %v1042
    %v1177 = vpack.c.b16 %v1045, %v1044
    %v1178 = vpack.c.b16 %v1047, %v1046
    %v1179 = vpack.c.b16 %v1049, %v1048
    %v1180 = vpack.c.b16 %v1051, %v1050
    %v1181 = vpack.c.b16 %v1053, %v1052
    %v1182 = vpack.c.b16 %v1055, %v1054
    %v1183 = vpack.c.b16 %v1057, %v1056
    %v1184 = vpack.c.b16 %v1059, %v1058
    %v1185 = vpack.c.b16 %v1061, %v1060
    %v1186 = vpack.c.b16 %v1063, %v1062
    %v1187 = vpack.c.b16 %v1065, %v1064
    %v1188 = vpack.c.b16 %v1067, %v1066
    %v1189 = vpack.c.b16 %v1069, %v1068
    %v1190 = vpack.c.b16 %v1071, %v1070
    %v1191 = vpack.c.b16 %v1073, %v1072
    %v1192 = vpack.c.b16 %v1075, %v1074
    %v1193 = vpack.c.b16 %v1077, %v1076
    %v1194 = vpack.c.b16 %v1079, %v1078
    %v1195 = vpack.c.b16 %v1081, %v1080
    %v1196 = vpack.c.b16 %v1083, %v1082
    %v1197 = vpack.c.b16 %v1085, %v1084
    %1310 = vmatprep.subr.bf16.mxu0 0
    %1311 = vmatpush1.bf16.msra.mxu0 %v1093
    %1312 = vmatprep.subr.bf16.mxu0 0
    %1313 = vmatpush1.bf16.msra.mxu0 %v1092
    %1314 = vmatprep.subr.bf16.mxu0 0
    %1315 = vmatpush1.bf16.msra.mxu0 %v1091
    %1316 = vmatprep.subr.bf16.mxu0 0
    %1317 = vmatpush1.bf16.msra.mxu0 %v1090
    %1318 = vmatprep.subr.bf16.mxu0 0
    %1319 = vmatpush1.bf16.msra.mxu0 %v1089
    %1320 = vmatprep.subr.bf16.mxu0 0
    %1321 = vmatpush1.bf16.msra.mxu0 %v1088
    %1322 = vmatprep.subr.bf16.mxu0 0
    %1323 = vmatpush1.bf16.msra.mxu0 %v1087
    %1324 = vmatprep.subr.bf16.mxu0 0
    %1325 = vmatpush1.bf16.msra.mxu0 %v1086
    %1326 = vmatprep.subr.bf16.mxu0 0
    %1327 = vmatpush2.bf16.msra.mxu0 %v1101
    %1328 = vmatprep.subr.bf16.mxu0 0
    %1329 = vmatpush2.bf16.msra.mxu0 %v1100
    %1330 = vmatprep.subr.bf16.mxu0 0
    %1331 = vmatpush2.bf16.msra.mxu0 %v1099
    %1332 = vmatprep.subr.bf16.mxu0 0
    %1333 = vmatpush2.bf16.msra.mxu0 %v1098
    %1334 = vmatprep.subr.bf16.mxu0 0
    %1335 = vmatpush2.bf16.msra.mxu0 %v1097
    %1336 = vmatprep.subr.bf16.mxu0 0
    %1337 = vmatpush2.bf16.msra.mxu0 %v1096
    %1338 = vmatprep.subr.bf16.mxu0 0
    %1339 = vmatpush2.bf16.msra.mxu0 %v1095
    %1340 = vmatprep.subr.bf16.mxu0 0
    %1341 = vmatpush2.bf16.msra.mxu0 %v1094
    %1342 = vmatprep.mubr.bf16.mxu0 %v527
    %1343 = vmatmul.mubr.bf16.gmra.mxu0 %v526
    %v1344 = vpop.f32.mrf.mxu0
    %v1345 = vadd.f32 %v356, %v1344
    %v1346 = vpop.f32.mrf.mxu0
    %v1347 = vpop.f32.mrf.mxu0
    %v1348 = vadd.f32 %v356, %v1347
    %v1349 = vpop.f32.mrf.mxu0
    %1350 = vmatprep.mubr.bf16.mxu0 %v541
    %1351 = vmatmul.mubr.bf16.gmra.mxu0 %v540
    %v1352 = vpop.f32.mrf.mxu0
    %v1353 = vadd.f32 %v356, %v1352
    %v1354 = vpop.f32.mrf.mxu0
    %v1355 = vpop.f32.mrf.mxu0
    %v1356 = vadd.f32 %v356, %v1355
    %v1357 = vpop.f32.mrf.mxu0
    %1358 = vmatprep.mubr.bf16.mxu0 %v555
    %1359 = vmatmul.mubr.bf16.gmra.mxu0 %v554
    %v1360 = vpop.f32.mrf.mxu0
    %v1361 = vadd.f32 %v356, %v1360
    %v1362 = vpop.f32.mrf.mxu0
    %v1363 = vpop.f32.mrf.mxu0
    %v1364 = vadd.f32 %v356, %v1363
    %v1365 = vpop.f32.mrf.mxu0
    %1366 = vmatprep.mubr.bf16.mxu0 %v569
    %1367 = vmatmul.mubr.bf16.gmra.mxu0 %v568
    %v1368 = vpop.f32.mrf.mxu0
    %v1369 = vadd.f32 %v356, %v1368
    %v1370 = vpop.f32.mrf.mxu0
    %v1371 = vpop.f32.mrf.mxu0
    %v1372 = vadd.f32 %v356, %v1371
    %v1373 = vpop.f32.mrf.mxu0
    %1374 = vdwg.mxu0
    %1375 = vmatprep.subr.bf16.mxu0 0
    %1376 = vmatpush1.bf16.msra.mxu0 %v1109
    %1377 = vmatprep.subr.bf16.mxu0 0
    %1378 = vmatpush1.bf16.msra.mxu0 %v1108
    %1379 = vmatprep.subr.bf16.mxu0 0
    %1380 = vmatpush1.bf16.msra.mxu0 %v1107
    %1381 = vmatprep.subr.bf16.mxu0 0
    %1382 = vmatpush1.bf16.msra.mxu0 %v1106
    %1383 = vmatprep.subr.bf16.mxu0 0
    %1384 = vmatpush1.bf16.msra.mxu0 %v1105
    %1385 = vmatprep.subr.bf16.mxu0 0
    %1386 = vmatpush1.bf16.msra.mxu0 %v1104
    %1387 = vmatprep.subr.bf16.mxu0 0
    %1388 = vmatpush1.bf16.msra.mxu0 %v1103
    %1389 = vmatprep.subr.bf16.mxu0 0
    %1390 = vmatpush1.bf16.msra.mxu0 %v1102
    %1391 = vmatprep.subr.bf16.mxu0 0
    %1392 = vmatpush2.bf16.msra.mxu0 %v1117
    %1393 = vmatprep.subr.bf16.mxu0 0
    %1394 = vmatpush2.bf16.msra.mxu0 %v1116
    %1395 = vmatprep.subr.bf16.mxu0 0
    %1396 = vmatpush2.bf16.msra.mxu0 %v1115
    %1397 = vmatprep.subr.bf16.mxu0 0
    %1398 = vmatpush2.bf16.msra.mxu0 %v1114
    %1399 = vmatprep.subr.bf16.mxu0 0
    %1400 = vmatpush2.bf16.msra.mxu0 %v1113
    %1401 = vmatprep.subr.bf16.mxu0 0
    %1402 = vmatpush2.bf16.msra.mxu0 %v1112
    %1403 = vmatprep.subr.bf16.mxu0 0
    %1404 = vmatpush2.bf16.msra.mxu0 %v1111
    %1405 = vmatprep.subr.bf16.mxu0 0
    %1406 = vmatpush2.bf16.msra.mxu0 %v1110
    %1407 = vmatprep.mubr.bf16.mxu0 %v529
    %1408 = vmatmul.mubr.bf16.gmra.mxu0 %v528
    %v1409 = vpop.f32.mrf.mxu0
    %v1410 = vadd.f32 %v1345, %v1409
    %v1411 = vpop.f32.mrf.mxu0
    %v1412 = vpop.f32.mrf.mxu0
    %v1413 = vadd.f32 %v1348, %v1412
    %v1414 = vpop.f32.mrf.mxu0
    %1415 = vmatprep.mubr.bf16.mxu0 %v543
    %1416 = vmatmul.mubr.bf16.gmra.mxu0 %v542
    %v1417 = vpop.f32.mrf.mxu0
    %v1418 = vadd.f32 %v1353, %v1417
    %v1419 = vpop.f32.mrf.mxu0
    %v1420 = vpop.f32.mrf.mxu0
    %v1421 = vadd.f32 %v1356, %v1420
    %v1422 = vpop.f32.mrf.mxu0
    %1423 = vmatprep.mubr.bf16.mxu0 %v557
    %1424 = vmatmul.mubr.bf16.gmra.mxu0 %v556
    %v1425 = vpop.f32.mrf.mxu0
    %v1426 = vadd.f32 %v1361, %v1425
    %v1427 = vpop.f32.mrf.mxu0
    %v1428 = vpop.f32.mrf.mxu0
    %v1429 = vadd.f32 %v1364, %v1428
    %v1430 = vpop.f32.mrf.mxu0
    %1431 = vmatprep.mubr.bf16.mxu0 %v571
    %1432 = vmatmul.mubr.bf16.gmra.mxu0 %v570
    %v1433 = vpop.f32.mrf.mxu0
    %v1434 = vadd.f32 %v1369, %v1433
    %v1435 = vpop.f32.mrf.mxu0
    %v1436 = vpop.f32.mrf.mxu0
    %v1437 = vadd.f32 %v1372, %v1436
    %v1438 = vpop.f32.mrf.mxu0
    %1439 = vdwg.mxu0
    %1440 = vmatprep.subr.bf16.mxu0 0
    %1441 = vmatpush1.bf16.msra.mxu0 %v1125
    %1442 = vmatprep.subr.bf16.mxu0 0
    %1443 = vmatpush1.bf16.msra.mxu0 %v1124
    %1444 = vmatprep.subr.bf16.mxu0 0
    %1445 = vmatpush1.bf16.msra.mxu0 %v1123
    %1446 = vmatprep.subr.bf16.mxu0 0
    %1447 = vmatpush1.bf16.msra.mxu0 %v1122
    %1448 = vmatprep.subr.bf16.mxu0 0
    %1449 = vmatpush1.bf16.msra.mxu0 %v1121
    %1450 = vmatprep.subr.bf16.mxu0 0
    %1451 = vmatpush1.bf16.msra.mxu0 %v1120
    %1452 = vmatprep.subr.bf16.mxu0 0
    %1453 = vmatpush1.bf16.msra.mxu0 %v1119
    %1454 = vmatprep.subr.bf16.mxu0 0
    %1455 = vmatpush1.bf16.msra.mxu0 %v1118
    %1456 = vmatprep.subr.bf16.mxu0 0
    %1457 = vmatpush2.bf16.msra.mxu0 %v1133
    %1458 = vmatprep.subr.bf16.mxu0 0
    %1459 = vmatpush2.bf16.msra.mxu0 %v1132
    %1460 = vmatprep.subr.bf16.mxu0 0
    %1461 = vmatpush2.bf16.msra.mxu0 %v1131
    %1462 = vmatprep.subr.bf16.mxu0 0
    %1463 = vmatpush2.bf16.msra.mxu0 %v1130
    %1464 = vmatprep.subr.bf16.mxu0 0
    %1465 = vmatpush2.bf16.msra.mxu0 %v1129
    %1466 = vmatprep.subr.bf16.mxu0 0
    %1467 = vmatpush2.bf16.msra.mxu0 %v1128
    %1468 = vmatprep.subr.bf16.mxu0 0
    %1469 = vmatpush2.bf16.msra.mxu0 %v1127
    %1470 = vmatprep.subr.bf16.mxu0 0
    %1471 = vmatpush2.bf16.msra.mxu0 %v1126
    %1472 = vmatprep.mubr.bf16.mxu0 %v531
    %1473 = vmatmul.mubr.bf16.gmra.mxu0 %v530
    %v1474 = vpop.f32.mrf.mxu0
    %v1475 = vadd.f32 %v1410, %v1474
    %v1476 = vpop.f32.mrf.mxu0
    %v1477 = vpop.f32.mrf.mxu0
    %v1478 = vadd.f32 %v1413, %v1477
    %v1479 = vpop.f32.mrf.mxu0
    %1480 = vmatprep.mubr.bf16.mxu0 %v545
    %1481 = vmatmul.mubr.bf16.gmra.mxu0 %v544
    %v1482 = vpop.f32.mrf.mxu0
    %v1483 = vadd.f32 %v1418, %v1482
    %v1484 = vpop.f32.mrf.mxu0
    %v1485 = vpop.f32.mrf.mxu0
    %v1486 = vadd.f32 %v1421, %v1485
    %v1487 = vpop.f32.mrf.mxu0
    %1488 = vmatprep.mubr.bf16.mxu0 %v559
    %1489 = vmatmul.mubr.bf16.gmra.mxu0 %v558
    %v1490 = vpop.f32.mrf.mxu0
    %v1491 = vadd.f32 %v1426, %v1490
    %v1492 = vpop.f32.mrf.mxu0
    %v1493 = vpop.f32.mrf.mxu0
    %v1494 = vadd.f32 %v1429, %v1493
    %v1495 = vpop.f32.mrf.mxu0
    %1496 = vmatprep.mubr.bf16.mxu0 %v573
    %1497 = vmatmul.mubr.bf16.gmra.mxu0 %v572
    %v1498 = vpop.f32.mrf.mxu0
    %v1499 = vadd.f32 %v1434, %v1498
    %v1500 = vpop.f32.mrf.mxu0
    %v1501 = vpop.f32.mrf.mxu0
    %v1502 = vadd.f32 %v1437, %v1501
    %v1503 = vpop.f32.mrf.mxu0
    %1504 = vdwg.mxu0
    %1505 = vmatprep.subr.bf16.mxu0 0
    %1506 = vmatpush1.bf16.msra.mxu0 %v1141
    %1507 = vmatprep.subr.bf16.mxu0 0
    %1508 = vmatpush1.bf16.msra.mxu0 %v1140
    %1509 = vmatprep.subr.bf16.mxu0 0
    %1510 = vmatpush1.bf16.msra.mxu0 %v1139
    %1511 = vmatprep.subr.bf16.mxu0 0
    %1512 = vmatpush1.bf16.msra.mxu0 %v1138
    %1513 = vmatprep.subr.bf16.mxu0 0
    %1514 = vmatpush1.bf16.msra.mxu0 %v1137
    %1515 = vmatprep.subr.bf16.mxu0 0
    %1516 = vmatpush1.bf16.msra.mxu0 %v1136
    %1517 = vmatprep.subr.bf16.mxu0 0
    %1518 = vmatpush1.bf16.msra.mxu0 %v1135
    %1519 = vmatprep.subr.bf16.mxu0 0
    %1520 = vmatpush1.bf16.msra.mxu0 %v1134
    %1521 = vmatprep.subr.bf16.mxu0 0
    %1522 = vmatpush2.bf16.msra.mxu0 %v1149
    %1523 = vmatprep.subr.bf16.mxu0 0
    %1524 = vmatpush2.bf16.msra.mxu0 %v1148
    %1525 = vmatprep.subr.bf16.mxu0 0
    %1526 = vmatpush2.bf16.msra.mxu0 %v1147
    %1527 = vmatprep.subr.bf16.mxu0 0
    %1528 = vmatpush2.bf16.msra.mxu0 %v1146
    %1529 = vmatprep.subr.bf16.mxu0 0
    %1530 = vmatpush2.bf16.msra.mxu0 %v1145
    %1531 = vmatprep.subr.bf16.mxu0 0
    %1532 = vmatpush2.bf16.msra.mxu0 %v1144
    %1533 = vmatprep.subr.bf16.mxu0 0
    %1534 = vmatpush2.bf16.msra.mxu0 %v1143
    %1535 = vmatprep.subr.bf16.mxu0 0
    %1536 = vmatpush2.bf16.msra.mxu0 %v1142
    %1537 = vmatprep.mubr.bf16.mxu0 %v533
    %1538 = vmatmul.mubr.bf16.gmra.mxu0 %v532
    %v1539 = vpop.f32.mrf.mxu0
    %v1540 = vadd.f32 %v1475, %v1539
    %v1541 = vpop.f32.mrf.mxu0
    %v1542 = vpop.f32.mrf.mxu0
    %v1543 = vadd.f32 %v1478, %v1542
    %v1544 = vpop.f32.mrf.mxu0
    %1545 = vmatprep.mubr.bf16.mxu0 %v547
    %1546 = vmatmul.mubr.bf16.gmra.mxu0 %v546
    %v1547 = vpop.f32.mrf.mxu0
    %v1548 = vadd.f32 %v1483, %v1547
    %v1549 = vpop.f32.mrf.mxu0
    %v1550 = vpop.f32.mrf.mxu0
    %v1551 = vadd.f32 %v1486, %v1550
    %v1552 = vpop.f32.mrf.mxu0
    %1553 = vmatprep.mubr.bf16.mxu0 %v561
    %1554 = vmatmul.mubr.bf16.gmra.mxu0 %v560
    %v1555 = vpop.f32.mrf.mxu0
    %v1556 = vadd.f32 %v1491, %v1555
    %v1557 = vpop.f32.mrf.mxu0
    %v1558 = vpop.f32.mrf.mxu0
    %v1559 = vadd.f32 %v1494, %v1558
    %v1560 = vpop.f32.mrf.mxu0
    %1561 = vmatprep.mubr.bf16.mxu0 %v575
    %1562 = vmatmul.mubr.bf16.gmra.mxu0 %v574
    %v1563 = vpop.f32.mrf.mxu0
    %v1564 = vadd.f32 %v1499, %v1563
    %v1565 = vpop.f32.mrf.mxu0
    %v1566 = vpop.f32.mrf.mxu0
    %v1567 = vadd.f32 %v1502, %v1566
    %v1568 = vpop.f32.mrf.mxu0
    %1569 = vdwg.mxu0
    %1570 = vmatprep.subr.bf16.mxu0 0
    %1571 = vmatpush1.bf16.msra.mxu0 %v1157
    %1572 = vmatprep.subr.bf16.mxu0 0
    %1573 = vmatpush1.bf16.msra.mxu0 %v1156
    %1574 = vmatprep.subr.bf16.mxu0 0
    %1575 = vmatpush1.bf16.msra.mxu0 %v1155
    %1576 = vmatprep.subr.bf16.mxu0 0
    %1577 = vmatpush1.bf16.msra.mxu0 %v1154
    %1578 = vmatprep.subr.bf16.mxu0 0
    %1579 = vmatpush1.bf16.msra.mxu0 %v1153
    %1580 = vmatprep.subr.bf16.mxu0 0
    %1581 = vmatpush1.bf16.msra.mxu0 %v1152
    %1582 = vmatprep.subr.bf16.mxu0 0
    %1583 = vmatpush1.bf16.msra.mxu0 %v1151
    %1584 = vmatprep.subr.bf16.mxu0 0
    %1585 = vmatpush1.bf16.msra.mxu0 %v1150
    %1586 = vmatprep.subr.bf16.mxu0 0
    %1587 = vmatpush2.bf16.msra.mxu0 %v1165
    %1588 = vmatprep.subr.bf16.mxu0 0
    %1589 = vmatpush2.bf16.msra.mxu0 %v1164
    %1590 = vmatprep.subr.bf16.mxu0 0
    %1591 = vmatpush2.bf16.msra.mxu0 %v1163
    %1592 = vmatprep.subr.bf16.mxu0 0
    %1593 = vmatpush2.bf16.msra.mxu0 %v1162
    %1594 = vmatprep.subr.bf16.mxu0 0
    %1595 = vmatpush2.bf16.msra.mxu0 %v1161
    %1596 = vmatprep.subr.bf16.mxu0 0
    %1597 = vmatpush2.bf16.msra.mxu0 %v1160
    %1598 = vmatprep.subr.bf16.mxu0 0
    %1599 = vmatpush2.bf16.msra.mxu0 %v1159
    %1600 = vmatprep.subr.bf16.mxu0 0
    %1601 = vmatpush2.bf16.msra.mxu0 %v1158
    %1602 = vmatprep.mubr.bf16.mxu0 %v535
    %1603 = vmatmul.mubr.bf16.gmra.mxu0 %v534
    %v1604 = vpop.f32.mrf.mxu0
    %v1605 = vadd.f32 %v1540, %v1604
    %v1606 = vpop.f32.mrf.mxu0
    %v1607 = vpop.f32.mrf.mxu0
    %v1608 = vadd.f32 %v1543, %v1607
    %v1609 = vpop.f32.mrf.mxu0
    %1610 = vmatprep.mubr.bf16.mxu0 %v549
    %1611 = vmatmul.mubr.bf16.gmra.mxu0 %v548
    %v1612 = vpop.f32.mrf.mxu0
    %v1613 = vadd.f32 %v1548, %v1612
    %v1614 = vpop.f32.mrf.mxu0
    %v1615 = vpop.f32.mrf.mxu0
    %v1616 = vadd.f32 %v1551, %v1615
    %v1617 = vpop.f32.mrf.mxu0
    %1618 = vmatprep.mubr.bf16.mxu0 %v563
    %1619 = vmatmul.mubr.bf16.gmra.mxu0 %v562
    %v1620 = vpop.f32.mrf.mxu0
    %v1621 = vadd.f32 %v1556, %v1620
    %v1622 = vpop.f32.mrf.mxu0
    %v1623 = vpop.f32.mrf.mxu0
    %v1624 = vadd.f32 %v1559, %v1623
    %v1625 = vpop.f32.mrf.mxu0
    %1626 = vmatprep.mubr.bf16.mxu0 %v577
    %1627 = vmatmul.mubr.bf16.gmra.mxu0 %v576
    %v1628 = vpop.f32.mrf.mxu0
    %v1629 = vadd.f32 %v1564, %v1628
    %v1630 = vpop.f32.mrf.mxu0
    %v1631 = vpop.f32.mrf.mxu0
    %v1632 = vadd.f32 %v1567, %v1631
    %v1633 = vpop.f32.mrf.mxu0
    %1634 = vdwg.mxu0
    %1635 = vmatprep.subr.bf16.mxu0 0
    %1636 = vmatpush1.bf16.msra.mxu0 %v1173
    %1637 = vmatprep.subr.bf16.mxu0 0
    %1638 = vmatpush1.bf16.msra.mxu0 %v1172
    %1639 = vmatprep.subr.bf16.mxu0 0
    %1640 = vmatpush1.bf16.msra.mxu0 %v1171
    %1641 = vmatprep.subr.bf16.mxu0 0
    %1642 = vmatpush1.bf16.msra.mxu0 %v1170
    %1643 = vmatprep.subr.bf16.mxu0 0
    %1644 = vmatpush1.bf16.msra.mxu0 %v1169
    %1645 = vmatprep.subr.bf16.mxu0 0
    %1646 = vmatpush1.bf16.msra.mxu0 %v1168
    %1647 = vmatprep.subr.bf16.mxu0 0
    %1648 = vmatpush1.bf16.msra.mxu0 %v1167
    %1649 = vmatprep.subr.bf16.mxu0 0
    %1650 = vmatpush1.bf16.msra.mxu0 %v1166
    %1651 = vmatprep.subr.bf16.mxu0 0
    %1652 = vmatpush2.bf16.msra.mxu0 %v1181
    %1653 = vmatprep.subr.bf16.mxu0 0
    %1654 = vmatpush2.bf16.msra.mxu0 %v1180
    %1655 = vmatprep.subr.bf16.mxu0 0
    %1656 = vmatpush2.bf16.msra.mxu0 %v1179
    %1657 = vmatprep.subr.bf16.mxu0 0
    %1658 = vmatpush2.bf16.msra.mxu0 %v1178
    %1659 = vmatprep.subr.bf16.mxu0 0
    %1660 = vmatpush2.bf16.msra.mxu0 %v1177
    %1661 = vmatprep.subr.bf16.mxu0 0
    %1662 = vmatpush2.bf16.msra.mxu0 %v1176
    %1663 = vmatprep.subr.bf16.mxu0 0
    %1664 = vmatpush2.bf16.msra.mxu0 %v1175
    %1665 = vmatprep.subr.bf16.mxu0 0
    %1666 = vmatpush2.bf16.msra.mxu0 %v1174
    %1667 = vmatprep.mubr.bf16.mxu0 %v537
    %1668 = vmatmul.mubr.bf16.gmra.mxu0 %v536
    %v1669 = vpop.f32.mrf.mxu0
    %v1670 = vadd.f32 %v1605, %v1669
    %v1671 = vpop.f32.mrf.mxu0
    %v1672 = vpop.f32.mrf.mxu0
    %v1673 = vadd.f32 %v1608, %v1672
    %v1674 = vpop.f32.mrf.mxu0
    %1675 = vmatprep.mubr.bf16.mxu0 %v551
    %1676 = vmatmul.mubr.bf16.gmra.mxu0 %v550
    %v1677 = vpop.f32.mrf.mxu0
    %v1678 = vadd.f32 %v1613, %v1677
    %v1679 = vpop.f32.mrf.mxu0
    %v1680 = vpop.f32.mrf.mxu0
    %v1681 = vadd.f32 %v1616, %v1680
    %v1682 = vpop.f32.mrf.mxu0
    %1683 = vmatprep.mubr.bf16.mxu0 %v565
    %1684 = vmatmul.mubr.bf16.gmra.mxu0 %v564
    %v1685 = vpop.f32.mrf.mxu0
    %v1686 = vadd.f32 %v1621, %v1685
    %v1687 = vpop.f32.mrf.mxu0
    %v1688 = vpop.f32.mrf.mxu0
    %v1689 = vadd.f32 %v1624, %v1688
    %v1690 = vpop.f32.mrf.mxu0
    %1691 = vmatprep.mubr.bf16.mxu0 %v579
    %1692 = vmatmul.mubr.bf16.gmra.mxu0 %v578
    %v1693 = vpop.f32.mrf.mxu0
    %v1694 = vadd.f32 %v1629, %v1693
    %v1695 = vpop.f32.mrf.mxu0
    %v1696 = vpop.f32.mrf.mxu0
    %v1697 = vadd.f32 %v1632, %v1696
    %v1698 = vpop.f32.mrf.mxu0
    %1699 = vdwg.mxu0
    %1700 = vmatprep.subr.bf16.mxu0 0
    %1701 = vmatpush1.bf16.msra.mxu0 %v1189
    %1702 = vmatprep.subr.bf16.mxu0 0
    %1703 = vmatpush1.bf16.msra.mxu0 %v1188
    %1704 = vmatprep.subr.bf16.mxu0 0
    %1705 = vmatpush1.bf16.msra.mxu0 %v1187
    %1706 = vmatprep.subr.bf16.mxu0 0
    %1707 = vmatpush1.bf16.msra.mxu0 %v1186
    %1708 = vmatprep.subr.bf16.mxu0 0
    %1709 = vmatpush1.bf16.msra.mxu0 %v1185
    %1710 = vmatprep.subr.bf16.mxu0 0
    %1711 = vmatpush1.bf16.msra.mxu0 %v1184
    %1712 = vmatprep.subr.bf16.mxu0 0
    %1713 = vmatpush1.bf16.msra.mxu0 %v1183
    %1714 = vmatprep.subr.bf16.mxu0 0
    %1715 = vmatpush1.bf16.msra.mxu0 %v1182
    %1716 = vmatprep.subr.bf16.mxu0 0
    %1717 = vmatpush2.bf16.msra.mxu0 %v1197
    %1718 = vmatprep.subr.bf16.mxu0 0
    %1719 = vmatpush2.bf16.msra.mxu0 %v1196
    %1720 = vmatprep.subr.bf16.mxu0 0
    %1721 = vmatpush2.bf16.msra.mxu0 %v1195
    %1722 = vmatprep.subr.bf16.mxu0 0
    %1723 = vmatpush2.bf16.msra.mxu0 %v1194
    %1724 = vmatprep.subr.bf16.mxu0 0
    %1725 = vmatpush2.bf16.msra.mxu0 %v1193
    %1726 = vmatprep.subr.bf16.mxu0 0
    %1727 = vmatpush2.bf16.msra.mxu0 %v1192
    %1728 = vmatprep.subr.bf16.mxu0 0
    %1729 = vmatpush2.bf16.msra.mxu0 %v1191
    %1730 = vmatprep.subr.bf16.mxu0 0
    %1731 = vmatpush2.bf16.msra.mxu0 %v1190
    %1732 = vmatprep.mubr.bf16.mxu0 %v539
    %1733 = vmatmul.mubr.bf16.gmra.mxu0 %v538
    %v1734 = vpop.f32.mrf.mxu0
    %v1735 = vadd.f32 %v1670, %v1734
    %v1736 = vpop.f32.mrf.mxu0
    %v1737 = vpop.f32.mrf.mxu0
    %v1738 = vadd.f32 %v1673, %v1737
    %v1739 = vpop.f32.mrf.mxu0
    %1740 = vmatprep.mubr.bf16.mxu0 %v553
    %1741 = vmatmul.mubr.bf16.gmra.mxu0 %v552
    %v1742 = vpop.f32.mrf.mxu0
    %v1743 = vadd.f32 %v1678, %v1742
    %v1744 = vpop.f32.mrf.mxu0
    %v1745 = vpop.f32.mrf.mxu0
    %v1746 = vadd.f32 %v1681, %v1745
    %v1747 = vpop.f32.mrf.mxu0
    %1748 = vmatprep.mubr.bf16.mxu0 %v567
    %1749 = vmatmul.mubr.bf16.gmra.mxu0 %v566
    %v1750 = vpop.f32.mrf.mxu0
    %v1751 = vadd.f32 %v1686, %v1750
    %v1752 = vpop.f32.mrf.mxu0
    %v1753 = vpop.f32.mrf.mxu0
    %v1754 = vadd.f32 %v1689, %v1753
    %v1755 = vpop.f32.mrf.mxu0
    %1756 = vmatprep.mubr.bf16.mxu0 %v581
    %1757 = vmatmul.mubr.bf16.gmra.mxu0 %v580
    %v1758 = vpop.f32.mrf.mxu0
    %v1759 = vadd.f32 %v1694, %v1758
    %v1760 = vpop.f32.mrf.mxu0
    %v1761 = vpop.f32.mrf.mxu0
    %v1762 = vadd.f32 %v1697, %v1761
    %v1763 = vpop.f32.mrf.mxu0
    %1764 = vdwg.mxu0
    %v1765 = vld [vmem:[#allocation2] sm:$0xf]
    %v1766 = vld [vmem:[#allocation2 + $0x4] sm:$0xf]
    %v1767 = vld [vmem:[#allocation2 + $0x8] sm:$0xf]
    %v1768 = vld [vmem:[#allocation2 + $0xc] sm:$0xf]
    %v1773 = vunpack.c.l.b16 %v1765
    %v1774 = vunpack.c.l.b16 %v1766
    %v1775 = vunpack.c.l.b16 %v1767
    %v1776 = vunpack.c.l.b16 %v1768
    %v1777 = vpack.c.b16 %v1774, %v1773
    %v1778 = vpack.c.b16 %v1776, %v1775
    %vm1781 = vcmask 261120
    %v1783 = vsel %vm1781, 0, 0
    %1785 = vmatprep.subr.bf16.mxu0 0
    %1786 = vmatpush1.bf16.msra.mxu0 0
    %1787 = vmatprep.subr.bf16.mxu0 0
    %1788 = vmatpush1.bf16.msra.mxu0 0
    %1789 = vmatprep.subr.bf16.mxu0 0
    %1790 = vmatpush1.bf16.msra.mxu0 0
    %1791 = vmatprep.subr.bf16.mxu0 0
    %1792 = vmatpush1.bf16.msra.mxu0 0
    %1793 = vmatprep.subr.bf16.mxu0 0
    %1794 = vmatpush1.bf16.msra.mxu0 0
    %1795 = vmatprep.subr.bf16.mxu0 0
    %1796 = vmatpush1.bf16.msra.mxu0 0
    %1797 = vmatprep.subr.bf16.mxu0 0
    %1798 = vmatpush1.bf16.msra.mxu0 %v1778
    %1799 = vmatprep.subr.bf16.mxu0 0
    %1800 = vmatpush1.bf16.msra.mxu0 %v1777
    %1801 = vmatprep.subr.bf16.mxu0 0
    %1802 = vmatpush2.bf16.msra.mxu0 0
    %1803 = vmatprep.subr.bf16.mxu0 0
    %1804 = vmatpush2.bf16.msra.mxu0 0
    %1805 = vmatprep.subr.bf16.mxu0 0
    %1806 = vmatpush2.bf16.msra.mxu0 0
    %1807 = vmatprep.subr.bf16.mxu0 0
    %1808 = vmatpush2.bf16.msra.mxu0 0
    %1809 = vmatprep.subr.bf16.mxu0 0
    %1810 = vmatpush2.bf16.msra.mxu0 0
    %1811 = vmatprep.subr.bf16.mxu0 0
    %1812 = vmatpush2.bf16.msra.mxu0 0
    %1813 = vmatprep.subr.bf16.mxu0 0
    %1814 = vmatpush2.bf16.msra.mxu0 0
    %1815 = vmatprep.subr.bf16.mxu0 0
    %1816 = vmatpush2.bf16.msra.mxu0 0
    %1817 = vmatprep.mubr.bf16.mxu0 0
    %1818 = vmatmul.mubr.bf16.gmra.mxu0 %v1783
    %v1819 = vpop.f32.mrf.mxu0
    %v1820 = vadd.f32 0.0, %v1819
    %v1821 = vpop.f32.mrf.mxu0
    %v1822 = vpop.f32.mrf.mxu0
    %v1823 = vpop.f32.mrf.mxu0
    %1824 = vdwg.mxu0
    %v1826 = vrot.slane %v1820, 1
    %v1827 = vrot.slane %v1820, 2
    %v1828 = vrot.slane %v1820, 3
    %v1829 = vrot.slane %v1820, 4
    %v1830 = vrot.slane %v1820, 5
    %v1831 = vrot.slane %v1820, 6
    %v1832 = vrot.slane %v1820, 7
    %v1841 = vadd.f32 %v1735, %v1820
    %v1842 = vadd.f32 %v1738, %v1826
    %v1843 = vadd.f32 %v1743, %v1827
    %v1844 = vadd.f32 %v1746, %v1828
    %v1845 = vadd.f32 %v1751, %v1829
    %v1846 = vadd.f32 %v1754, %v1830
    %v1847 = vadd.f32 %v1759, %v1831
    %v1848 = vadd.f32 %v1762, %v1832
    %v1849 = vxor.u32 %v1841, 2147483648
    %v1850 = vxor.u32 %v1842, 2147483648
    %v1851 = vxor.u32 %v1843, 2147483648
    %v1852 = vxor.u32 %v1844, 2147483648
    %v1853 = vxor.u32 %v1845, 2147483648
    %v1854 = vxor.u32 %v1846, 2147483648
    %v1855 = vxor.u32 %v1847, 2147483648
    %v1856 = vxor.u32 %v1848, 2147483648
    %v1857 = vmul.f32 %v1849, 1.442695
    %v1858 = vpow.pop %v1857
    %v1859 = vmul.f32 %v1850, 1.442695
    %v1860 = vpow.pop %v1859
    %v1861 = vmul.f32 %v1851, 1.442695
    %v1862 = vpow.pop %v1861
    %v1863 = vmul.f32 %v1852, 1.442695
    %v1864 = vpow.pop %v1863
    %v1865 = vmul.f32 %v1853, 1.442695
    %v1866 = vpow.pop %v1865
    %v1867 = vmul.f32 %v1854, 1.442695
    %v1868 = vpow.pop %v1867
    %v1869 = vmul.f32 %v1855, 1.442695
    %v1870 = vpow.pop %v1869
    %v1871 = vmul.f32 %v1856, 1.442695
    %v1872 = vpow.pop %v1871
    %v1873 = vadd.f32 %v1858, 1.0
    %v1874 = vadd.f32 %v1860, 1.0
    %v1875 = vadd.f32 %v1862, 1.0
    %v1876 = vadd.f32 %v1864, 1.0
    %v1877 = vadd.f32 %v1866, 1.0
    %v1878 = vadd.f32 %v1868, 1.0
    %v1879 = vadd.f32 %v1870, 1.0
    %v1880 = vadd.f32 %v1872, 1.0
    %v1881 = vrcp.pop %v1873
    %v1882 = vmul.f32 1.0, %v1881
    %v1883 = vrcp.pop %v1874
    %v1884 = vmul.f32 1.0, %v1883
    %v1885 = vrcp.pop %v1875
    %v1886 = vmul.f32 1.0, %v1885
    %v1887 = vrcp.pop %v1876
    %v1888 = vmul.f32 1.0, %v1887
    %v1889 = vrcp.pop %v1877
    %v1890 = vmul.f32 1.0, %v1889
    %v1891 = vrcp.pop %v1878
    %v1892 = vmul.f32 1.0, %v1891
    %v1893 = vrcp.pop %v1879
    %v1894 = vmul.f32 1.0, %v1893
    %v1895 = vrcp.pop %v1880
    %v1896 = vmul.f32 1.0, %v1895
    %v1897 = vtanh.pop %v1841
    %v1898 = vtanh.pop %v1842
    %v1899 = vtanh.pop %v1843
    %v1900 = vtanh.pop %v1844
    %v1901 = vtanh.pop %v1845
    %v1902 = vtanh.pop %v1846
    %v1903 = vtanh.pop %v1847
    %v1904 = vtanh.pop %v1848
    %v1905 = vmul.f32 %v1882, 0.0
    %v1906 = vmul.f32 %v1884, 0.0
    %v1907 = vmul.f32 %v1886, 0.0
    %v1908 = vmul.f32 %v1888, 0.0
    %v1909 = vmul.f32 %v1890, 0.0
    %v1910 = vmul.f32 %v1892, 0.0
    %v1911 = vmul.f32 %v1894, 0.0
    %v1912 = vmul.f32 %v1896, 0.0
    %1921 = vrot.lane.b32.xlu0 %v1897, 32
    %v1922 = vpop.permute.xlu0 %1921
    %1923 = vrot.lane.b32.xlu0 %v1898, 32
    %v1924 = vpop.permute.xlu0 %1923
    %1925 = vrot.lane.b32.xlu0 %v1899, 32
    %v1926 = vpop.permute.xlu0 %1925
    %1927 = vrot.lane.b32.xlu0 %v1900, 32
    %v1928 = vpop.permute.xlu0 %1927
    %1929 = vrot.lane.b32.xlu0 %v1901, 32
    %v1930 = vpop.permute.xlu0 %1929
    %1931 = vrot.lane.b32.xlu0 %v1902, 32
    %v1932 = vpop.permute.xlu0 %1931
    %1933 = vrot.lane.b32.xlu0 %v1903, 32
    %v1934 = vpop.permute.xlu0 %1933
    %1935 = vrot.lane.b32.xlu0 %v1904, 32
    %v1936 = vpop.permute.xlu0 %1935
    %v1945 = vmul.f32 %v1882, %v1922
    %v1946 = vmul.f32 %v1884, %v1924
    %v1947 = vmul.f32 %v1886, %v1926
    %v1948 = vmul.f32 %v1888, %v1928
    %v1949 = vmul.f32 %v1890, %v1930
    %v1950 = vmul.f32 %v1892, %v1932
    %v1951 = vmul.f32 %v1894, %v1934
    %v1952 = vmul.f32 %v1896, %v1936
    %1961 = vrot.lane.b32.xlu0 %v1945, 32
    %v1962 = vpop.permute.xlu0 %1961
    %1963 = vrot.lane.b32.xlu0 %v1946, 32
    %v1964 = vpop.permute.xlu0 %1963
    %1965 = vrot.lane.b32.xlu0 %v1947, 32
    %v1966 = vpop.permute.xlu0 %1965
    %1967 = vrot.lane.b32.xlu0 %v1948, 32
    %v1968 = vpop.permute.xlu0 %1967
    %1969 = vrot.lane.b32.xlu0 %v1949, 32
    %v1970 = vpop.permute.xlu0 %1969
    %1971 = vrot.lane.b32.xlu0 %v1950, 32
    %v1972 = vpop.permute.xlu0 %1971
    %1973 = vrot.lane.b32.xlu0 %v1951, 32
    %v1974 = vpop.permute.xlu0 %1973
    %1975 = vrot.lane.b32.xlu0 %v1952, 32
    %v1976 = vpop.permute.xlu0 %1975
    %v1985 = vadd.f32 %v1905, %v1962
    %v1986 = vadd.f32 %v1906, %v1964
    %v1987 = vadd.f32 %v1907, %v1966
    %v1988 = vadd.f32 %v1908, %v1968
    %v1989 = vadd.f32 %v1909, %v1970
    %v1990 = vadd.f32 %v1910, %v1972
    %v1991 = vadd.f32 %v1911, %v1974
    %v1992 = vadd.f32 %v1912, %v1976
    %v1993 = vtanh.pop %v1985
    %v1994 = vtanh.pop %v1986
    %v1995 = vtanh.pop %v1987
    %v1996 = vtanh.pop %v1988
    %v1997 = vtanh.pop %v1989
    %v1998 = vtanh.pop %v1990
    %v1999 = vtanh.pop %v1991
    %v2000 = vtanh.pop %v1992
    %2009 = vrot.lane.b32.xlu0 %v1993, 32
    %v2010 = vpop.permute.xlu0 %2009
    %2011 = vrot.lane.b32.xlu0 %v1994, 32
    %v2012 = vpop.permute.xlu0 %2011
    %2013 = vrot.lane.b32.xlu0 %v1995, 32
    %v2014 = vpop.permute.xlu0 %2013
    %2015 = vrot.lane.b32.xlu0 %v1996, 32
    %v2016 = vpop.permute.xlu0 %2015
    %2017 = vrot.lane.b32.xlu0 %v1997, 32
    %v2018 = vpop.permute.xlu0 %2017
    %2019 = vrot.lane.b32.xlu0 %v1998, 32
    %v2020 = vpop.permute.xlu0 %2019
    %2021 = vrot.lane.b32.xlu0 %v1999, 32
    %v2022 = vpop.permute.xlu0 %2021
    %2023 = vrot.lane.b32.xlu0 %v2000, 32
    %v2024 = vpop.permute.xlu0 %2023
    %v2033 = vmul.f32 %v1882, %v2010
    %v2034 = vmul.f32 %v1884, %v2012
    %v2035 = vmul.f32 %v1886, %v2014
    %v2036 = vmul.f32 %v1888, %v2016
    %v2037 = vmul.f32 %v1890, %v2018
    %v2038 = vmul.f32 %v1892, %v2020
    %v2039 = vmul.f32 %v1894, %v2022
    %v2040 = vmul.f32 %v1896, %v2024
    %v2041 = vpack.c.bf16 %v2033, %v2033
    %v2042 = vpack.c.bf16 %v2034, %v2034
    %v2043 = vpack.c.bf16 %v2035, %v2035
    %v2044 = vpack.c.bf16 %v2036, %v2036
    %v2045 = vpack.c.bf16 %v2037, %v2037
    %v2046 = vpack.c.bf16 %v2038, %v2038
    %v2047 = vpack.c.bf16 %v2039, %v2039
    %v2048 = vpack.c.bf16 %v2040, %v2040
    %v2057 = vunpack.c.l.b16 %v2041
    %v2058 = vunpack.c.l.b16 %v2042
    %v2059 = vunpack.c.l.b16 %v2043
    %v2060 = vunpack.c.l.b16 %v2044
    %v2061 = vunpack.c.l.b16 %v2045
    %v2062 = vunpack.c.l.b16 %v2046
    %v2063 = vunpack.c.l.b16 %v2047
    %v2064 = vunpack.c.l.b16 %v2048
    %v2065 = vrot.slane %v2058, 7
    %vm2066 = vcmask 1041409
    %v2067 = vsel %vm2066, %v2065, %v2057
    %v2068 = vrot.slane %v2059, 6
    %vm2069 = vcmask 1042434
    %v2070 = vsel %vm2069, %v2068, %v2067
    %v2071 = vrot.slane %v2060, 5
    %vm2072 = vcmask 1043459
    %v2073 = vsel %vm2072, %v2071, %v2070
    %v2074 = vrot.slane %v2061, 4
    %vm2075 = vcmask 1044484
    %v2076 = vsel %vm2075, %v2074, %v2073
    %v2077 = vrot.slane %v2062, 3
    %vm2078 = vcmask 1045509
    %v2079 = vsel %vm2078, %v2077, %v2076
    %v2080 = vrot.slane %v2063, 2
    %vm2081 = vcmask 1046534
    %v2082 = vsel %vm2081, %v2080, %v2079
    %v2083 = vrot.slane %v2064, 1
    %vm2084 = vcmask 1047559
    %v2085 = vsel %vm2084, %v2083, %v2082
    %v2086 = vpack.c.b16 %v2085, %v2085
    %2087 = vrot.lane.b32.xlu0 %v2086, 64
    %v2088 = vpop.permute.xlu0 %2087
    %v2090 = vsel %vm1781, %v2088, 0
    %2092 = vmatprep.subr.bf16.mxu0 0
    %2093 = vmatpush1.bf16.msra.mxu0 0
    %2094 = vmatprep.subr.bf16.mxu0 0
    %2095 = vmatpush1.bf16.msra.mxu0 0
    %2096 = vmatprep.subr.bf16.mxu0 0
    %2097 = vmatpush1.bf16.msra.mxu0 0
    %2098 = vmatprep.subr.bf16.mxu0 0
    %2099 = vmatpush1.bf16.msra.mxu0 0
    %2100 = vmatprep.subr.bf16.mxu0 0
    %2101 = vmatpush1.bf16.msra.mxu0 0
    %2102 = vmatprep.subr.bf16.mxu0 0
    %2103 = vmatpush1.bf16.msra.mxu0 0
    %2104 = vmatprep.subr.bf16.mxu0 0
    %2105 = vmatpush1.bf16.msra.mxu0 %v1778
    %2106 = vmatprep.subr.bf16.mxu0 0
    %2107 = vmatpush1.bf16.msra.mxu0 %v1777
    %2108 = vmatprep.subr.bf16.mxu0 0
    %2109 = vmatpush2.bf16.msra.mxu0 0
    %2110 = vmatprep.subr.bf16.mxu0 0
    %2111 = vmatpush2.bf16.msra.mxu0 0
    %2112 = vmatprep.subr.bf16.mxu0 0
    %2113 = vmatpush2.bf16.msra.mxu0 0
    %2114 = vmatprep.subr.bf16.mxu0 0
    %2115 = vmatpush2.bf16.msra.mxu0 0
    %2116 = vmatprep.subr.bf16.mxu0 0
    %2117 = vmatpush2.bf16.msra.mxu0 0
    %2118 = vmatprep.subr.bf16.mxu0 0
    %2119 = vmatpush2.bf16.msra.mxu0 0
    %2120 = vmatprep.subr.bf16.mxu0 0
    %2121 = vmatpush2.bf16.msra.mxu0 0
    %2122 = vmatprep.subr.bf16.mxu0 0
    %2123 = vmatpush2.bf16.msra.mxu0 0
    %2124 = vmatprep.mubr.bf16.mxu0 0
    %2125 = vmatmul.mubr.bf16.gmra.mxu0 %v2090
    %v2126 = vpop.f32.mrf.mxu0
    %v2127 = vadd.f32 0.0, %v2126
    %v2128 = vpop.f32.mrf.mxu0
    %v2129 = vpop.f32.mrf.mxu0
    %v2130 = vpop.f32.mrf.mxu0
    %2131 = vdwg.mxu0
    %v2133 = vrot.slane %v2127, 7
    %v2134 = vrot.slane %v2127, 1
    %v2135 = vrot.slane %v2127, 2
    %v2136 = vrot.slane %v2127, 3
    %v2137 = vrot.slane %v2127, 4
    %v2138 = vrot.slane %v2127, 5
    %v2139 = vrot.slane %v2127, 6
    %v2148 = vadd.f32 %v1735, %v2133
    %v2149 = vadd.f32 %v1738, %v2127
    %v2150 = vadd.f32 %v1743, %v2134
    %v2151 = vadd.f32 %v1746, %v2135
    %v2152 = vadd.f32 %v1751, %v2136
    %v2153 = vadd.f32 %v1754, %v2137
    %v2154 = vadd.f32 %v1759, %v2138
    %v2155 = vadd.f32 %v1762, %v2139
    %v2156 = vxor.u32 %v2148, 2147483648
    %v2157 = vxor.u32 %v2149, 2147483648
    %v2158 = vxor.u32 %v2150, 2147483648
    %v2159 = vxor.u32 %v2151, 2147483648
    %v2160 = vxor.u32 %v2152, 2147483648
    %v2161 = vxor.u32 %v2153, 2147483648
    %v2162 = vxor.u32 %v2154, 2147483648
    %v2163 = vxor.u32 %v2155, 2147483648
    %v2164 = vmul.f32 %v2156, 1.442695
    %v2165 = vpow.pop %v2164
    %v2166 = vmul.f32 %v2157, 1.442695
    %v2167 = vpow.pop %v2166
    %v2168 = vmul.f32 %v2158, 1.442695
    %v2169 = vpow.pop %v2168
    %v2170 = vmul.f32 %v2159, 1.442695
    %v2171 = vpow.pop %v2170
    %v2172 = vmul.f32 %v2160, 1.442695
    %v2173 = vpow.pop %v2172
    %v2174 = vmul.f32 %v2161, 1.442695
    %v2175 = vpow.pop %v2174
    %v2176 = vmul.f32 %v2162, 1.442695
    %v2177 = vpow.pop %v2176
    %v2178 = vmul.f32 %v2163, 1.442695
    %v2179 = vpow.pop %v2178
    %v2180 = vadd.f32 %v2165, 1.0
    %v2181 = vadd.f32 %v2167, 1.0
    %v2182 = vadd.f32 %v2169, 1.0
    %v2183 = vadd.f32 %v2171, 1.0
    %v2184 = vadd.f32 %v2173, 1.0
    %v2185 = vadd.f32 %v2175, 1.0
    %v2186 = vadd.f32 %v2177, 1.0
    %v2187 = vadd.f32 %v2179, 1.0
    %v2188 = vrcp.pop %v2180
    %v2189 = vmul.f32 1.0, %v2188
    %v2190 = vrcp.pop %v2181
    %v2191 = vmul.f32 1.0, %v2190
    %v2192 = vrcp.pop %v2182
    %v2193 = vmul.f32 1.0, %v2192
    %v2194 = vrcp.pop %v2183
    %v2195 = vmul.f32 1.0, %v2194
    %v2196 = vrcp.pop %v2184
    %v2197 = vmul.f32 1.0, %v2196
    %v2198 = vrcp.pop %v2185
    %v2199 = vmul.f32 1.0, %v2198
    %v2200 = vrcp.pop %v2186
    %v2201 = vmul.f32 1.0, %v2200
    %v2202 = vrcp.pop %v2187
    %v2203 = vmul.f32 1.0, %v2202
    %v2204 = vtanh.pop %v2148
    %v2205 = vtanh.pop %v2149
    %v2206 = vtanh.pop %v2150
    %v2207 = vtanh.pop %v2151
    %v2208 = vtanh.pop %v2152
    %v2209 = vtanh.pop %v2153
    %v2210 = vtanh.pop %v2154
    %v2211 = vtanh.pop %v2155
    %v2220 = vrot.slane %v1985, 7
    %v2221 = vrot.slane %v1986, 7
    %v2222 = vrot.slane %v1987, 7
    %v2223 = vrot.slane %v1988, 7
    %v2224 = vrot.slane %v1989, 7
    %v2225 = vrot.slane %v1990, 7
    %v2226 = vrot.slane %v1991, 7
    %v2227 = vrot.slane %v1992, 7
    %v2236 = vmul.f32 %v2189, %v2220
    %v2237 = vmul.f32 %v2191, %v2221
    %v2238 = vmul.f32 %v2193, %v2222
    %v2239 = vmul.f32 %v2195, %v2223
    %v2240 = vmul.f32 %v2197, %v2224
    %v2241 = vmul.f32 %v2199, %v2225
    %v2242 = vmul.f32 %v2201, %v2226
    %v2243 = vmul.f32 %v2203, %v2227
    %2252 = vrot.lane.b32.xlu0 %v2204, 32
    %v2253 = vpop.permute.xlu0 %2252
    %2254 = vrot.lane.b32.xlu0 %v2205, 32
    %v2255 = vpop.permute.xlu0 %2254
    %2256 = vrot.lane.b32.xlu0 %v2206, 32
    %v2257 = vpop.permute.xlu0 %2256
    %2258 = vrot.lane.b32.xlu0 %v2207, 32
    %v2259 = vpop.permute.xlu0 %2258
    %2260 = vrot.lane.b32.xlu0 %v2208, 32
    %v2261 = vpop.permute.xlu0 %2260
    %2262 = vrot.lane.b32.xlu0 %v2209, 32
    %v2263 = vpop.permute.xlu0 %2262
    %2264 = vrot.lane.b32.xlu0 %v2210, 32
    %v2265 = vpop.permute.xlu0 %2264
    %2266 = vrot.lane.b32.xlu0 %v2211, 32
    %v2267 = vpop.permute.xlu0 %2266
    %v2276 = vmul.f32 %v2189, %v2253
    %v2277 = vmul.f32 %v2191, %v2255
    %v2278 = vmul.f32 %v2193, %v2257
    %v2279 = vmul.f32 %v2195, %v2259
    %v2280 = vmul.f32 %v2197, %v2261
    %v2281 = vmul.f32 %v2199, %v2263
    %v2282 = vmul.f32 %v2201, %v2265
    %v2283 = vmul.f32 %v2203, %v2267
    %2292 = vrot.lane.b32.xlu0 %v2276, 32
    %v2293 = vpop.permute.xlu0 %2292
    %2294 = vrot.lane.b32.xlu0 %v2277, 32
    %v2295 = vpop.permute.xlu0 %2294
    %2296 = vrot.lane.b32.xlu0 %v2278, 32
    %v2297 = vpop.permute.xlu0 %2296
    %2298 = vrot.lane.b32.xlu0 %v2279, 32
    %v2299 = vpop.permute.xlu0 %2298
    %2300 = vrot.lane.b32.xlu0 %v2280, 32
    %v2301 = vpop.permute.xlu0 %2300
    %2302 = vrot.lane.b32.xlu0 %v2281, 32
    %v2303 = vpop.permute.xlu0 %2302
    %2304 = vrot.lane.b32.xlu0 %v2282, 32
    %v2305 = vpop.permute.xlu0 %2304
    %2306 = vrot.lane.b32.xlu0 %v2283, 32
    %v2307 = vpop.permute.xlu0 %2306
    %v2316 = vadd.f32 %v2236, %v2293
    %v2317 = vadd.f32 %v2237, %v2295
    %v2318 = vadd.f32 %v2238, %v2297
    %v2319 = vadd.f32 %v2239, %v2299
    %v2320 = vadd.f32 %v2240, %v2301
    %v2321 = vadd.f32 %v2241, %v2303
    %v2322 = vadd.f32 %v2242, %v2305
    %v2323 = vadd.f32 %v2243, %v2307
    %v2324 = vtanh.pop %v2316
    %v2325 = vtanh.pop %v2317
    %v2326 = vtanh.pop %v2318
    %v2327 = vtanh.pop %v2319
    %v2328 = vtanh.pop %v2320
    %v2329 = vtanh.pop %v2321
    %v2330 = vtanh.pop %v2322
    %v2331 = vtanh.pop %v2323
    %2340 = vrot.lane.b32.xlu0 %v2324, 32
    %v2341 = vpop.permute.xlu0 %2340
    %2342 = vrot.lane.b32.xlu0 %v2325, 32
    %v2343 = vpop.permute.xlu0 %2342
    %2344 = vrot.lane.b32.xlu0 %v2326, 32
    %v2345 = vpop.permute.xlu0 %2344
    %2346 = vrot.lane.b32.xlu0 %v2327, 32
    %v2347 = vpop.permute.xlu0 %2346
    %2348 = vrot.lane.b32.xlu0 %v2328, 32
    %v2349 = vpop.permute.xlu0 %2348
    %2350 = vrot.lane.b32.xlu0 %v2329, 32
    %v2351 = vpop.permute.xlu0 %2350
    %2352 = vrot.lane.b32.xlu0 %v2330, 32
    %v2353 = vpop.permute.xlu0 %2352
    %2354 = vrot.lane.b32.xlu0 %v2331, 32
    %v2355 = vpop.permute.xlu0 %2354
    %v2364 = vmul.f32 %v2189, %v2341
    %v2365 = vmul.f32 %v2191, %v2343
    %v2366 = vmul.f32 %v2193, %v2345
    %v2367 = vmul.f32 %v2195, %v2347
    %v2368 = vmul.f32 %v2197, %v2349
    %v2369 = vmul.f32 %v2199, %v2351
    %v2370 = vmul.f32 %v2201, %v2353
    %v2371 = vmul.f32 %v2203, %v2355
    %v2372 = vpack.c.bf16 %v2364, %v2364
    %v2373 = vpack.c.bf16 %v2365, %v2365
    %v2374 = vpack.c.bf16 %v2366, %v2366
    %v2375 = vpack.c.bf16 %v2367, %v2367
    %v2376 = vpack.c.bf16 %v2368, %v2368
    %v2377 = vpack.c.bf16 %v2369, %v2369
    %v2378 = vpack.c.bf16 %v2370, %v2370
    %v2379 = vpack.c.bf16 %v2371, %v2371
    %v2388 = vunpack.c.l.b16 %v2372
    %v2389 = vunpack.c.l.b16 %v2373
    %v2390 = vunpack.c.l.b16 %v2374
    %v2391 = vunpack.c.l.b16 %v2375
    %v2392 = vunpack.c.l.b16 %v2376
    %v2393 = vunpack.c.l.b16 %v2377
    %v2394 = vunpack.c.l.b16 %v2378
    %v2395 = vunpack.c.l.b16 %v2379
    %v2396 = vrot.slane %v2388, 1
    %v2397 = vsel %vm2066, %v2389, %v2396
    %v2398 = vrot.slane %v2390, 7
    %v2399 = vsel %vm2069, %v2398, %v2397
    %v2400 = vrot.slane %v2391, 6
    %v2401 = vsel %vm2072, %v2400, %v2399
    %v2402 = vrot.slane %v2392, 5
    %v2403 = vsel %vm2075, %v2402, %v2401
    %v2404 = vrot.slane %v2393, 4
    %v2405 = vsel %vm2078, %v2404, %v2403
    %v2406 = vrot.slane %v2394, 3
    %v2407 = vsel %vm2081, %v2406, %v2405
    %v2408 = vrot.slane %v2395, 2
    %v2409 = vsel %vm2084, %v2408, %v2407
    %v2410 = vpack.c.b16 %v2409, %v2409
    %2411 = vrot.lane.b32.xlu0 %v2410, 64
    %v2412 = vpop.permute.xlu0 %2411
    %v2414 = vsel %vm1781, %v2412, 0
    %2416 = vmatprep.subr.bf16.mxu0 0
    %2417 = vmatpush1.bf16.msra.mxu0 0
    %2418 = vmatprep.subr.bf16.mxu0 0
    %2419 = vmatpush1.bf16.msra.mxu0 0
    %2420 = vmatprep.subr.bf16.mxu0 0
    %2421 = vmatpush1.bf16.msra.mxu0 0
    %2422 = vmatprep.subr.bf16.mxu0 0
    %2423 = vmatpush1.bf16.msra.mxu0 0
    %2424 = vmatprep.subr.bf16.mxu0 0
    %2425 = vmatpush1.bf16.msra.mxu0 0
    %2426 = vmatprep.subr.bf16.mxu0 0
    %2427 = vmatpush1.bf16.msra.mxu0 0
    %2428 = vmatprep.subr.bf16.mxu0 0
    %2429 = vmatpush1.bf16.msra.mxu0 %v1778
    %2430 = vmatprep.subr.bf16.mxu0 0
    %2431 = vmatpush1.bf16.msra.mxu0 %v1777
    %2432 = vmatprep.subr.bf16.mxu0 0
    %2433 = vmatpush2.bf16.msra.mxu0 0
    %2434 = vmatprep.subr.bf16.mxu0 0
    %2435 = vmatpush2.bf16.msra.mxu0 0
    %2436 = vmatprep.subr.bf16.mxu0 0
    %2437 = vmatpush2.bf16.msra.mxu0 0
    %2438 = vmatprep.subr.bf16.mxu0 0
    %2439 = vmatpush2.bf16.msra.mxu0 0
    %2440 = vmatprep.subr.bf16.mxu0 0
    %2441 = vmatpush2.bf16.msra.mxu0 0
    %2442 = vmatprep.subr.bf16.mxu0 0
    %2443 = vmatpush2.bf16.msra.mxu0 0
    %2444 = vmatprep.subr.bf16.mxu0 0
    %2445 = vmatpush2.bf16.msra.mxu0 0
    %2446 = vmatprep.subr.bf16.mxu0 0
    %2447 = vmatpush2.bf16.msra.mxu0 0
    %2448 = vmatprep.mubr.bf16.mxu0 0
    %2449 = vmatmul.mubr.bf16.gmra.mxu0 %v2414
    %v2450 = vpop.f32.mrf.mxu0
    %v2451 = vadd.f32 0.0, %v2450
    %v2452 = vpop.f32.mrf.mxu0
    %v2453 = vpop.f32.mrf.mxu0
    %v2454 = vpop.f32.mrf.mxu0
    %2455 = vdwg.mxu0
    %v2457 = vrot.slane %v2451, 6
    %v2458 = vrot.slane %v2451, 7
    %v2459 = vrot.slane %v2451, 1
    %v2460 = vrot.slane %v2451, 2
    %v2461 = vrot.slane %v2451, 3
    %v2462 = vrot.slane %v2451, 4
    %v2463 = vrot.slane %v2451, 5
    %v2472 = vadd.f32 %v1735, %v2457
    %v2473 = vadd.f32 %v1738, %v2458
    %v2474 = vadd.f32 %v1743, %v2451
    %v2475 = vadd.f32 %v1746, %v2459
    %v2476 = vadd.f32 %v1751, %v2460
    %v2477 = vadd.f32 %v1754, %v2461
    %v2478 = vadd.f32 %v1759, %v2462
    %v2479 = vadd.f32 %v1762, %v2463
    %v2480 = vxor.u32 %v2472, 2147483648
    %v2481 = vxor.u32 %v2473, 2147483648
    %v2482 = vxor.u32 %v2474, 2147483648
    %v2483 = vxor.u32 %v2475, 2147483648
    %v2484 = vxor.u32 %v2476, 2147483648
    %v2485 = vxor.u32 %v2477, 2147483648
    %v2486 = vxor.u32 %v2478, 2147483648
    %v2487 = vxor.u32 %v2479, 2147483648
    %v2488 = vmul.f32 %v2480, 1.442695
    %v2489 = vpow.pop %v2488
    %v2490 = vmul.f32 %v2481, 1.442695
    %v2491 = vpow.pop %v2490
    %v2492 = vmul.f32 %v2482, 1.442695
    %v2493 = vpow.pop %v2492
    %v2494 = vmul.f32 %v2483, 1.442695
    %v2495 = vpow.pop %v2494
    %v2496 = vmul.f32 %v2484, 1.442695
    %v2497 = vpow.pop %v2496
    %v2498 = vmul.f32 %v2485, 1.442695
    %v2499 = vpow.pop %v2498
    %v2500 = vmul.f32 %v2486, 1.442695
    %v2501 = vpow.pop %v2500
    %v2502 = vmul.f32 %v2487, 1.442695
    %v2503 = vpow.pop %v2502
    %v2504 = vadd.f32 %v2489, 1.0
    %v2505 = vadd.f32 %v2491, 1.0
    %v2506 = vadd.f32 %v2493, 1.0
    %v2507 = vadd.f32 %v2495, 1.0
    %v2508 = vadd.f32 %v2497, 1.0
    %v2509 = vadd.f32 %v2499, 1.0
    %v2510 = vadd.f32 %v2501, 1.0
    %v2511 = vadd.f32 %v2503, 1.0
    %v2512 = vrcp.pop %v2504
    %v2513 = vmul.f32 1.0, %v2512
    %v2514 = vrcp.pop %v2505
    %v2515 = vmul.f32 1.0, %v2514
    %v2516 = vrcp.pop %v2506
    %v2517 = vmul.f32 1.0, %v2516
    %v2518 = vrcp.pop %v2507
    %v2519 = vmul.f32 1.0, %v2518
    %v2520 = vrcp.pop %v2508
    %v2521 = vmul.f32 1.0, %v2520
    %v2522 = vrcp.pop %v2509
    %v2523 = vmul.f32 1.0, %v2522
    %v2524 = vrcp.pop %v2510
    %v2525 = vmul.f32 1.0, %v2524
    %v2526 = vrcp.pop %v2511
    %v2527 = vmul.f32 1.0, %v2526
    %v2528 = vtanh.pop %v2472
    %v2529 = vtanh.pop %v2473
    %v2530 = vtanh.pop %v2474
    %v2531 = vtanh.pop %v2475
    %v2532 = vtanh.pop %v2476
    %v2533 = vtanh.pop %v2477
    %v2534 = vtanh.pop %v2478
    %v2535 = vtanh.pop %v2479
    %v2544 = vrot.slane %v2316, 7
    %v2545 = vrot.slane %v2317, 7
    %v2546 = vrot.slane %v2318, 7
    %v2547 = vrot.slane %v2319, 7
    %v2548 = vrot.slane %v2320, 7
    %v2549 = vrot.slane %v2321, 7
    %v2550 = vrot.slane %v2322, 7
    %v2551 = vrot.slane %v2323, 7
    %v2560 = vmul.f32 %v2513, %v2544
    %v2561 = vmul.f32 %v2515, %v2545
    %v2562 = vmul.f32 %v2517, %v2546
    %v2563 = vmul.f32 %v2519, %v2547
    %v2564 = vmul.f32 %v2521, %v2548
    %v2565 = vmul.f32 %v2523, %v2549
    %v2566 = vmul.f32 %v2525, %v2550
    %v2567 = vmul.f32 %v2527, %v2551
    %2576 = vrot.lane.b32.xlu0 %v2528, 32
    %v2577 = vpop.permute.xlu0 %2576
    %2578 = vrot.lane.b32.xlu0 %v2529, 32
    %v2579 = vpop.permute.xlu0 %2578
    %2580 = vrot.lane.b32.xlu0 %v2530, 32
    %v2581 = vpop.permute.xlu0 %2580
    %2582 = vrot.lane.b32.xlu0 %v2531, 32
    %v2583 = vpop.permute.xlu0 %2582
    %2584 = vrot.lane.b32.xlu0 %v2532, 32
    %v2585 = vpop.permute.xlu0 %2584
    %2586 = vrot.lane.b32.xlu0 %v2533, 32
    %v2587 = vpop.permute.xlu0 %2586
    %2588 = vrot.lane.b32.xlu0 %v2534, 32
    %v2589 = vpop.permute.xlu0 %2588
    %2590 = vrot.lane.b32.xlu0 %v2535, 32
    %v2591 = vpop.permute.xlu0 %2590
    %v2600 = vmul.f32 %v2513, %v2577
    %v2601 = vmul.f32 %v2515, %v2579
    %v2602 = vmul.f32 %v2517, %v2581
    %v2603 = vmul.f32 %v2519, %v2583
    %v2604 = vmul.f32 %v2521, %v2585
    %v2605 = vmul.f32 %v2523, %v2587
    %v2606 = vmul.f32 %v2525, %v2589
    %v2607 = vmul.f32 %v2527, %v2591
    %2616 = vrot.lane.b32.xlu0 %v2600, 32
    %v2617 = vpop.permute.xlu0 %2616
    %2618 = vrot.lane.b32.xlu0 %v2601, 32
    %v2619 = vpop.permute.xlu0 %2618
    %2620 = vrot.lane.b32.xlu0 %v2602, 32
    %v2621 = vpop.permute.xlu0 %2620
    %2622 = vrot.lane.b32.xlu0 %v2603, 32
    %v2623 = vpop.permute.xlu0 %2622
    %2624 = vrot.lane.b32.xlu0 %v2604, 32
    %v2625 = vpop.permute.xlu0 %2624
    %2626 = vrot.lane.b32.xlu0 %v2605, 32
    %v2627 = vpop.permute.xlu0 %2626
    %2628 = vrot.lane.b32.xlu0 %v2606, 32
    %v2629 = vpop.permute.xlu0 %2628
    %2630 = vrot.lane.b32.xlu0 %v2607, 32
    %v2631 = vpop.permute.xlu0 %2630
    %v2640 = vadd.f32 %v2560, %v2617
    %v2641 = vadd.f32 %v2561, %v2619
    %v2642 = vadd.f32 %v2562, %v2621
    %v2643 = vadd.f32 %v2563, %v2623
    %v2644 = vadd.f32 %v2564, %v2625
    %v2645 = vadd.f32 %v2565, %v2627
    %v2646 = vadd.f32 %v2566, %v2629
    %v2647 = vadd.f32 %v2567, %v2631
    %v2648 = vtanh.pop %v2640
    %v2649 = vtanh.pop %v2641
    %v2650 = vtanh.pop %v2642
    %v2651 = vtanh.pop %v2643
    %v2652 = vtanh.pop %v2644
    %v2653 = vtanh.pop %v2645
    %v2654 = vtanh.pop %v2646
    %v2655 = vtanh.pop %v2647
    %2664 = vrot.lane.b32.xlu0 %v2648, 32
    %v2665 = vpop.permute.xlu0 %2664
    %2666 = vrot.lane.b32.xlu0 %v2649, 32
    %v2667 = vpop.permute.xlu0 %2666
    %2668 = vrot.lane.b32.xlu0 %v2650, 32
    %v2669 = vpop.permute.xlu0 %2668
    %2670 = vrot.lane.b32.xlu0 %v2651, 32
    %v2671 = vpop.permute.xlu0 %2670
    %2672 = vrot.lane.b32.xlu0 %v2652, 32
    %v2673 = vpop.permute.xlu0 %2672
    %2674 = vrot.lane.b32.xlu0 %v2653, 32
    %v2675 = vpop.permute.xlu0 %2674
    %2676 = vrot.lane.b32.xlu0 %v2654, 32
    %v2677 = vpop.permute.xlu0 %2676
    %2678 = vrot.lane.b32.xlu0 %v2655, 32
    %v2679 = vpop.permute.xlu0 %2678
    %v2688 = vmul.f32 %v2513, %v2665
    %v2689 = vmul.f32 %v2515, %v2667
    %v2690 = vmul.f32 %v2517, %v2669
    %v2691 = vmul.f32 %v2519, %v2671
    %v2692 = vmul.f32 %v2521, %v2673
    %v2693 = vmul.f32 %v2523, %v2675
    %v2694 = vmul.f32 %v2525, %v2677
    %v2695 = vmul.f32 %v2527, %v2679
    %v2696 = vpack.c.bf16 %v2688, %v2688
    %v2697 = vpack.c.bf16 %v2689, %v2689
    %v2698 = vpack.c.bf16 %v2690, %v2690
    %v2699 = vpack.c.bf16 %v2691, %v2691
    %v2700 = vpack.c.bf16 %v2692, %v2692
    %v2701 = vpack.c.bf16 %v2693, %v2693
    %v2702 = vpack.c.bf16 %v2694, %v2694
    %v2703 = vpack.c.bf16 %v2695, %v2695
    %v2712 = vunpack.c.l.b16 %v2696
    %v2713 = vunpack.c.l.b16 %v2697
    %v2714 = vunpack.c.l.b16 %v2698
    %v2715 = vunpack.c.l.b16 %v2699
    %v2716 = vunpack.c.l.b16 %v2700
    %v2717 = vunpack.c.l.b16 %v2701
    %v2718 = vunpack.c.l.b16 %v2702
    %v2719 = vunpack.c.l.b16 %v2703
    %v2720 = vrot.slane %v2712, 2
    %v2721 = vrot.slane %v2713, 1
    %v2722 = vsel %vm2066, %v2721, %v2720
    %v2723 = vsel %vm2069, %v2714, %v2722
    %v2724 = vrot.slane %v2715, 7
    %v2725 = vsel %vm2072, %v2724, %v2723
    %v2726 = vrot.slane %v2716, 6
    %v2727 = vsel %vm2075, %v2726, %v2725
    %v2728 = vrot.slane %v2717, 5
    %v2729 = vsel %vm2078, %v2728, %v2727
    %v2730 = vrot.slane %v2718, 4
    %v2731 = vsel %vm2081, %v2730, %v2729
    %v2732 = vrot.slane %v2719, 3
    %v2733 = vsel %vm2084, %v2732, %v2731
    %v2734 = vpack.c.b16 %v2733, %v2733
    %2735 = vrot.lane.b32.xlu0 %v2734, 64
    %v2736 = vpop.permute.xlu0 %2735
    %v2738 = vsel %vm1781, %v2736, 0
    %2740 = vmatprep.subr.bf16.mxu0 0
    %2741 = vmatpush1.bf16.msra.mxu0 0
    %2742 = vmatprep.subr.bf16.mxu0 0
    %2743 = vmatpush1.bf16.msra.mxu0 0
    %2744 = vmatprep.subr.bf16.mxu0 0
    %2745 = vmatpush1.bf16.msra.mxu0 0
    %2746 = vmatprep.subr.bf16.mxu0 0
    %2747 = vmatpush1.bf16.msra.mxu0 0
    %2748 = vmatprep.subr.bf16.mxu0 0
    %2749 = vmatpush1.bf16.msra.mxu0 0
    %2750 = vmatprep.subr.bf16.mxu0 0
    %2751 = vmatpush1.bf16.msra.mxu0 0
    %2752 = vmatprep.subr.bf16.mxu0 0
    %2753 = vmatpush1.bf16.msra.mxu0 %v1778
    %2754 = vmatprep.subr.bf16.mxu0 0
    %2755 = vmatpush1.bf16.msra.mxu0 %v1777
    %2756 = vmatprep.subr.bf16.mxu0 0
    %2757 = vmatpush2.bf16.msra.mxu0 0
    %2758 = vmatprep.subr.bf16.mxu0 0
    %2759 = vmatpush2.bf16.msra.mxu0 0
    %2760 = vmatprep.subr.bf16.mxu0 0
    %2761 = vmatpush2.bf16.msra.mxu0 0
    %2762 = vmatprep.subr.bf16.mxu0 0
    %2763 = vmatpush2.bf16.msra.mxu0 0
    %2764 = vmatprep.subr.bf16.mxu0 0
    %2765 = vmatpush2.bf16.msra.mxu0 0
    %2766 = vmatprep.subr.bf16.mxu0 0
    %2767 = vmatpush2.bf16.msra.mxu0 0
    %2768 = vmatprep.subr.bf16.mxu0 0
    %2769 = vmatpush2.bf16.msra.mxu0 0
    %2770 = vmatprep.subr.bf16.mxu0 0
    %2771 = vmatpush2.bf16.msra.mxu0 0
    %2772 = vmatprep.mubr.bf16.mxu0 0
    %2773 = vmatmul.mubr.bf16.gmra.mxu0 %v2738
    %v2774 = vpop.f32.mrf.mxu0
    %v2775 = vadd.f32 0.0, %v2774
    %v2776 = vpop.f32.mrf.mxu0
    %v2777 = vpop.f32.mrf.mxu0
    %v2778 = vpop.f32.mrf.mxu0
    %2779 = vdwg.mxu0
    %v2781 = vrot.slane %v2775, 5
    %v2782 = vrot.slane %v2775, 6
    %v2783 = vrot.slane %v2775, 7
    %v2784 = vrot.slane %v2775, 1
    %v2785 = vrot.slane %v2775, 2
    %v2786 = vrot.slane %v2775, 3
    %v2787 = vrot.slane %v2775, 4
    %v2796 = vadd.f32 %v1735, %v2781
    %v2797 = vadd.f32 %v1738, %v2782
    %v2798 = vadd.f32 %v1743, %v2783
    %v2799 = vadd.f32 %v1746, %v2775
    %v2800 = vadd.f32 %v1751, %v2784
    %v2801 = vadd.f32 %v1754, %v2785
    %v2802 = vadd.f32 %v1759, %v2786
    %v2803 = vadd.f32 %v1762, %v2787
    %v2804 = vxor.u32 %v2796, 2147483648
    %v2805 = vxor.u32 %v2797, 2147483648
    %v2806 = vxor.u32 %v2798, 2147483648
    %v2807 = vxor.u32 %v2799, 2147483648
    %v2808 = vxor.u32 %v2800, 2147483648
    %v2809 = vxor.u32 %v2801, 2147483648
    %v2810 = vxor.u32 %v2802, 2147483648
    %v2811 = vxor.u32 %v2803, 2147483648
    %v2812 = vmul.f32 %v2804, 1.442695
    %v2813 = vpow.pop %v2812
    %v2814 = vmul.f32 %v2805, 1.442695
    %v2815 = vpow.pop %v2814
    %v2816 = vmul.f32 %v2806, 1.442695
    %v2817 = vpow.pop %v2816
    %v2818 = vmul.f32 %v2807, 1.442695
    %v2819 = vpow.pop %v2818
    %v2820 = vmul.f32 %v2808, 1.442695
    %v2821 = vpow.pop %v2820
    %v2822 = vmul.f32 %v2809, 1.442695
    %v2823 = vpow.pop %v2822
    %v2824 = vmul.f32 %v2810, 1.442695
    %v2825 = vpow.pop %v2824
    %v2826 = vmul.f32 %v2811, 1.442695
    %v2827 = vpow.pop %v2826
    %v2828 = vadd.f32 %v2813, 1.0
    %v2829 = vadd.f32 %v2815, 1.0
    %v2830 = vadd.f32 %v2817, 1.0
    %v2831 = vadd.f32 %v2819, 1.0
    %v2832 = vadd.f32 %v2821, 1.0
    %v2833 = vadd.f32 %v2823, 1.0
    %v2834 = vadd.f32 %v2825, 1.0
    %v2835 = vadd.f32 %v2827, 1.0
    %v2836 = vrcp.pop %v2828
    %v2837 = vmul.f32 1.0, %v2836
    %v2838 = vrcp.pop %v2829
    %v2839 = vmul.f32 1.0, %v2838
    %v2840 = vrcp.pop %v2830
    %v2841 = vmul.f32 1.0, %v2840
    %v2842 = vrcp.pop %v2831
    %v2843 = vmul.f32 1.0, %v2842
    %v2844 = vrcp.pop %v2832
    %v2845 = vmul.f32 1.0, %v2844
    %v2846 = vrcp.pop %v2833
    %v2847 = vmul.f32 1.0, %v2846
    %v2848 = vrcp.pop %v2834
    %v2849 = vmul.f32 1.0, %v2848
    %v2850 = vrcp.pop %v2835
    %v2851 = vmul.f32 1.0, %v2850
    %v2852 = vtanh.pop %v2796
    %v2853 = vtanh.pop %v2797
    %v2854 = vtanh.pop %v2798
    %v2855 = vtanh.pop %v2799
    %v2856 = vtanh.pop %v2800
    %v2857 = vtanh.pop %v2801
    %v2858 = vtanh.pop %v2802
    %v2859 = vtanh.pop %v2803
    %v2868 = vrot.slane %v2640, 7
    %v2869 = vrot.slane %v2641, 7
    %v2870 = vrot.slane %v2642, 7
    %v2871 = vrot.slane %v2643, 7
    %v2872 = vrot.slane %v2644, 7
    %v2873 = vrot.slane %v2645, 7
    %v2874 = vrot.slane %v2646, 7
    %v2875 = vrot.slane %v2647, 7
    %v2884 = vmul.f32 %v2837, %v2868
    %v2885 = vmul.f32 %v2839, %v2869
    %v2886 = vmul.f32 %v2841, %v2870
    %v2887 = vmul.f32 %v2843, %v2871
    %v2888 = vmul.f32 %v2845, %v2872
    %v2889 = vmul.f32 %v2847, %v2873
    %v2890 = vmul.f32 %v2849, %v2874
    %v2891 = vmul.f32 %v2851, %v2875
    %2900 = vrot.lane.b32.xlu0 %v2852, 32
    %v2901 = vpop.permute.xlu0 %2900
    %2902 = vrot.lane.b32.xlu0 %v2853, 32
    %v2903 = vpop.permute.xlu0 %2902
    %2904 = vrot.lane.b32.xlu0 %v2854, 32
    %v2905 = vpop.permute.xlu0 %2904
    %2906 = vrot.lane.b32.xlu0 %v2855, 32
    %v2907 = vpop.permute.xlu0 %2906
    %2908 = vrot.lane.b32.xlu0 %v2856, 32
    %v2909 = vpop.permute.xlu0 %2908
    %2910 = vrot.lane.b32.xlu0 %v2857, 32
    %v2911 = vpop.permute.xlu0 %2910
    %2912 = vrot.lane.b32.xlu0 %v2858, 32
    %v2913 = vpop.permute.xlu0 %2912
    %2914 = vrot.lane.b32.xlu0 %v2859, 32
    %v2915 = vpop.permute.xlu0 %2914
    %v2924 = vmul.f32 %v2837, %v2901
    %v2925 = vmul.f32 %v2839, %v2903
    %v2926 = vmul.f32 %v2841, %v2905
    %v2927 = vmul.f32 %v2843, %v2907
    %v2928 = vmul.f32 %v2845, %v2909
    %v2929 = vmul.f32 %v2847, %v2911
    %v2930 = vmul.f32 %v2849, %v2913
    %v2931 = vmul.f32 %v2851, %v2915
    %2940 = vrot.lane.b32.xlu0 %v2924, 32
    %v2941 = vpop.permute.xlu0 %2940
    %2942 = vrot.lane.b32.xlu0 %v2925, 32
    %v2943 = vpop.permute.xlu0 %2942
    %2944 = vrot.lane.b32.xlu0 %v2926, 32
    %v2945 = vpop.permute.xlu0 %2944
    %2946 = vrot.lane.b32.xlu0 %v2927, 32
    %v2947 = vpop.permute.xlu0 %2946
    %2948 = vrot.lane.b32.xlu0 %v2928, 32
    %v2949 = vpop.permute.xlu0 %2948
    %2950 = vrot.lane.b32.xlu0 %v2929, 32
    %v2951 = vpop.permute.xlu0 %2950
    %2952 = vrot.lane.b32.xlu0 %v2930, 32
    %v2953 = vpop.permute.xlu0 %2952
    %2954 = vrot.lane.b32.xlu0 %v2931, 32
    %v2955 = vpop.permute.xlu0 %2954
    %v2964 = vadd.f32 %v2884, %v2941
    %v2965 = vadd.f32 %v2885, %v2943
    %v2966 = vadd.f32 %v2886, %v2945
    %v2967 = vadd.f32 %v2887, %v2947
    %v2968 = vadd.f32 %v2888, %v2949
    %v2969 = vadd.f32 %v2889, %v2951
    %v2970 = vadd.f32 %v2890, %v2953
    %v2971 = vadd.f32 %v2891, %v2955
    %v2972 = vtanh.pop %v2964
    %v2973 = vtanh.pop %v2965
    %v2974 = vtanh.pop %v2966
    %v2975 = vtanh.pop %v2967
    %v2976 = vtanh.pop %v2968
    %v2977 = vtanh.pop %v2969
    %v2978 = vtanh.pop %v2970
    %v2979 = vtanh.pop %v2971
    %2988 = vrot.lane.b32.xlu0 %v2972, 32
    %v2989 = vpop.permute.xlu0 %2988
    %2990 = vrot.lane.b32.xlu0 %v2973, 32
    %v2991 = vpop.permute.xlu0 %2990
    %2992 = vrot.lane.b32.xlu0 %v2974, 32
    %v2993 = vpop.permute.xlu0 %2992
    %2994 = vrot.lane.b32.xlu0 %v2975, 32
    %v2995 = vpop.permute.xlu0 %2994
    %2996 = vrot.lane.b32.xlu0 %v2976, 32
    %v2997 = vpop.permute.xlu0 %2996
    %2998 = vrot.lane.b32.xlu0 %v2977, 32
    %v2999 = vpop.permute.xlu0 %2998
    %3000 = vrot.lane.b32.xlu0 %v2978, 32
    %v3001 = vpop.permute.xlu0 %3000
    %3002 = vrot.lane.b32.xlu0 %v2979, 32
    %v3003 = vpop.permute.xlu0 %3002
    %v3012 = vmul.f32 %v2837, %v2989
    %v3013 = vmul.f32 %v2839, %v2991
    %v3014 = vmul.f32 %v2841, %v2993
    %v3015 = vmul.f32 %v2843, %v2995
    %v3016 = vmul.f32 %v2845, %v2997
    %v3017 = vmul.f32 %v2847, %v2999
    %v3018 = vmul.f32 %v2849, %v3001
    %v3019 = vmul.f32 %v2851, %v3003
    %v3020 = vpack.c.bf16 %v3012, %v3012
    %v3021 = vpack.c.bf16 %v3013, %v3013
    %v3022 = vpack.c.bf16 %v3014, %v3014
    %v3023 = vpack.c.bf16 %v3015, %v3015
    %v3024 = vpack.c.bf16 %v3016, %v3016
    %v3025 = vpack.c.bf16 %v3017, %v3017
    %v3026 = vpack.c.bf16 %v3018, %v3018
    %v3027 = vpack.c.bf16 %v3019, %v3019
    %v3036 = vunpack.c.l.b16 %v3020
    %v3037 = vunpack.c.l.b16 %v3021
    %v3038 = vunpack.c.l.b16 %v3022
    %v3039 = vunpack.c.l.b16 %v3023
    %v3040 = vunpack.c.l.b16 %v3024
    %v3041 = vunpack.c.l.b16 %v3025
    %v3042 = vunpack.c.l.b16 %v3026
    %v3043 = vunpack.c.l.b16 %v3027
    %v3044 = vrot.slane %v3036, 3
    %v3045 = vrot.slane %v3037, 2
    %v3046 = vsel %vm2066, %v3045, %v3044
    %v3047 = vrot.slane %v3038, 1
    %v3048 = vsel %vm2069, %v3047, %v3046
    %v3049 = vsel %vm2072, %v3039, %v3048
    %v3050 = vrot.slane %v3040, 7
    %v3051 = vsel %vm2075, %v3050, %v3049
    %v3052 = vrot.slane %v3041, 6
    %v3053 = vsel %vm2078, %v3052, %v3051
    %v3054 = vrot.slane %v3042, 5
    %v3055 = vsel %vm2081, %v3054, %v3053
    %v3056 = vrot.slane %v3043, 4
    %v3057 = vsel %vm2084, %v3056, %v3055
    %v3058 = vpack.c.b16 %v3057, %v3057
    %3059 = vrot.lane.b32.xlu0 %v3058, 64
    %v3060 = vpop.permute.xlu0 %3059
    %v3062 = vsel %vm1781, %v3060, 0
    %3064 = vmatprep.subr.bf16.mxu0 0
    %3065 = vmatpush1.bf16.msra.mxu0 0
    %3066 = vmatprep.subr.bf16.mxu0 0
    %3067 = vmatpush1.bf16.msra.mxu0 0
    %3068 = vmatprep.subr.bf16.mxu0 0
    %3069 = vmatpush1.bf16.msra.mxu0 0
    %3070 = vmatprep.subr.bf16.mxu0 0
    %3071 = vmatpush1.bf16.msra.mxu0 0
    %3072 = vmatprep.subr.bf16.mxu0 0
    %3073 = vmatpush1.bf16.msra.mxu0 0
    %3074 = vmatprep.subr.bf16.mxu0 0
    %3075 = vmatpush1.bf16.msra.mxu0 0
    %3076 = vmatprep.subr.bf16.mxu0 0
    %3077 = vmatpush1.bf16.msra.mxu0 %v1778
    %3078 = vmatprep.subr.bf16.mxu0 0
    %3079 = vmatpush1.bf16.msra.mxu0 %v1777
    %3080 = vmatprep.subr.bf16.mxu0 0
    %3081 = vmatpush2.bf16.msra.mxu0 0
    %3082 = vmatprep.subr.bf16.mxu0 0
    %3083 = vmatpush2.bf16.msra.mxu0 0
    %3084 = vmatprep.subr.bf16.mxu0 0
    %3085 = vmatpush2.bf16.msra.mxu0 0
    %3086 = vmatprep.subr.bf16.mxu0 0
    %3087 = vmatpush2.bf16.msra.mxu0 0
    %3088 = vmatprep.subr.bf16.mxu0 0
    %3089 = vmatpush2.bf16.msra.mxu0 0
    %3090 = vmatprep.subr.bf16.mxu0 0
    %3091 = vmatpush2.bf16.msra.mxu0 0
    %3092 = vmatprep.subr.bf16.mxu0 0
    %3093 = vmatpush2.bf16.msra.mxu0 0
    %3094 = vmatprep.subr.bf16.mxu0 0
    %3095 = vmatpush2.bf16.msra.mxu0 0
    %3096 = vmatprep.mubr.bf16.mxu0 0
    %3097 = vmatmul.mubr.bf16.gmra.mxu0 %v3062
    %v3098 = vpop.f32.mrf.mxu0
    %v3099 = vadd.f32 0.0, %v3098
    %v3100 = vpop.f32.mrf.mxu0
    %v3101 = vpop.f32.mrf.mxu0
    %v3102 = vpop.f32.mrf.mxu0
    %3103 = vdwg.mxu0
    %v3105 = vrot.slane %v3099, 4
    %v3106 = vrot.slane %v3099, 5
    %v3107 = vrot.slane %v3099, 6
    %v3108 = vrot.slane %v3099, 7
    %v3109 = vrot.slane %v3099, 1
    %v3110 = vrot.slane %v3099, 2
    %v3111 = vrot.slane %v3099, 3
    %v3120 = vadd.f32 %v1735, %v3105
    %v3121 = vadd.f32 %v1738, %v3106
    %v3122 = vadd.f32 %v1743, %v3107
    %v3123 = vadd.f32 %v1746, %v3108
    %v3124 = vadd.f32 %v1751, %v3099
    %v3125 = vadd.f32 %v1754, %v3109
    %v3126 = vadd.f32 %v1759, %v3110
    %v3127 = vadd.f32 %v1762, %v3111
    %v3128 = vxor.u32 %v3120, 2147483648
    %v3129 = vxor.u32 %v3121, 2147483648
    %v3130 = vxor.u32 %v3122, 2147483648
    %v3131 = vxor.u32 %v3123, 2147483648
    %v3132 = vxor.u32 %v3124, 2147483648
    %v3133 = vxor.u32 %v3125, 2147483648
    %v3134 = vxor.u32 %v3126, 2147483648
    %v3135 = vxor.u32 %v3127, 2147483648
    %v3136 = vmul.f32 %v3128, 1.442695
    %v3137 = vpow.pop %v3136
    %v3138 = vmul.f32 %v3129, 1.442695
    %v3139 = vpow.pop %v3138
    %v3140 = vmul.f32 %v3130, 1.442695
    %v3141 = vpow.pop %v3140
    %v3142 = vmul.f32 %v3131, 1.442695
    %v3143 = vpow.pop %v3142
    %v3144 = vmul.f32 %v3132, 1.442695
    %v3145 = vpow.pop %v3144
    %v3146 = vmul.f32 %v3133, 1.442695
    %v3147 = vpow.pop %v3146
    %v3148 = vmul.f32 %v3134, 1.442695
    %v3149 = vpow.pop %v3148
    %v3150 = vmul.f32 %v3135, 1.442695
    %v3151 = vpow.pop %v3150
    %v3152 = vadd.f32 %v3137, 1.0
    %v3153 = vadd.f32 %v3139, 1.0
    %v3154 = vadd.f32 %v3141, 1.0
    %v3155 = vadd.f32 %v3143, 1.0
    %v3156 = vadd.f32 %v3145, 1.0
    %v3157 = vadd.f32 %v3147, 1.0
    %v3158 = vadd.f32 %v3149, 1.0
    %v3159 = vadd.f32 %v3151, 1.0
    %v3160 = vrcp.pop %v3152
    %v3161 = vmul.f32 1.0, %v3160
    %v3162 = vrcp.pop %v3153
    %v3163 = vmul.f32 1.0, %v3162
    %v3164 = vrcp.pop %v3154
    %v3165 = vmul.f32 1.0, %v3164
    %v3166 = vrcp.pop %v3155
    %v3167 = vmul.f32 1.0, %v3166
    %v3168 = vrcp.pop %v3156
    %v3169 = vmul.f32 1.0, %v3168
    %v3170 = vrcp.pop %v3157
    %v3171 = vmul.f32 1.0, %v3170
    %v3172 = vrcp.pop %v3158
    %v3173 = vmul.f32 1.0, %v3172
    %v3174 = vrcp.pop %v3159
    %v3175 = vmul.f32 1.0, %v3174
    %v3176 = vtanh.pop %v3120
    %v3177 = vtanh.pop %v3121
    %v3178 = vtanh.pop %v3122
    %v3179 = vtanh.pop %v3123
    %v3180 = vtanh.pop %v3124
    %v3181 = vtanh.pop %v3125
    %v3182 = vtanh.pop %v3126
    %v3183 = vtanh.pop %v3127
    %v3192 = vrot.slane %v2964, 7
    %v3193 = vrot.slane %v2965, 7
    %v3194 = vrot.slane %v2966, 7
    %v3195 = vrot.slane %v2967, 7
    %v3196 = vrot.slane %v2968, 7
    %v3197 = vrot.slane %v2969, 7
    %v3198 = vrot.slane %v2970, 7
    %v3199 = vrot.slane %v2971, 7
    %v3208 = vmul.f32 %v3161, %v3192
    %v3209 = vmul.f32 %v3163, %v3193
    %v3210 = vmul.f32 %v3165, %v3194
    %v3211 = vmul.f32 %v3167, %v3195
    %v3212 = vmul.f32 %v3169, %v3196
    %v3213 = vmul.f32 %v3171, %v3197
    %v3214 = vmul.f32 %v3173, %v3198
    %v3215 = vmul.f32 %v3175, %v3199
    %3224 = vrot.lane.b32.xlu0 %v3176, 32
    %v3225 = vpop.permute.xlu0 %3224
    %3226 = vrot.lane.b32.xlu0 %v3177, 32
    %v3227 = vpop.permute.xlu0 %3226
    %3228 = vrot.lane.b32.xlu0 %v3178, 32
    %v3229 = vpop.permute.xlu0 %3228
    %3230 = vrot.lane.b32.xlu0 %v3179, 32
    %v3231 = vpop.permute.xlu0 %3230
    %3232 = vrot.lane.b32.xlu0 %v3180, 32
    %v3233 = vpop.permute.xlu0 %3232
    %3234 = vrot.lane.b32.xlu0 %v3181, 32
    %v3235 = vpop.permute.xlu0 %3234
    %3236 = vrot.lane.b32.xlu0 %v3182, 32
    %v3237 = vpop.permute.xlu0 %3236
    %3238 = vrot.lane.b32.xlu0 %v3183, 32
    %v3239 = vpop.permute.xlu0 %3238
    %v3248 = vmul.f32 %v3161, %v3225
    %v3249 = vmul.f32 %v3163, %v3227
    %v3250 = vmul.f32 %v3165, %v3229
    %v3251 = vmul.f32 %v3167, %v3231
    %v3252 = vmul.f32 %v3169, %v3233
    %v3253 = vmul.f32 %v3171, %v3235
    %v3254 = vmul.f32 %v3173, %v3237
    %v3255 = vmul.f32 %v3175, %v3239
    %3264 = vrot.lane.b32.xlu0 %v3248, 32
    %v3265 = vpop.permute.xlu0 %3264
    %3266 = vrot.lane.b32.xlu0 %v3249, 32
    %v3267 = vpop.permute.xlu0 %3266
    %3268 = vrot.lane.b32.xlu0 %v3250, 32
    %v3269 = vpop.permute.xlu0 %3268
    %3270 = vrot.lane.b32.xlu0 %v3251, 32
    %v3271 = vpop.permute.xlu0 %3270
    %3272 = vrot.lane.b32.xlu0 %v3252, 32
    %v3273 = vpop.permute.xlu0 %3272
    %3274 = vrot.lane.b32.xlu0 %v3253, 32
    %v3275 = vpop.permute.xlu0 %3274
    %3276 = vrot.lane.b32.xlu0 %v3254, 32
    %v3277 = vpop.permute.xlu0 %3276
    %3278 = vrot.lane.b32.xlu0 %v3255, 32
    %v3279 = vpop.permute.xlu0 %3278
    %v3288 = vadd.f32 %v3208, %v3265
    %v3289 = vadd.f32 %v3209, %v3267
    %v3290 = vadd.f32 %v3210, %v3269
    %v3291 = vadd.f32 %v3211, %v3271
    %v3292 = vadd.f32 %v3212, %v3273
    %v3293 = vadd.f32 %v3213, %v3275
    %v3294 = vadd.f32 %v3214, %v3277
    %v3295 = vadd.f32 %v3215, %v3279
    %v3296 = vtanh.pop %v3288
    %v3297 = vtanh.pop %v3289
    %v3298 = vtanh.pop %v3290
    %v3299 = vtanh.pop %v3291
    %v3300 = vtanh.pop %v3292
    %v3301 = vtanh.pop %v3293
    %v3302 = vtanh.pop %v3294
    %v3303 = vtanh.pop %v3295
    %3312 = vrot.lane.b32.xlu0 %v3296, 32
    %v3313 = vpop.permute.xlu0 %3312
    %3314 = vrot.lane.b32.xlu0 %v3297, 32
    %v3315 = vpop.permute.xlu0 %3314
    %3316 = vrot.lane.b32.xlu0 %v3298, 32
    %v3317 = vpop.permute.xlu0 %3316
    %3318 = vrot.lane.b32.xlu0 %v3299, 32
    %v3319 = vpop.permute.xlu0 %3318
    %3320 = vrot.lane.b32.xlu0 %v3300, 32
    %v3321 = vpop.permute.xlu0 %3320
    %3322 = vrot.lane.b32.xlu0 %v3301, 32
    %v3323 = vpop.permute.xlu0 %3322
    %3324 = vrot.lane.b32.xlu0 %v3302, 32
    %v3325 = vpop.permute.xlu0 %3324
    %3326 = vrot.lane.b32.xlu0 %v3303, 32
    %v3327 = vpop.permute.xlu0 %3326
    %v3336 = vmul.f32 %v3161, %v3313
    %v3337 = vmul.f32 %v3163, %v3315
    %v3338 = vmul.f32 %v3165, %v3317
    %v3339 = vmul.f32 %v3167, %v3319
    %v3340 = vmul.f32 %v3169, %v3321
    %v3341 = vmul.f32 %v3171, %v3323
    %v3342 = vmul.f32 %v3173, %v3325
    %v3343 = vmul.f32 %v3175, %v3327
    %v3344 = vpack.c.bf16 %v3336, %v3336
    %v3345 = vpack.c.bf16 %v3337, %v3337
    %v3346 = vpack.c.bf16 %v3338, %v3338
    %v3347 = vpack.c.bf16 %v3339, %v3339
    %v3348 = vpack.c.bf16 %v3340, %v3340
    %v3349 = vpack.c.bf16 %v3341, %v3341
    %v3350 = vpack.c.bf16 %v3342, %v3342
    %v3351 = vpack.c.bf16 %v3343, %v3343
    %v3360 = vunpack.c.l.b16 %v3344
    %v3361 = vunpack.c.l.b16 %v3345
    %v3362 = vunpack.c.l.b16 %v3346
    %v3363 = vunpack.c.l.b16 %v3347
    %v3364 = vunpack.c.l.b16 %v3348
    %v3365 = vunpack.c.l.b16 %v3349
    %v3366 = vunpack.c.l.b16 %v3350
    %v3367 = vunpack.c.l.b16 %v3351
    %v3368 = vrot.slane %v3360, 4
    %v3369 = vrot.slane %v3361, 3
    %v3370 = vsel %vm2066, %v3369, %v3368
    %v3371 = vrot.slane %v3362, 2
    %v3372 = vsel %vm2069, %v3371, %v3370
    %v3373 = vrot.slane %v3363, 1
    %v3374 = vsel %vm2072, %v3373, %v3372
    %v3375 = vsel %vm2075, %v3364, %v3374
    %v3376 = vrot.slane %v3365, 7
    %v3377 = vsel %vm2078, %v3376, %v3375
    %v3378 = vrot.slane %v3366, 6
    %v3379 = vsel %vm2081, %v3378, %v3377
    %v3380 = vrot.slane %v3367, 5
    %v3381 = vsel %vm2084, %v3380, %v3379
    %v3382 = vpack.c.b16 %v3381, %v3381
    %3383 = vrot.lane.b32.xlu0 %v3382, 64
    %v3384 = vpop.permute.xlu0 %3383
    %v3386 = vsel %vm1781, %v3384, 0
    %3388 = vmatprep.subr.bf16.mxu0 0
    %3389 = vmatpush1.bf16.msra.mxu0 0
    %3390 = vmatprep.subr.bf16.mxu0 0
    %3391 = vmatpush1.bf16.msra.mxu0 0
    %3392 = vmatprep.subr.bf16.mxu0 0
    %3393 = vmatpush1.bf16.msra.mxu0 0
    %3394 = vmatprep.subr.bf16.mxu0 0
    %3395 = vmatpush1.bf16.msra.mxu0 0
    %3396 = vmatprep.subr.bf16.mxu0 0
    %3397 = vmatpush1.bf16.msra.mxu0 0
    %3398 = vmatprep.subr.bf16.mxu0 0
    %3399 = vmatpush1.bf16.msra.mxu0 0
    %3400 = vmatprep.subr.bf16.mxu0 0
    %3401 = vmatpush1.bf16.msra.mxu0 %v1778
    %3402 = vmatprep.subr.bf16.mxu0 0
    %3403 = vmatpush1.bf16.msra.mxu0 %v1777
    %3404 = vmatprep.subr.bf16.mxu0 0
    %3405 = vmatpush2.bf16.msra.mxu0 0
    %3406 = vmatprep.subr.bf16.mxu0 0
    %3407 = vmatpush2.bf16.msra.mxu0 0
    %3408 = vmatprep.subr.bf16.mxu0 0
    %3409 = vmatpush2.bf16.msra.mxu0 0
    %3410 = vmatprep.subr.bf16.mxu0 0
    %3411 = vmatpush2.bf16.msra.mxu0 0
    %3412 = vmatprep.subr.bf16.mxu0 0
    %3413 = vmatpush2.bf16.msra.mxu0 0
    %3414 = vmatprep.subr.bf16.mxu0 0
    %3415 = vmatpush2.bf16.msra.mxu0 0
    %3416 = vmatprep.subr.bf16.mxu0 0
    %3417 = vmatpush2.bf16.msra.mxu0 0
    %3418 = vmatprep.subr.bf16.mxu0 0
    %3419 = vmatpush2.bf16.msra.mxu0 0
    %3420 = vmatprep.mubr.bf16.mxu0 0
    %3421 = vmatmul.mubr.bf16.gmra.mxu0 %v3386
    %v3422 = vpop.f32.mrf.mxu0
    %v3423 = vadd.f32 0.0, %v3422
    %v3424 = vpop.f32.mrf.mxu0
    %v3425 = vpop.f32.mrf.mxu0
    %v3426 = vpop.f32.mrf.mxu0
    %3427 = vdwg.mxu0
    %v3429 = vrot.slane %v3423, 3
    %v3430 = vrot.slane %v3423, 4
    %v3431 = vrot.slane %v3423, 5
    %v3432 = vrot.slane %v3423, 6
    %v3433 = vrot.slane %v3423, 7
    %v3434 = vrot.slane %v3423, 1
    %v3435 = vrot.slane %v3423, 2
    %v3444 = vadd.f32 %v1735, %v3429
    %v3445 = vadd.f32 %v1738, %v3430
    %v3446 = vadd.f32 %v1743, %v3431
    %v3447 = vadd.f32 %v1746, %v3432
    %v3448 = vadd.f32 %v1751, %v3433
    %v3449 = vadd.f32 %v1754, %v3423
    %v3450 = vadd.f32 %v1759, %v3434
    %v3451 = vadd.f32 %v1762, %v3435
    %v3452 = vxor.u32 %v3444, 2147483648
    %v3453 = vxor.u32 %v3445, 2147483648
    %v3454 = vxor.u32 %v3446, 2147483648
    %v3455 = vxor.u32 %v3447, 2147483648
    %v3456 = vxor.u32 %v3448, 2147483648
    %v3457 = vxor.u32 %v3449, 2147483648
    %v3458 = vxor.u32 %v3450, 2147483648
    %v3459 = vxor.u32 %v3451, 2147483648
    %v3460 = vmul.f32 %v3452, 1.442695
    %v3461 = vpow.pop %v3460
    %v3462 = vmul.f32 %v3453, 1.442695
    %v3463 = vpow.pop %v3462
    %v3464 = vmul.f32 %v3454, 1.442695
    %v3465 = vpow.pop %v3464
    %v3466 = vmul.f32 %v3455, 1.442695
    %v3467 = vpow.pop %v3466
    %v3468 = vmul.f32 %v3456, 1.442695
    %v3469 = vpow.pop %v3468
    %v3470 = vmul.f32 %v3457, 1.442695
    %v3471 = vpow.pop %v3470
    %v3472 = vmul.f32 %v3458, 1.442695
    %v3473 = vpow.pop %v3472
    %v3474 = vmul.f32 %v3459, 1.442695
    %v3475 = vpow.pop %v3474
    %v3476 = vadd.f32 %v3461, 1.0
    %v3477 = vadd.f32 %v3463, 1.0
    %v3478 = vadd.f32 %v3465, 1.0
    %v3479 = vadd.f32 %v3467, 1.0
    %v3480 = vadd.f32 %v3469, 1.0
    %v3481 = vadd.f32 %v3471, 1.0
    %v3482 = vadd.f32 %v3473, 1.0
    %v3483 = vadd.f32 %v3475, 1.0
    %v3484 = vrcp.pop %v3476
    %v3485 = vmul.f32 1.0, %v3484
    %v3486 = vrcp.pop %v3477
    %v3487 = vmul.f32 1.0, %v3486
    %v3488 = vrcp.pop %v3478
    %v3489 = vmul.f32 1.0, %v3488
    %v3490 = vrcp.pop %v3479
    %v3491 = vmul.f32 1.0, %v3490
    %v3492 = vrcp.pop %v3480
    %v3493 = vmul.f32 1.0, %v3492
    %v3494 = vrcp.pop %v3481
    %v3495 = vmul.f32 1.0, %v3494
    %v3496 = vrcp.pop %v3482
    %v3497 = vmul.f32 1.0, %v3496
    %v3498 = vrcp.pop %v3483
    %v3499 = vmul.f32 1.0, %v3498
    %v3500 = vtanh.pop %v3444
    %v3501 = vtanh.pop %v3445
    %v3502 = vtanh.pop %v3446
    %v3503 = vtanh.pop %v3447
    %v3504 = vtanh.pop %v3448
    %v3505 = vtanh.pop %v3449
    %v3506 = vtanh.pop %v3450
    %v3507 = vtanh.pop %v3451
    %v3516 = vrot.slane %v3288, 7
    %v3517 = vrot.slane %v3289, 7
    %v3518 = vrot.slane %v3290, 7
    %v3519 = vrot.slane %v3291, 7
    %v3520 = vrot.slane %v3292, 7
    %v3521 = vrot.slane %v3293, 7
    %v3522 = vrot.slane %v3294, 7
    %v3523 = vrot.slane %v3295, 7
    %v3532 = vmul.f32 %v3485, %v3516
    %v3533 = vmul.f32 %v3487, %v3517
    %v3534 = vmul.f32 %v3489, %v3518
    %v3535 = vmul.f32 %v3491, %v3519
    %v3536 = vmul.f32 %v3493, %v3520
    %v3537 = vmul.f32 %v3495, %v3521
    %v3538 = vmul.f32 %v3497, %v3522
    %v3539 = vmul.f32 %v3499, %v3523
    %3548 = vrot.lane.b32.xlu0 %v3500, 32
    %v3549 = vpop.permute.xlu0 %3548
    %3550 = vrot.lane.b32.xlu0 %v3501, 32
    %v3551 = vpop.permute.xlu0 %3550
    %3552 = vrot.lane.b32.xlu0 %v3502, 32
    %v3553 = vpop.permute.xlu0 %3552
    %3554 = vrot.lane.b32.xlu0 %v3503, 32
    %v3555 = vpop.permute.xlu0 %3554
    %3556 = vrot.lane.b32.xlu0 %v3504, 32
    %v3557 = vpop.permute.xlu0 %3556
    %3558 = vrot.lane.b32.xlu0 %v3505, 32
    %v3559 = vpop.permute.xlu0 %3558
    %3560 = vrot.lane.b32.xlu0 %v3506, 32
    %v3561 = vpop.permute.xlu0 %3560
    %3562 = vrot.lane.b32.xlu0 %v3507, 32
    %v3563 = vpop.permute.xlu0 %3562
    %v3572 = vmul.f32 %v3485, %v3549
    %v3573 = vmul.f32 %v3487, %v3551
    %v3574 = vmul.f32 %v3489, %v3553
    %v3575 = vmul.f32 %v3491, %v3555
    %v3576 = vmul.f32 %v3493, %v3557
    %v3577 = vmul.f32 %v3495, %v3559
    %v3578 = vmul.f32 %v3497, %v3561
    %v3579 = vmul.f32 %v3499, %v3563
    %3588 = vrot.lane.b32.xlu0 %v3572, 32
    %v3589 = vpop.permute.xlu0 %3588
    %3590 = vrot.lane.b32.xlu0 %v3573, 32
    %v3591 = vpop.permute.xlu0 %3590
    %3592 = vrot.lane.b32.xlu0 %v3574, 32
    %v3593 = vpop.permute.xlu0 %3592
    %3594 = vrot.lane.b32.xlu0 %v3575, 32
    %v3595 = vpop.permute.xlu0 %3594
    %3596 = vrot.lane.b32.xlu0 %v3576, 32
    %v3597 = vpop.permute.xlu0 %3596
    %3598 = vrot.lane.b32.xlu0 %v3577, 32
    %v3599 = vpop.permute.xlu0 %3598
    %3600 = vrot.lane.b32.xlu0 %v3578, 32
    %v3601 = vpop.permute.xlu0 %3600
    %3602 = vrot.lane.b32.xlu0 %v3579, 32
    %v3603 = vpop.permute.xlu0 %3602
    %v3612 = vadd.f32 %v3532, %v3589
    %v3613 = vadd.f32 %v3533, %v3591
    %v3614 = vadd.f32 %v3534, %v3593
    %v3615 = vadd.f32 %v3535, %v3595
    %v3616 = vadd.f32 %v3536, %v3597
    %v3617 = vadd.f32 %v3537, %v3599
    %v3618 = vadd.f32 %v3538, %v3601
    %v3619 = vadd.f32 %v3539, %v3603
    %v3620 = vtanh.pop %v3612
    %v3621 = vtanh.pop %v3613
    %v3622 = vtanh.pop %v3614
    %v3623 = vtanh.pop %v3615
    %v3624 = vtanh.pop %v3616
    %v3625 = vtanh.pop %v3617
    %v3626 = vtanh.pop %v3618
    %v3627 = vtanh.pop %v3619
    %3636 = vrot.lane.b32.xlu0 %v3620, 32
    %v3637 = vpop.permute.xlu0 %3636
    %3638 = vrot.lane.b32.xlu0 %v3621, 32
    %v3639 = vpop.permute.xlu0 %3638
    %3640 = vrot.lane.b32.xlu0 %v3622, 32
    %v3641 = vpop.permute.xlu0 %3640
    %3642 = vrot.lane.b32.xlu0 %v3623, 32
    %v3643 = vpop.permute.xlu0 %3642
    %3644 = vrot.lane.b32.xlu0 %v3624, 32
    %v3645 = vpop.permute.xlu0 %3644
    %3646 = vrot.lane.b32.xlu0 %v3625, 32
    %v3647 = vpop.permute.xlu0 %3646
    %3648 = vrot.lane.b32.xlu0 %v3626, 32
    %v3649 = vpop.permute.xlu0 %3648
    %3650 = vrot.lane.b32.xlu0 %v3627, 32
    %v3651 = vpop.permute.xlu0 %3650
    %v3660 = vmul.f32 %v3485, %v3637
    %v3661 = vmul.f32 %v3487, %v3639
    %v3662 = vmul.f32 %v3489, %v3641
    %v3663 = vmul.f32 %v3491, %v3643
    %v3664 = vmul.f32 %v3493, %v3645
    %v3665 = vmul.f32 %v3495, %v3647
    %v3666 = vmul.f32 %v3497, %v3649
    %v3667 = vmul.f32 %v3499, %v3651
    %v3668 = vpack.c.bf16 %v3660, %v3660
    %v3669 = vpack.c.bf16 %v3661, %v3661
    %v3670 = vpack.c.bf16 %v3662, %v3662
    %v3671 = vpack.c.bf16 %v3663, %v3663
    %v3672 = vpack.c.bf16 %v3664, %v3664
    %v3673 = vpack.c.bf16 %v3665, %v3665
    %v3674 = vpack.c.bf16 %v3666, %v3666
    %v3675 = vpack.c.bf16 %v3667, %v3667
    %v3684 = vunpack.c.l.b16 %v3668
    %v3685 = vunpack.c.l.b16 %v3669
    %v3686 = vunpack.c.l.b16 %v3670
    %v3687 = vunpack.c.l.b16 %v3671
    %v3688 = vunpack.c.l.b16 %v3672
    %v3689 = vunpack.c.l.b16 %v3673
    %v3690 = vunpack.c.l.b16 %v3674
    %v3691 = vunpack.c.l.b16 %v3675
    %v3692 = vrot.slane %v3684, 5
    %v3693 = vrot.slane %v3685, 4
    %v3694 = vsel %vm2066, %v3693, %v3692
    %v3695 = vrot.slane %v3686, 3
    %v3696 = vsel %vm2069, %v3695, %v3694
    %v3697 = vrot.slane %v3687, 2
    %v3698 = vsel %vm2072, %v3697, %v3696
    %v3699 = vrot.slane %v3688, 1
    %v3700 = vsel %vm2075, %v3699, %v3698
    %v3701 = vsel %vm2078, %v3689, %v3700
    %v3702 = vrot.slane %v3690, 7
    %v3703 = vsel %vm2081, %v3702, %v3701
    %v3704 = vrot.slane %v3691, 6
    %v3705 = vsel %vm2084, %v3704, %v3703
    %v3706 = vpack.c.b16 %v3705, %v3705
    %3707 = vrot.lane.b32.xlu0 %v3706, 64
    %v3708 = vpop.permute.xlu0 %3707
    %v3710 = vsel %vm1781, %v3708, 0
    %3712 = vmatprep.subr.bf16.mxu0 0
    %3713 = vmatpush1.bf16.msra.mxu0 0
    %3714 = vmatprep.subr.bf16.mxu0 0
    %3715 = vmatpush1.bf16.msra.mxu0 0
    %3716 = vmatprep.subr.bf16.mxu0 0
    %3717 = vmatpush1.bf16.msra.mxu0 0
    %3718 = vmatprep.subr.bf16.mxu0 0
    %3719 = vmatpush1.bf16.msra.mxu0 0
    %3720 = vmatprep.subr.bf16.mxu0 0
    %3721 = vmatpush1.bf16.msra.mxu0 0
    %3722 = vmatprep.subr.bf16.mxu0 0
    %3723 = vmatpush1.bf16.msra.mxu0 0
    %3724 = vmatprep.subr.bf16.mxu0 0
    %3725 = vmatpush1.bf16.msra.mxu0 %v1778
    %3726 = vmatprep.subr.bf16.mxu0 0
    %3727 = vmatpush1.bf16.msra.mxu0 %v1777
    %3728 = vmatprep.subr.bf16.mxu0 0
    %3729 = vmatpush2.bf16.msra.mxu0 0
    %3730 = vmatprep.subr.bf16.mxu0 0
    %3731 = vmatpush2.bf16.msra.mxu0 0
    %3732 = vmatprep.subr.bf16.mxu0 0
    %3733 = vmatpush2.bf16.msra.mxu0 0
    %3734 = vmatprep.subr.bf16.mxu0 0
    %3735 = vmatpush2.bf16.msra.mxu0 0
    %3736 = vmatprep.subr.bf16.mxu0 0
    %3737 = vmatpush2.bf16.msra.mxu0 0
    %3738 = vmatprep.subr.bf16.mxu0 0
    %3739 = vmatpush2.bf16.msra.mxu0 0
    %3740 = vmatprep.subr.bf16.mxu0 0
    %3741 = vmatpush2.bf16.msra.mxu0 0
    %3742 = vmatprep.subr.bf16.mxu0 0
    %3743 = vmatpush2.bf16.msra.mxu0 0
    %3744 = vmatprep.mubr.bf16.mxu0 0
    %3745 = vmatmul.mubr.bf16.gmra.mxu0 %v3710
    %v3746 = vpop.f32.mrf.mxu0
    %v3747 = vadd.f32 0.0, %v3746
    %v3748 = vpop.f32.mrf.mxu0
    %v3749 = vpop.f32.mrf.mxu0
    %v3750 = vpop.f32.mrf.mxu0
    %3751 = vdwg.mxu0
    %v3753 = vrot.slane %v3747, 2
    %v3754 = vrot.slane %v3747, 3
    %v3755 = vrot.slane %v3747, 4
    %v3756 = vrot.slane %v3747, 5
    %v3757 = vrot.slane %v3747, 6
    %v3758 = vrot.slane %v3747, 7
    %v3759 = vrot.slane %v3747, 1
    %v3768 = vadd.f32 %v1735, %v3753
    %v3769 = vadd.f32 %v1738, %v3754
    %v3770 = vadd.f32 %v1743, %v3755
    %v3771 = vadd.f32 %v1746, %v3756
    %v3772 = vadd.f32 %v1751, %v3757
    %v3773 = vadd.f32 %v1754, %v3758
    %v3774 = vadd.f32 %v1759, %v3747
    %v3775 = vadd.f32 %v1762, %v3759
    %v3776 = vxor.u32 %v3768, 2147483648
    %v3777 = vxor.u32 %v3769, 2147483648
    %v3778 = vxor.u32 %v3770, 2147483648
    %v3779 = vxor.u32 %v3771, 2147483648
    %v3780 = vxor.u32 %v3772, 2147483648
    %v3781 = vxor.u32 %v3773, 2147483648
    %v3782 = vxor.u32 %v3774, 2147483648
    %v3783 = vxor.u32 %v3775, 2147483648
    %v3784 = vmul.f32 %v3776, 1.442695
    %v3785 = vpow.pop %v3784
    %v3786 = vmul.f32 %v3777, 1.442695
    %v3787 = vpow.pop %v3786
    %v3788 = vmul.f32 %v3778, 1.442695
    %v3789 = vpow.pop %v3788
    %v3790 = vmul.f32 %v3779, 1.442695
    %v3791 = vpow.pop %v3790
    %v3792 = vmul.f32 %v3780, 1.442695
    %v3793 = vpow.pop %v3792
    %v3794 = vmul.f32 %v3781, 1.442695
    %v3795 = vpow.pop %v3794
    %v3796 = vmul.f32 %v3782, 1.442695
    %v3797 = vpow.pop %v3796
    %v3798 = vmul.f32 %v3783, 1.442695
    %v3799 = vpow.pop %v3798
    %v3800 = vadd.f32 %v3785, 1.0
    %v3801 = vadd.f32 %v3787, 1.0
    %v3802 = vadd.f32 %v3789, 1.0
    %v3803 = vadd.f32 %v3791, 1.0
    %v3804 = vadd.f32 %v3793, 1.0
    %v3805 = vadd.f32 %v3795, 1.0
    %v3806 = vadd.f32 %v3797, 1.0
    %v3807 = vadd.f32 %v3799, 1.0
    %v3808 = vrcp.pop %v3800
    %v3809 = vmul.f32 1.0, %v3808
    %v3810 = vrcp.pop %v3801
    %v3811 = vmul.f32 1.0, %v3810
    %v3812 = vrcp.pop %v3802
    %v3813 = vmul.f32 1.0, %v3812
    %v3814 = vrcp.pop %v3803
    %v3815 = vmul.f32 1.0, %v3814
    %v3816 = vrcp.pop %v3804
    %v3817 = vmul.f32 1.0, %v3816
    %v3818 = vrcp.pop %v3805
    %v3819 = vmul.f32 1.0, %v3818
    %v3820 = vrcp.pop %v3806
    %v3821 = vmul.f32 1.0, %v3820
    %v3822 = vrcp.pop %v3807
    %v3823 = vmul.f32 1.0, %v3822
    %v3824 = vtanh.pop %v3768
    %v3825 = vtanh.pop %v3769
    %v3826 = vtanh.pop %v3770
    %v3827 = vtanh.pop %v3771
    %v3828 = vtanh.pop %v3772
    %v3829 = vtanh.pop %v3773
    %v3830 = vtanh.pop %v3774
    %v3831 = vtanh.pop %v3775
    %v3840 = vrot.slane %v3612, 7
    %v3841 = vrot.slane %v3613, 7
    %v3842 = vrot.slane %v3614, 7
    %v3843 = vrot.slane %v3615, 7
    %v3844 = vrot.slane %v3616, 7
    %v3845 = vrot.slane %v3617, 7
    %v3846 = vrot.slane %v3618, 7
    %v3847 = vrot.slane %v3619, 7
    %v3856 = vmul.f32 %v3809, %v3840
    %v3857 = vmul.f32 %v3811, %v3841
    %v3858 = vmul.f32 %v3813, %v3842
    %v3859 = vmul.f32 %v3815, %v3843
    %v3860 = vmul.f32 %v3817, %v3844
    %v3861 = vmul.f32 %v3819, %v3845
    %v3862 = vmul.f32 %v3821, %v3846
    %v3863 = vmul.f32 %v3823, %v3847
    %3872 = vrot.lane.b32.xlu0 %v3824, 32
    %v3873 = vpop.permute.xlu0 %3872
    %3874 = vrot.lane.b32.xlu0 %v3825, 32
    %v3875 = vpop.permute.xlu0 %3874
    %3876 = vrot.lane.b32.xlu0 %v3826, 32
    %v3877 = vpop.permute.xlu0 %3876
    %3878 = vrot.lane.b32.xlu0 %v3827, 32
    %v3879 = vpop.permute.xlu0 %3878
    %3880 = vrot.lane.b32.xlu0 %v3828, 32
    %v3881 = vpop.permute.xlu0 %3880
    %3882 = vrot.lane.b32.xlu0 %v3829, 32
    %v3883 = vpop.permute.xlu0 %3882
    %3884 = vrot.lane.b32.xlu0 %v3830, 32
    %v3885 = vpop.permute.xlu0 %3884
    %3886 = vrot.lane.b32.xlu0 %v3831, 32
    %v3887 = vpop.permute.xlu0 %3886
    %v3896 = vmul.f32 %v3809, %v3873
    %v3897 = vmul.f32 %v3811, %v3875
    %v3898 = vmul.f32 %v3813, %v3877
    %v3899 = vmul.f32 %v3815, %v3879
    %v3900 = vmul.f32 %v3817, %v3881
    %v3901 = vmul.f32 %v3819, %v3883
    %v3902 = vmul.f32 %v3821, %v3885
    %v3903 = vmul.f32 %v3823, %v3887
    %3912 = vrot.lane.b32.xlu0 %v3896, 32
    %v3913 = vpop.permute.xlu0 %3912
    %3914 = vrot.lane.b32.xlu0 %v3897, 32
    %v3915 = vpop.permute.xlu0 %3914
    %3916 = vrot.lane.b32.xlu0 %v3898, 32
    %v3917 = vpop.permute.xlu0 %3916
    %3918 = vrot.lane.b32.xlu0 %v3899, 32
    %v3919 = vpop.permute.xlu0 %3918
    %3920 = vrot.lane.b32.xlu0 %v3900, 32
    %v3921 = vpop.permute.xlu0 %3920
    %3922 = vrot.lane.b32.xlu0 %v3901, 32
    %v3923 = vpop.permute.xlu0 %3922
    %3924 = vrot.lane.b32.xlu0 %v3902, 32
    %v3925 = vpop.permute.xlu0 %3924
    %3926 = vrot.lane.b32.xlu0 %v3903, 32
    %v3927 = vpop.permute.xlu0 %3926
    %v3936 = vadd.f32 %v3856, %v3913
    %v3937 = vadd.f32 %v3857, %v3915
    %v3938 = vadd.f32 %v3858, %v3917
    %v3939 = vadd.f32 %v3859, %v3919
    %v3940 = vadd.f32 %v3860, %v3921
    %v3941 = vadd.f32 %v3861, %v3923
    %v3942 = vadd.f32 %v3862, %v3925
    %v3943 = vadd.f32 %v3863, %v3927
    %v3944 = vtanh.pop %v3936
    %v3945 = vtanh.pop %v3937
    %v3946 = vtanh.pop %v3938
    %v3947 = vtanh.pop %v3939
    %v3948 = vtanh.pop %v3940
    %v3949 = vtanh.pop %v3941
    %v3950 = vtanh.pop %v3942
    %v3951 = vtanh.pop %v3943
    %3960 = vrot.lane.b32.xlu0 %v3944, 32
    %v3961 = vpop.permute.xlu0 %3960
    %3962 = vrot.lane.b32.xlu0 %v3945, 32
    %v3963 = vpop.permute.xlu0 %3962
    %3964 = vrot.lane.b32.xlu0 %v3946, 32
    %v3965 = vpop.permute.xlu0 %3964
    %3966 = vrot.lane.b32.xlu0 %v3947, 32
    %v3967 = vpop.permute.xlu0 %3966
    %3968 = vrot.lane.b32.xlu0 %v3948, 32
    %v3969 = vpop.permute.xlu0 %3968
    %3970 = vrot.lane.b32.xlu0 %v3949, 32
    %v3971 = vpop.permute.xlu0 %3970
    %3972 = vrot.lane.b32.xlu0 %v3950, 32
    %v3973 = vpop.permute.xlu0 %3972
    %3974 = vrot.lane.b32.xlu0 %v3951, 32
    %v3975 = vpop.permute.xlu0 %3974
    %v3984 = vmul.f32 %v3809, %v3961
    %v3985 = vmul.f32 %v3811, %v3963
    %v3986 = vmul.f32 %v3813, %v3965
    %v3987 = vmul.f32 %v3815, %v3967
    %v3988 = vmul.f32 %v3817, %v3969
    %v3989 = vmul.f32 %v3819, %v3971
    %v3990 = vmul.f32 %v3821, %v3973
    %v3991 = vmul.f32 %v3823, %v3975
    %v3992 = vpack.c.bf16 %v3984, %v3984
    %v3993 = vpack.c.bf16 %v3985, %v3985
    %v3994 = vpack.c.bf16 %v3986, %v3986
    %v3995 = vpack.c.bf16 %v3987, %v3987
    %v3996 = vpack.c.bf16 %v3988, %v3988
    %v3997 = vpack.c.bf16 %v3989, %v3989
    %v3998 = vpack.c.bf16 %v3990, %v3990
    %v3999 = vpack.c.bf16 %v3991, %v3991
    %v4008 = vunpack.c.l.b16 %v3992
    %v4009 = vunpack.c.l.b16 %v3993
    %v4010 = vunpack.c.l.b16 %v3994
    %v4011 = vunpack.c.l.b16 %v3995
    %v4012 = vunpack.c.l.b16 %v3996
    %v4013 = vunpack.c.l.b16 %v3997
    %v4014 = vunpack.c.l.b16 %v3998
    %v4015 = vunpack.c.l.b16 %v3999
    %v4016 = vrot.slane %v4008, 6
    %v4017 = vrot.slane %v4009, 5
    %v4018 = vsel %vm2066, %v4017, %v4016
    %v4019 = vrot.slane %v4010, 4
    %v4020 = vsel %vm2069, %v4019, %v4018
    %v4021 = vrot.slane %v4011, 3
    %v4022 = vsel %vm2072, %v4021, %v4020
    %v4023 = vrot.slane %v4012, 2
    %v4024 = vsel %vm2075, %v4023, %v4022
    %v4025 = vrot.slane %v4013, 1
    %v4026 = vsel %vm2078, %v4025, %v4024
    %v4027 = vsel %vm2081, %v4014, %v4026
    %v4028 = vrot.slane %v4015, 7
    %v4029 = vsel %vm2084, %v4028, %v4027
    %v4030 = vpack.c.b16 %v4029, %v4029
    %4031 = vrot.lane.b32.xlu0 %v4030, 64
    %v4032 = vpop.permute.xlu0 %4031
    %v4034 = vsel %vm1781, %v4032, 0
    %4036 = vmatprep.subr.bf16.mxu0 0
    %4037 = vmatpush1.bf16.msra.mxu0 0
    %4038 = vmatprep.subr.bf16.mxu0 0
    %4039 = vmatpush1.bf16.msra.mxu0 0
    %4040 = vmatprep.subr.bf16.mxu0 0
    %4041 = vmatpush1.bf16.msra.mxu0 0
    %4042 = vmatprep.subr.bf16.mxu0 0
    %4043 = vmatpush1.bf16.msra.mxu0 0
    %4044 = vmatprep.subr.bf16.mxu0 0
    %4045 = vmatpush1.bf16.msra.mxu0 0
    %4046 = vmatprep.subr.bf16.mxu0 0
    %4047 = vmatpush1.bf16.msra.mxu0 0
    %4048 = vmatprep.subr.bf16.mxu0 0
    %4049 = vmatpush1.bf16.msra.mxu0 %v1778
    %4050 = vmatprep.subr.bf16.mxu0 0
    %4051 = vmatpush1.bf16.msra.mxu0 %v1777
    %4052 = vmatprep.subr.bf16.mxu0 0
    %4053 = vmatpush2.bf16.msra.mxu0 0
    %4054 = vmatprep.subr.bf16.mxu0 0
    %4055 = vmatpush2.bf16.msra.mxu0 0
    %4056 = vmatprep.subr.bf16.mxu0 0
    %4057 = vmatpush2.bf16.msra.mxu0 0
    %4058 = vmatprep.subr.bf16.mxu0 0
    %4059 = vmatpush2.bf16.msra.mxu0 0
    %4060 = vmatprep.subr.bf16.mxu0 0
    %4061 = vmatpush2.bf16.msra.mxu0 0
    %4062 = vmatprep.subr.bf16.mxu0 0
    %4063 = vmatpush2.bf16.msra.mxu0 0
    %4064 = vmatprep.subr.bf16.mxu0 0
    %4065 = vmatpush2.bf16.msra.mxu0 0
    %4066 = vmatprep.subr.bf16.mxu0 0
    %4067 = vmatpush2.bf16.msra.mxu0 0
    %4068 = vmatprep.mubr.bf16.mxu0 0
    %4069 = vmatmul.mubr.bf16.gmra.mxu0 %v4034
    %v4070 = vpop.f32.mrf.mxu0
    %v4071 = vadd.f32 0.0, %v4070
    %v4072 = vpop.f32.mrf.mxu0
    %v4073 = vpop.f32.mrf.mxu0
    %v4074 = vpop.f32.mrf.mxu0
    %4075 = vdwg.mxu0
    %v4077 = vrot.slane %v4071, 1
    %v4078 = vrot.slane %v4071, 2
    %v4079 = vrot.slane %v4071, 3
    %v4080 = vrot.slane %v4071, 4
    %v4081 = vrot.slane %v4071, 5
    %v4082 = vrot.slane %v4071, 6
    %v4083 = vrot.slane %v4071, 7
    %v4092 = vadd.f32 %v1735, %v4077
    %v4093 = vadd.f32 %v1738, %v4078
    %v4094 = vadd.f32 %v1743, %v4079
    %v4095 = vadd.f32 %v1746, %v4080
    %v4096 = vadd.f32 %v1751, %v4081
    %v4097 = vadd.f32 %v1754, %v4082
    %v4098 = vadd.f32 %v1759, %v4083
    %v4099 = vadd.f32 %v1762, %v4071
    %v4100 = vxor.u32 %v4092, 2147483648
    %v4101 = vxor.u32 %v4093, 2147483648
    %v4102 = vxor.u32 %v4094, 2147483648
    %v4103 = vxor.u32 %v4095, 2147483648
    %v4104 = vxor.u32 %v4096, 2147483648
    %v4105 = vxor.u32 %v4097, 2147483648
    %v4106 = vxor.u32 %v4098, 2147483648
    %v4107 = vxor.u32 %v4099, 2147483648
    %v4108 = vmul.f32 %v4100, 1.442695
    %v4109 = vpow.pop %v4108
    %v4110 = vmul.f32 %v4101, 1.442695
    %v4111 = vpow.pop %v4110
    %v4112 = vmul.f32 %v4102, 1.442695
    %v4113 = vpow.pop %v4112
    %v4114 = vmul.f32 %v4103, 1.442695
    %v4115 = vpow.pop %v4114
    %v4116 = vmul.f32 %v4104, 1.442695
    %v4117 = vpow.pop %v4116
    %v4118 = vmul.f32 %v4105, 1.442695
    %v4119 = vpow.pop %v4118
    %v4120 = vmul.f32 %v4106, 1.442695
    %v4121 = vpow.pop %v4120
    %v4122 = vmul.f32 %v4107, 1.442695
    %v4123 = vpow.pop %v4122
    %v4124 = vadd.f32 %v4109, 1.0
    %v4125 = vadd.f32 %v4111, 1.0
    %v4126 = vadd.f32 %v4113, 1.0
    %v4127 = vadd.f32 %v4115, 1.0
    %v4128 = vadd.f32 %v4117, 1.0
    %v4129 = vadd.f32 %v4119, 1.0
    %v4130 = vadd.f32 %v4121, 1.0
    %v4131 = vadd.f32 %v4123, 1.0
    %v4132 = vrcp.pop %v4124
    %v4133 = vmul.f32 1.0, %v4132
    %v4134 = vrcp.pop %v4125
    %v4135 = vmul.f32 1.0, %v4134
    %v4136 = vrcp.pop %v4126
    %v4137 = vmul.f32 1.0, %v4136
    %v4138 = vrcp.pop %v4127
    %v4139 = vmul.f32 1.0, %v4138
    %v4140 = vrcp.pop %v4128
    %v4141 = vmul.f32 1.0, %v4140
    %v4142 = vrcp.pop %v4129
    %v4143 = vmul.f32 1.0, %v4142
    %v4144 = vrcp.pop %v4130
    %v4145 = vmul.f32 1.0, %v4144
    %v4146 = vrcp.pop %v4131
    %v4147 = vmul.f32 1.0, %v4146
    %v4148 = vtanh.pop %v4092
    %v4149 = vtanh.pop %v4093
    %v4150 = vtanh.pop %v4094
    %v4151 = vtanh.pop %v4095
    %v4152 = vtanh.pop %v4096
    %v4153 = vtanh.pop %v4097
    %v4154 = vtanh.pop %v4098
    %v4155 = vtanh.pop %v4099
    %v4164 = vrot.slane %v3936, 7
    %v4165 = vrot.slane %v3937, 7
    %v4166 = vrot.slane %v3938, 7
    %v4167 = vrot.slane %v3939, 7
    %v4168 = vrot.slane %v3940, 7
    %v4169 = vrot.slane %v3941, 7
    %v4170 = vrot.slane %v3942, 7
    %v4171 = vrot.slane %v3943, 7
    %v4180 = vmul.f32 %v4133, %v4164
    %v4181 = vmul.f32 %v4135, %v4165
    %v4182 = vmul.f32 %v4137, %v4166
    %v4183 = vmul.f32 %v4139, %v4167
    %v4184 = vmul.f32 %v4141, %v4168
    %v4185 = vmul.f32 %v4143, %v4169
    %v4186 = vmul.f32 %v4145, %v4170
    %v4187 = vmul.f32 %v4147, %v4171
    %4196 = vrot.lane.b32.xlu0 %v4148, 32
    %v4197 = vpop.permute.xlu0 %4196
    %4198 = vrot.lane.b32.xlu0 %v4149, 32
    %v4199 = vpop.permute.xlu0 %4198
    %4200 = vrot.lane.b32.xlu0 %v4150, 32
    %v4201 = vpop.permute.xlu0 %4200
    %4202 = vrot.lane.b32.xlu0 %v4151, 32
    %v4203 = vpop.permute.xlu0 %4202
    %4204 = vrot.lane.b32.xlu0 %v4152, 32
    %v4205 = vpop.permute.xlu0 %4204
    %4206 = vrot.lane.b32.xlu0 %v4153, 32
    %v4207 = vpop.permute.xlu0 %4206
    %4208 = vrot.lane.b32.xlu0 %v4154, 32
    %v4209 = vpop.permute.xlu0 %4208
    %4210 = vrot.lane.b32.xlu0 %v4155, 32
    %v4211 = vpop.permute.xlu0 %4210
    %v4220 = vmul.f32 %v4133, %v4197
    %v4221 = vmul.f32 %v4135, %v4199
    %v4222 = vmul.f32 %v4137, %v4201
    %v4223 = vmul.f32 %v4139, %v4203
    %v4224 = vmul.f32 %v4141, %v4205
    %v4225 = vmul.f32 %v4143, %v4207
    %v4226 = vmul.f32 %v4145, %v4209
    %v4227 = vmul.f32 %v4147, %v4211
    %4236 = vrot.lane.b32.xlu0 %v4220, 32
    %v4237 = vpop.permute.xlu0 %4236
    %4238 = vrot.lane.b32.xlu0 %v4221, 32
    %v4239 = vpop.permute.xlu0 %4238
    %4240 = vrot.lane.b32.xlu0 %v4222, 32
    %v4241 = vpop.permute.xlu0 %4240
    %4242 = vrot.lane.b32.xlu0 %v4223, 32
    %v4243 = vpop.permute.xlu0 %4242
    %4244 = vrot.lane.b32.xlu0 %v4224, 32
    %v4245 = vpop.permute.xlu0 %4244
    %4246 = vrot.lane.b32.xlu0 %v4225, 32
    %v4247 = vpop.permute.xlu0 %4246
    %4248 = vrot.lane.b32.xlu0 %v4226, 32
    %v4249 = vpop.permute.xlu0 %4248
    %4250 = vrot.lane.b32.xlu0 %v4227, 32
    %v4251 = vpop.permute.xlu0 %4250
    %v4260 = vadd.f32 %v4180, %v4237
    %v4261 = vadd.f32 %v4181, %v4239
    %v4262 = vadd.f32 %v4182, %v4241
    %v4263 = vadd.f32 %v4183, %v4243
    %v4264 = vadd.f32 %v4184, %v4245
    %v4265 = vadd.f32 %v4185, %v4247
    %v4266 = vadd.f32 %v4186, %v4249
    %v4267 = vadd.f32 %v4187, %v4251
    %v4268 = vtanh.pop %v4260
    %v4269 = vtanh.pop %v4261
    %v4270 = vtanh.pop %v4262
    %v4271 = vtanh.pop %v4263
    %v4272 = vtanh.pop %v4264
    %v4273 = vtanh.pop %v4265
    %v4274 = vtanh.pop %v4266
    %v4275 = vtanh.pop %v4267
    %4284 = vrot.lane.b32.xlu0 %v4268, 32
    %v4285 = vpop.permute.xlu0 %4284
    %4286 = vrot.lane.b32.xlu0 %v4269, 32
    %v4287 = vpop.permute.xlu0 %4286
    %4288 = vrot.lane.b32.xlu0 %v4270, 32
    %v4289 = vpop.permute.xlu0 %4288
    %4290 = vrot.lane.b32.xlu0 %v4271, 32
    %v4291 = vpop.permute.xlu0 %4290
    %4292 = vrot.lane.b32.xlu0 %v4272, 32
    %v4293 = vpop.permute.xlu0 %4292
    %4294 = vrot.lane.b32.xlu0 %v4273, 32
    %v4295 = vpop.permute.xlu0 %4294
    %4296 = vrot.lane.b32.xlu0 %v4274, 32
    %v4297 = vpop.permute.xlu0 %4296
    %4298 = vrot.lane.b32.xlu0 %v4275, 32
    %v4299 = vpop.permute.xlu0 %4298
    %v4308 = vmul.f32 %v4133, %v4285
    %v4309 = vmul.f32 %v4135, %v4287
    %v4310 = vmul.f32 %v4137, %v4289
    %v4311 = vmul.f32 %v4139, %v4291
    %v4312 = vmul.f32 %v4141, %v4293
    %v4313 = vmul.f32 %v4143, %v4295
    %v4314 = vmul.f32 %v4145, %v4297
    %v4315 = vmul.f32 %v4147, %v4299
    %v4316 = vpack.c.bf16 %v4308, %v4308
    %v4317 = vpack.c.bf16 %v4309, %v4309
    %v4318 = vpack.c.bf16 %v4310, %v4310
    %v4319 = vpack.c.bf16 %v4311, %v4311
    %v4320 = vpack.c.bf16 %v4312, %v4312
    %v4321 = vpack.c.bf16 %v4313, %v4313
    %v4322 = vpack.c.bf16 %v4314, %v4314
    %v4323 = vpack.c.bf16 %v4315, %v4315
    %v4324 = vld [vmem:[#allocation4] sm:$0xff]
    %v4325 = vld [vmem:[#allocation4 + $0x8] sm:$0xff]
    %v4326 = vld [vmem:[#allocation4 + $0x10] sm:$0xff]
    %v4327 = vld [vmem:[#allocation4 + $0x18] sm:$0xff]
    %v4328 = vld [vmem:[#allocation4 + $0x20] sm:$0xff]
    %v4329 = vld [vmem:[#allocation4 + $0x28] sm:$0xff]
    %v4330 = vld [vmem:[#allocation4 + $0x30] sm:$0xff]
    %v4331 = vld [vmem:[#allocation4 + $0x38] sm:$0xff]
    %v4332 = vld [vmem:[%s5] sm:$0xf]
    %v4334 = vlaneseq
    %v4335 = vshrl.u32 %v4334, 7
    %v4336 = vsub.s32 0, %v4335
    %v4337 = vrot.slane %v4332, %v4336
    %v4338 = vlaneseq
    %v4339 = vshrl.u32 %v4338, 7
    %v4340 = vsub.s32 1, %v4339
    %v4341 = vrot.slane %v4332, %v4340
    %v4342 = vlaneseq
    %v4343 = vshrl.u32 %v4342, 7
    %v4344 = vsub.s32 2, %v4343
    %v4345 = vrot.slane %v4332, %v4344
    %v4346 = vlaneseq
    %v4347 = vshrl.u32 %v4346, 7
    %v4348 = vsub.s32 3, %v4347
    %v4349 = vrot.slane %v4332, %v4348
    %v4362 = vunpack.c.l.b16 %v4316
    %v4363 = vunpack.c.l.b16 %v4317
    %v4364 = vunpack.c.l.b16 %v4318
    %v4365 = vunpack.c.l.b16 %v4319
    %v4366 = vunpack.c.l.b16 %v4320
    %v4367 = vunpack.c.l.b16 %v4321
    %v4368 = vunpack.c.l.b16 %v4322
    %v4369 = vunpack.c.l.b16 %v4323
    %v4370 = vrot.slane %v4362, 7
    %v4371 = vrot.slane %v4363, 6
    %v4372 = vsel %vm2066, %v4371, %v4370
    %v4373 = vrot.slane %v4364, 5
    %v4374 = vsel %vm2069, %v4373, %v4372
    %v4375 = vrot.slane %v4365, 4
    %v4376 = vsel %vm2072, %v4375, %v4374
    %v4377 = vrot.slane %v4366, 3
    %v4378 = vsel %vm2075, %v4377, %v4376
    %v4379 = vrot.slane %v4367, 2
    %v4380 = vsel %vm2078, %v4379, %v4378
    %v4381 = vrot.slane %v4368, 1
    %v4382 = vsel %vm2081, %v4381, %v4380
    %v4383 = vsel %vm2084, %v4369, %v4382
    %v4384 = vpack.c.b16 %v4383, %v4383
    %4385 = vrot.lane.b32.xlu0 %v4384, 64
    %v4386 = vpop.permute.xlu0 %4385
    %v4395 = vunpack.c.l.b16 %v4324
    %v4396 = vunpack.c.h.b16 %v4324
    %v4397 = vunpack.c.l.b16 %v4325
    %v4398 = vunpack.c.h.b16 %v4325
    %v4399 = vunpack.c.l.b16 %v4326
    %v4400 = vunpack.c.h.b16 %v4326
    %v4401 = vunpack.c.l.b16 %v4327
    %v4402 = vunpack.c.h.b16 %v4327
    %v4403 = vunpack.c.l.b16 %v4328
    %v4404 = vunpack.c.h.b16 %v4328
    %v4405 = vunpack.c.l.b16 %v4329
    %v4406 = vunpack.c.h.b16 %v4329
    %v4407 = vunpack.c.l.b16 %v4330
    %v4408 = vunpack.c.h.b16 %v4330
    %v4409 = vunpack.c.l.b16 %v4331
    %v4410 = vunpack.c.h.b16 %v4331
    %v4411 = vpack.c.b16 %v4399, %v4395
    %v4412 = vpack.c.b16 %v4400, %v4396
    %v4413 = vpack.c.b16 %v4401, %v4397
    %v4414 = vpack.c.b16 %v4402, %v4398
    %v4415 = vpack.c.b16 %v4407, %v4403
    %v4416 = vpack.c.b16 %v4408, %v4404
    %v4417 = vpack.c.b16 %v4409, %v4405
    %v4418 = vpack.c.b16 %v4410, %v4406
    %v4428 = vsel %vm1781, %v4386, 0
    %4430 = vmatprep.subr.bf16.mxu0 0
    %4431 = vmatpush1.bf16.msra.mxu0 0
    %4432 = vmatprep.subr.bf16.mxu0 0
    %4433 = vmatpush1.bf16.msra.mxu0 0
    %4434 = vmatprep.subr.bf16.mxu0 0
    %4435 = vmatpush1.bf16.msra.mxu0 0
    %4436 = vmatprep.subr.bf16.mxu0 0
    %4437 = vmatpush1.bf16.msra.mxu0 0
    %4438 = vmatprep.subr.bf16.mxu0 0
    %4439 = vmatpush1.bf16.msra.mxu0 0
    %4440 = vmatprep.subr.bf16.mxu0 0
    %4441 = vmatpush1.bf16.msra.mxu0 0
    %4442 = vmatprep.subr.bf16.mxu0 %v4416
    %4443 = vmatpush1.bf16.msra.mxu0 %v4415
    %4444 = vmatprep.subr.bf16.mxu0 %v4412
    %4445 = vmatpush1.bf16.msra.mxu0 %v4411
    %4446 = vmatprep.subr.bf16.mxu0 0
    %4447 = vmatpush2.bf16.msra.mxu0 0
    %4448 = vmatprep.subr.bf16.mxu0 0
    %4449 = vmatpush2.bf16.msra.mxu0 0
    %4450 = vmatprep.subr.bf16.mxu0 0
    %4451 = vmatpush2.bf16.msra.mxu0 0
    %4452 = vmatprep.subr.bf16.mxu0 0
    %4453 = vmatpush2.bf16.msra.mxu0 0
    %4454 = vmatprep.subr.bf16.mxu0 0
    %4455 = vmatpush2.bf16.msra.mxu0 0
    %4456 = vmatprep.subr.bf16.mxu0 0
    %4457 = vmatpush2.bf16.msra.mxu0 0
    %4458 = vmatprep.subr.bf16.mxu0 0
    %4459 = vmatpush2.bf16.msra.mxu0 0
    %4460 = vmatprep.subr.bf16.mxu0 0
    %4461 = vmatpush2.bf16.msra.mxu0 0
    %4462 = vmatprep.mubr.bf16.mxu0 0
    %4463 = vmatmul.mubr.bf16.gmra.mxu0 %v4428
    %v4464 = vpop.f32.mrf.mxu0
    %v4465 = vadd.f32 %v4337, %v4464
    %v4466 = vpop.f32.mrf.mxu0
    %v4467 = vadd.f32 %v4341, %v4466
    %v4468 = vpop.f32.mrf.mxu0
    %v4469 = vpop.f32.mrf.mxu0
    %4470 = vdwg.mxu0
    %4471 = vmatprep.subr.bf16.mxu0 0
    %4472 = vmatpush1.bf16.msra.mxu0 0
    %4473 = vmatprep.subr.bf16.mxu0 0
    %4474 = vmatpush1.bf16.msra.mxu0 0
    %4475 = vmatprep.subr.bf16.mxu0 0
    %4476 = vmatpush1.bf16.msra.mxu0 0
    %4477 = vmatprep.subr.bf16.mxu0 0
    %4478 = vmatpush1.bf16.msra.mxu0 0
    %4479 = vmatprep.subr.bf16.mxu0 0
    %4480 = vmatpush1.bf16.msra.mxu0 0
    %4481 = vmatprep.subr.bf16.mxu0 0
    %4482 = vmatpush1.bf16.msra.mxu0 0
    %4483 = vmatprep.subr.bf16.mxu0 %v4418
    %4484 = vmatpush1.bf16.msra.mxu0 %v4417
    %4485 = vmatprep.subr.bf16.mxu0 %v4414
    %4486 = vmatpush1.bf16.msra.mxu0 %v4413
    %4487 = vmatprep.subr.bf16.mxu0 0
    %4488 = vmatpush2.bf16.msra.mxu0 0
    %4489 = vmatprep.subr.bf16.mxu0 0
    %4490 = vmatpush2.bf16.msra.mxu0 0
    %4491 = vmatprep.subr.bf16.mxu0 0
    %4492 = vmatpush2.bf16.msra.mxu0 0
    %4493 = vmatprep.subr.bf16.mxu0 0
    %4494 = vmatpush2.bf16.msra.mxu0 0
    %4495 = vmatprep.subr.bf16.mxu0 0
    %4496 = vmatpush2.bf16.msra.mxu0 0
    %4497 = vmatprep.subr.bf16.mxu0 0
    %4498 = vmatpush2.bf16.msra.mxu0 0
    %4499 = vmatprep.subr.bf16.mxu0 0
    %4500 = vmatpush2.bf16.msra.mxu0 0
    %4501 = vmatprep.subr.bf16.mxu0 0
    %4502 = vmatpush2.bf16.msra.mxu0 0
    %4503 = vmatprep.mubr.bf16.mxu0 0
    %4504 = vmatmul.mubr.bf16.gmra.mxu0 %v4428
    %v4505 = vpop.f32.mrf.mxu0
    %v4506 = vadd.f32 %v4345, %v4505
    %v4507 = vpop.f32.mrf.mxu0
    %v4508 = vadd.f32 %v4349, %v4507
    %v4509 = vpop.f32.mrf.mxu0
    %v4510 = vpop.f32.mrf.mxu0
    %4511 = vdwg.mxu0
    %v4512 = vmax.f32 %v4465, 0.0
    %v4513 = vmax.f32 %v4467, 0.0
    %v4514 = vmax.f32 %v4506, 0.0
    %v4515 = vmax.f32 %v4508, 0.0
    %v4516 = vpack.c.bf16 %v4512, %v4512
    %v4517 = vpack.c.bf16 %v4513, %v4513
    %v4518 = vpack.c.bf16 %v4514, %v4514
    %v4519 = vpack.c.bf16 %v4515, %v4515
    %v4520 = vld [vmem:[#allocation6] sm:$0xf]
    %v4521 = vld [vmem:[#allocation6 + $0x4] sm:$0xf]
    %v4522 = vld [vmem:[#allocation6 + $0x8] sm:$0xf]
    %v4523 = vld [vmem:[#allocation6 + $0xc] sm:$0xf]
    %v4524 = vld [vmem:[#allocation6 + $0x10] sm:$0xf]
    %v4525 = vld [vmem:[#allocation6 + $0x14] sm:$0xf]
    %v4526 = vld [vmem:[#allocation6 + $0x18] sm:$0xf]
    %v4527 = vld [vmem:[#allocation6 + $0x1c] sm:$0xf]
    %v4528 = vld [vmem:[#allocation6 + $0x20] sm:$0xf]
    %v4529 = vld [vmem:[#allocation6 + $0x24] sm:$0xf]
    %v4530 = vld [vmem:[#allocation6 + $0x28] sm:$0xf]
    %v4531 = vld [vmem:[#allocation6 + $0x2c] sm:$0xf]
    %v4532 = vld [vmem:[#allocation6 + $0x30] sm:$0xf]
    %v4533 = vld [vmem:[#allocation6 + $0x34] sm:$0xf]
    %v4534 = vld [vmem:[#allocation6 + $0x38] sm:$0xf]
    %v4535 = vld [vmem:[#allocation6 + $0x3c] sm:$0xf]
    %v4536 = vld [vmem:[#allocation6 + $0x40] sm:$0xf]
    %v4537 = vld [vmem:[#allocation6 + $0x44] sm:$0xf]
    %v4538 = vld [vmem:[#allocation6 + $0x48] sm:$0xf]
    %v4539 = vld [vmem:[#allocation6 + $0x4c] sm:$0xf]
    %v4540 = vld [vmem:[#allocation6 + $0x50] sm:$0xf]
    %v4541 = vld [vmem:[#allocation6 + $0x54] sm:$0xf]
    %v4542 = vld [vmem:[#allocation6 + $0x58] sm:$0xf]
    %v4543 = vld [vmem:[#allocation6 + $0x5c] sm:$0xf]
    %v4544 = vld [vmem:[#allocation6 + $0x60] sm:$0xf]
    %v4545 = vld [vmem:[#allocation6 + $0x64] sm:$0xf]
    %v4546 = vld [vmem:[#allocation6 + $0x68] sm:$0xf]
    %v4547 = vld [vmem:[#allocation6 + $0x6c] sm:$0xf]
    %v4548 = vld [vmem:[#allocation6 + $0x70] sm:$0xf]
    %v4549 = vld [vmem:[#allocation6 + $0x74] sm:$0xf]
    %v4550 = vld [vmem:[#allocation6 + $0x78] sm:$0xf]
    %v4551 = vld [vmem:[#allocation6 + $0x7c] sm:$0xf]
    %v4552 = vld [vmem:[#allocation6 + $0x80] sm:$0xf]
    %v4553 = vld [vmem:[#allocation6 + $0x84] sm:$0xf]
    %v4554 = vld [vmem:[#allocation6 + $0x88] sm:$0xf]
    %v4555 = vld [vmem:[#allocation6 + $0x8c] sm:$0xf]
    %v4556 = vld [vmem:[#allocation6 + $0x90] sm:$0xf]
    %v4557 = vld [vmem:[#allocation6 + $0x94] sm:$0xf]
    %v4558 = vld [vmem:[#allocation6 + $0x98] sm:$0xf]
    %v4559 = vld [vmem:[#allocation6 + $0x9c] sm:$0xf]
    %v4560 = vld [vmem:[#allocation6 + $0xa0] sm:$0xf]
    %v4561 = vld [vmem:[#allocation6 + $0xa4] sm:$0xf]
    %v4562 = vld [vmem:[#allocation6 + $0xa8] sm:$0xf]
    %v4563 = vld [vmem:[#allocation6 + $0xac] sm:$0xf]
    %v4564 = vld [vmem:[#allocation6 + $0xb0] sm:$0xf]
    %v4565 = vld [vmem:[#allocation6 + $0xb4] sm:$0xf]
    %v4566 = vld [vmem:[#allocation6 + $0xb8] sm:$0xf]
    %v4567 = vld [vmem:[#allocation6 + $0xbc] sm:$0xf]
    %v4568 = vld [vmem:[#allocation6 + $0xc0] sm:$0xf]
    %v4569 = vld [vmem:[#allocation6 + $0xc4] sm:$0xf]
    %v4570 = vld [vmem:[#allocation6 + $0xc8] sm:$0xf]
    %v4571 = vld [vmem:[#allocation6 + $0xcc] sm:$0xf]
    %v4572 = vld [vmem:[#allocation6 + $0xd0] sm:$0xf]
    %v4573 = vld [vmem:[#allocation6 + $0xd4] sm:$0xf]
    %v4574 = vld [vmem:[#allocation6 + $0xd8] sm:$0xf]
    %v4575 = vld [vmem:[#allocation6 + $0xdc] sm:$0xf]
    %v4576 = vld [vmem:[#allocation6 + $0xe0] sm:$0xf]
    %v4577 = vld [vmem:[#allocation6 + $0xe4] sm:$0xf]
    %v4578 = vld [vmem:[#allocation6 + $0xe8] sm:$0xf]
    %v4579 = vld [vmem:[#allocation6 + $0xec] sm:$0xf]
    %v4580 = vld [vmem:[#allocation6 + $0xf0] sm:$0xf]
    %v4581 = vld [vmem:[#allocation6 + $0xf4] sm:$0xf]
    %v4582 = vld [vmem:[#allocation6 + $0xf8] sm:$0xf]
    %v4583 = vld [vmem:[#allocation6 + $0xfc] sm:$0xf]
    %v4584 = vld [vmem:[%s7] sm:$0x1]
    %v4586 = vlaneseq
    %v4587 = vshrl.u32 %v4586, 7
    %v4588 = vsub.s32 0, %v4587
    %v4589 = vrot.slane %v4584, %v4588
    %v4655 = vunpack.c.l.b16 %v4520
    %v4656 = vunpack.c.l.b16 %v4521
    %v4657 = vunpack.c.l.b16 %v4522
    %v4658 = vunpack.c.l.b16 %v4523
    %v4659 = vunpack.c.l.b16 %v4524
    %v4660 = vunpack.c.l.b16 %v4525
    %v4661 = vunpack.c.l.b16 %v4526
    %v4662 = vunpack.c.l.b16 %v4527
    %v4663 = vunpack.c.l.b16 %v4528
    %v4664 = vunpack.c.l.b16 %v4529
    %v4665 = vunpack.c.l.b16 %v4530
    %v4666 = vunpack.c.l.b16 %v4531
    %v4667 = vunpack.c.l.b16 %v4532
    %v4668 = vunpack.c.l.b16 %v4533
    %v4669 = vunpack.c.l.b16 %v4534
    %v4670 = vunpack.c.l.b16 %v4535
    %v4671 = vunpack.c.l.b16 %v4536
    %v4672 = vunpack.c.l.b16 %v4537
    %v4673 = vunpack.c.l.b16 %v4538
    %v4674 = vunpack.c.l.b16 %v4539
    %v4675 = vunpack.c.l.b16 %v4540
    %v4676 = vunpack.c.l.b16 %v4541
    %v4677 = vunpack.c.l.b16 %v4542
    %v4678 = vunpack.c.l.b16 %v4543
    %v4679 = vunpack.c.l.b16 %v4544
    %v4680 = vunpack.c.l.b16 %v4545
    %v4681 = vunpack.c.l.b16 %v4546
    %v4682 = vunpack.c.l.b16 %v4547
    %v4683 = vunpack.c.l.b16 %v4548
    %v4684 = vunpack.c.l.b16 %v4549
    %v4685 = vunpack.c.l.b16 %v4550
    %v4686 = vunpack.c.l.b16 %v4551
    %v4687 = vunpack.c.l.b16 %v4552
    %v4688 = vunpack.c.l.b16 %v4553
    %v4689 = vunpack.c.l.b16 %v4554
    %v4690 = vunpack.c.l.b16 %v4555
    %v4691 = vunpack.c.l.b16 %v4556
    %v4692 = vunpack.c.l.b16 %v4557
    %v4693 = vunpack.c.l.b16 %v4558
    %v4694 = vunpack.c.l.b16 %v4559
    %v4695 = vunpack.c.l.b16 %v4560
    %v4696 = vunpack.c.l.b16 %v4561
    %v4697 = vunpack.c.l.b16 %v4562
    %v4698 = vunpack.c.l.b16 %v4563
    %v4699 = vunpack.c.l.b16 %v4564
    %v4700 = vunpack.c.l.b16 %v4565
    %v4701 = vunpack.c.l.b16 %v4566
    %v4702 = vunpack.c.l.b16 %v4567
    %v4703 = vunpack.c.l.b16 %v4568
    %v4704 = vunpack.c.l.b16 %v4569
    %v4705 = vunpack.c.l.b16 %v4570
    %v4706 = vunpack.c.l.b16 %v4571
    %v4707 = vunpack.c.l.b16 %v4572
    %v4708 = vunpack.c.l.b16 %v4573
    %v4709 = vunpack.c.l.b16 %v4574
    %v4710 = vunpack.c.l.b16 %v4575
    %v4711 = vunpack.c.l.b16 %v4576
    %v4712 = vunpack.c.l.b16 %v4577
    %v4713 = vunpack.c.l.b16 %v4578
    %v4714 = vunpack.c.l.b16 %v4579
    %v4715 = vunpack.c.l.b16 %v4580
    %v4716 = vunpack.c.l.b16 %v4581
    %v4717 = vunpack.c.l.b16 %v4582
    %v4718 = vunpack.c.l.b16 %v4583
    %v4719 = vpack.c.b16 %v4656, %v4655
    %v4720 = vpack.c.b16 %v4658, %v4657
    %v4721 = vpack.c.b16 %v4660, %v4659
    %v4722 = vpack.c.b16 %v4662, %v4661
    %v4723 = vpack.c.b16 %v4664, %v4663
    %v4724 = vpack.c.b16 %v4666, %v4665
    %v4725 = vpack.c.b16 %v4668, %v4667
    %v4726 = vpack.c.b16 %v4670, %v4669
    %v4727 = vpack.c.b16 %v4672, %v4671
    %v4728 = vpack.c.b16 %v4674, %v4673
    %v4729 = vpack.c.b16 %v4676, %v4675
    %v4730 = vpack.c.b16 %v4678, %v4677
    %v4731 = vpack.c.b16 %v4680, %v4679
    %v4732 = vpack.c.b16 %v4682, %v4681
    %v4733 = vpack.c.b16 %v4684, %v4683
    %v4734 = vpack.c.b16 %v4686, %v4685
    %v4735 = vpack.c.b16 %v4688, %v4687
    %v4736 = vpack.c.b16 %v4690, %v4689
    %v4737 = vpack.c.b16 %v4692, %v4691
    %v4738 = vpack.c.b16 %v4694, %v4693
    %v4739 = vpack.c.b16 %v4696, %v4695
    %v4740 = vpack.c.b16 %v4698, %v4697
    %v4741 = vpack.c.b16 %v4700, %v4699
    %v4742 = vpack.c.b16 %v4702, %v4701
    %v4743 = vpack.c.b16 %v4704, %v4703
    %v4744 = vpack.c.b16 %v4706, %v4705
    %v4745 = vpack.c.b16 %v4708, %v4707
    %v4746 = vpack.c.b16 %v4710, %v4709
    %v4747 = vpack.c.b16 %v4712, %v4711
    %v4748 = vpack.c.b16 %v4714, %v4713
    %v4749 = vpack.c.b16 %v4716, %v4715
    %v4750 = vpack.c.b16 %v4718, %v4717
    %4783 = vmatprep.subr.bf16.mxu0 0
    %4784 = vmatpush1.bf16.msra.mxu0 %v4726
    %4785 = vmatprep.subr.bf16.mxu0 0
    %4786 = vmatpush1.bf16.msra.mxu0 %v4725
    %4787 = vmatprep.subr.bf16.mxu0 0
    %4788 = vmatpush1.bf16.msra.mxu0 %v4724
    %4789 = vmatprep.subr.bf16.mxu0 0
    %4790 = vmatpush1.bf16.msra.mxu0 %v4723
    %4791 = vmatprep.subr.bf16.mxu0 0
    %4792 = vmatpush1.bf16.msra.mxu0 %v4722
    %4793 = vmatprep.subr.bf16.mxu0 0
    %4794 = vmatpush1.bf16.msra.mxu0 %v4721
    %4795 = vmatprep.subr.bf16.mxu0 0
    %4796 = vmatpush1.bf16.msra.mxu0 %v4720
    %4797 = vmatprep.subr.bf16.mxu0 0
    %4798 = vmatpush1.bf16.msra.mxu0 %v4719
    %4799 = vmatprep.subr.bf16.mxu0 0
    %4800 = vmatpush2.bf16.msra.mxu0 %v4734
    %4801 = vmatprep.subr.bf16.mxu0 0
    %4802 = vmatpush2.bf16.msra.mxu0 %v4733
    %4803 = vmatprep.subr.bf16.mxu0 0
    %4804 = vmatpush2.bf16.msra.mxu0 %v4732
    %4805 = vmatprep.subr.bf16.mxu0 0
    %4806 = vmatpush2.bf16.msra.mxu0 %v4731
    %4807 = vmatprep.subr.bf16.mxu0 0
    %4808 = vmatpush2.bf16.msra.mxu0 %v4730
    %4809 = vmatprep.subr.bf16.mxu0 0
    %4810 = vmatpush2.bf16.msra.mxu0 %v4729
    %4811 = vmatprep.subr.bf16.mxu0 0
    %4812 = vmatpush2.bf16.msra.mxu0 %v4728
    %4813 = vmatprep.subr.bf16.mxu0 0
    %4814 = vmatpush2.bf16.msra.mxu0 %v4727
    %4815 = vmatprep.mubr.bf16.mxu0 %v4517
    %4816 = vmatmul.mubr.bf16.gmra.mxu0 %v4516
    %v4817 = vpop.f32.mrf.mxu0
    %v4818 = vadd.f32 %v4589, %v4817
    %v4819 = vpop.f32.mrf.mxu0
    %v4820 = vpop.f32.mrf.mxu0
    %v4821 = vpop.f32.mrf.mxu0
    %4822 = vdwg.mxu0
    %4823 = vmatprep.subr.bf16.mxu0 0
    %4824 = vmatpush1.bf16.msra.mxu0 %v4742
    %4825 = vmatprep.subr.bf16.mxu0 0
    %4826 = vmatpush1.bf16.msra.mxu0 %v4741
    %4827 = vmatprep.subr.bf16.mxu0 0
    %4828 = vmatpush1.bf16.msra.mxu0 %v4740
    %4829 = vmatprep.subr.bf16.mxu0 0
    %4830 = vmatpush1.bf16.msra.mxu0 %v4739
    %4831 = vmatprep.subr.bf16.mxu0 0
    %4832 = vmatpush1.bf16.msra.mxu0 %v4738
    %4833 = vmatprep.subr.bf16.mxu0 0
    %4834 = vmatpush1.bf16.msra.mxu0 %v4737
    %4835 = vmatprep.subr.bf16.mxu0 0
    %4836 = vmatpush1.bf16.msra.mxu0 %v4736
    %4837 = vmatprep.subr.bf16.mxu0 0
    %4838 = vmatpush1.bf16.msra.mxu0 %v4735
    %4839 = vmatprep.subr.bf16.mxu0 0
    %4840 = vmatpush2.bf16.msra.mxu0 %v4750
    %4841 = vmatprep.subr.bf16.mxu0 0
    %4842 = vmatpush2.bf16.msra.mxu0 %v4749
    %4843 = vmatprep.subr.bf16.mxu0 0
    %4844 = vmatpush2.bf16.msra.mxu0 %v4748
    %4845 = vmatprep.subr.bf16.mxu0 0
    %4846 = vmatpush2.bf16.msra.mxu0 %v4747
    %4847 = vmatprep.subr.bf16.mxu0 0
    %4848 = vmatpush2.bf16.msra.mxu0 %v4746
    %4849 = vmatprep.subr.bf16.mxu0 0
    %4850 = vmatpush2.bf16.msra.mxu0 %v4745
    %4851 = vmatprep.subr.bf16.mxu0 0
    %4852 = vmatpush2.bf16.msra.mxu0 %v4744
    %4853 = vmatprep.subr.bf16.mxu0 0
    %4854 = vmatpush2.bf16.msra.mxu0 %v4743
    %4855 = vmatprep.mubr.bf16.mxu0 %v4519
    %4856 = vmatmul.mubr.bf16.gmra.mxu0 %v4518
    %v4857 = vpop.f32.mrf.mxu0
    %v4858 = vadd.f32 %v4818, %v4857
    %v4859 = vpop.f32.mrf.mxu0
    %v4860 = vpop.f32.mrf.mxu0
    %v4861 = vpop.f32.mrf.mxu0
    %4862 = vdwg.mxu0
    %4863 = vst [vmem:[%s8] sm:$0xff] %v4858
    // Predicated region
    $region46: #{_forward_impl.1} parent=1 // pred_check
      _
    $region47: #{_forward_impl.1} parent=1 // pred_check_branch
      %4865 = sbr.rel (0) target = $region49
    $region48: #{_forward_impl.1} parent=1 // pred_region
      _
    $region49: #{_forward_impl.1} parent=1 // pred_fallthru
      _
    // Predicated region
    $region50: #{_forward_impl.1} parent=1 // pred_check
      _
    $region51: #{_forward_impl.1} parent=1 // pred_check_branch
      %4867 = sbr.rel (0) target = $region53
    $region52: #{_forward_impl.1} parent=1 // pred_region
      _
    $region53: #{_forward_impl.1} parent=1 // pred_fallthru
      _
    %4868 = vsyncpa [#allocation3], 1
    %4869 = vsyncpa [#allocation5], 1

</llo_original>
